<compile_context>
chip_gen: v7x
topology: tpu7x:2x2x1
jax: 0.10.0
libtpu: 0.0.40
codegen_flags: <defaults>
</compile_context>

<pallas_src>
import jax
import jax.numpy as jnp
from jax.experimental import pallas as pl
from jax.experimental.pallas import tpu as pltpu


P_DIM = 256   # module default p
H1 = 256
H2 = 512
IN_DIM = 2


def _round_up(x, m):
    return (x + m - 1) // m * m


def trunknet_kernel(x_ref, w1_ref, b1_ref, w2_ref, b2_ref, w3_ref, b3_ref, o_ref):
    # x_ref: (TILE_N, 2) tile of coordinates, f32.
    # w1/b1/b2/b3 are f32; w2/w3 may be bf16 (default) -> MXU bf16 fast path.
    x = x_ref[...]

    # Layer 1: K=2 is far too small for the MXU -> two broadcasted FMAs on the
    # VPU (overlaps with the MXU work of layers 2/3).  Stays f32 end-to-end.
    h1 = x[:, 0:1] * w1_ref[0:1, :] + x[:, 1:2] * w1_ref[1:2, :] + b1_ref[...]
    h1 = jnp.maximum(h1, 0.0)                                    # ReLU

    # Layers 2/3 on the MXU at the weights' dtype (bf16 by default), f32 acc.
    mdt = w2_ref.dtype
    h2 = jnp.dot(h1.astype(mdt), w2_ref[...],
                 preferred_element_type=jnp.float32) + b2_ref[...]
    h2 = jnp.maximum(h2, 0.0)                                    # ReLU
    out = jnp.dot(h2.astype(mdt), w3_ref[...],
                  preferred_element_type=jnp.float32) + b3_ref[...]
    o_ref[...] = out.astype(o_ref.dtype)


def _choose_tile(n, tile_n, align):
    """Pick a tile size: capped at the (aligned) problem size, aligned to
    `align`, and -- when n is big enough -- giving an even number of grid steps
    so v7x's two TensorCores split the 'parallel' axis evenly."""
    tile_n = max(align, min(tile_n, _round_up(n, align)))
    num = pl.cdiv(n, tile_n)
    if n > align and num % 2 == 1:
        cand = max(align, _round_up(pl.cdiv(n, num + 1), align))
        if pl.cdiv(n, cand) % 2 == 0:
            tile_n = cand
    return tile_n


def trunknet_forward(coords, params, *, tile_n=2048, align=256,
                     use_bf16=True, out_dtype=jnp.float32):
    """coords: (N, 2) f32 -> (N, P_DIM) out_dtype.  Any N; pads internally.

    use_bf16=True (default): layer-2/3 weights + activations in bf16 on the
      MXU with f32 accumulation (native throughput on v5e/v6e/v7x).
    use_bf16=False: full-f32 verification path.
    align: tile alignment; 256 fills the v6e/v7x MXU M-dim, 128 suffices on v5e.
    out_dtype: jnp.bfloat16 halves output HBM writeback (opt-in; changes dtype
      vs the f32 PyTorch reference).
    """
    w1, b1, w2, b2, w3, b3 = params
    if use_bf16:
        # Only the MXU-side weights go bf16; W1/b1 and biases stay f32.
        w2 = w2.astype(jnp.bfloat16)
        w3 = w3.astype(jnp.bfloat16)

    N = coords.shape[0]
    tile_n = _choose_tile(N, tile_n, align)
    Np = _round_up(N, tile_n)
    if Np != N:
        coords = jnp.pad(coords, ((0, Np - N), (0, 0)))

    grid = (Np // tile_n,)

    w_bytes = 2 if use_bf16 else 4
    flops = 2 * Np * (IN_DIM * H1 + H1 * H2 + H2 * P_DIM)
    bytes_accessed = (
        Np * IN_DIM * 4 + Np * P_DIM * jnp.dtype(out_dtype).itemsize
        + IN_DIM * H1 * 4 + (H1 * H2 + H2 * P_DIM) * w_bytes
        + (H1 + H2 + P_DIM) * 4
    )

    # Weights/biases are grid-invariant (constant index maps) -> single buffer.
    def resident(shape):
        return pl.BlockSpec(shape, lambda i: (0, 0), pipeline_mode=pl.Buffered(1))

    out = pl.pallas_call(
        trunknet_kernel,
        out_shape=jax.ShapeDtypeStruct((Np, P_DIM), out_dtype),
        grid_spec=pltpu.PrefetchScalarGridSpec(
            num_scalar_prefetch=0,
            grid=grid,
            in_specs=[
                pl.BlockSpec((tile_n, IN_DIM), lambda i: (i, 0)),   # coords tile
                resident((IN_DIM, H1)),                             # W1 (f32)
                resident((1, H1)),                                  # b1
                resident((H1, H2)),                                 # W2
                resident((1, H2)),                                  # b2
                resident((H2, P_DIM)),                              # W3
                resident((1, P_DIM)),                               # b3
            ],
            out_specs=pl.BlockSpec((tile_n, P_DIM), lambda i: (i, 0)),
        ),
        compiler_params=pltpu.CompilerParams(
            dimension_semantics=("parallel",),
            vmem_limit_bytes=48 * 1024 * 1024),
        cost_estimate=pl.CostEstimate(
            flops=flops, transcendentals=0, bytes_accessed=bytes_accessed),
    )(coords, w1, b1, w2, b2, w3, b3)

    return out[:N] if Np != N else out


def init_params(key):
    """Deterministic init mimicking PyTorch Linear default (U(-1/sqrt(fan_in), +))."""
    ks = jax.random.split(key, 6)

    def linear(kw, kb, fan_in, fan_out):
        bound = 1.0 / jnp.sqrt(fan_in)
        w = jax.random.uniform(kw, (fan_in, fan_out), jnp.float32, -bound, bound)
        b = jax.random.uniform(kb, (1, fan_out), jnp.float32, -bound, bound)
        return w, b

    w1, b1 = linear(ks[0], ks[1], IN_DIM, H1)
    w2, b2 = linear(ks[2], ks[3], H1, H2)
    w3, b3 = linear(ks[4], ks[5], H2, P_DIM)
    return (w1, b1, w2, b2, w3, b3)


def trunknet_ref(coords, params):
    w1, b1, w2, b2, w3, b3 = params
    h1 = jnp.maximum(coords @ w1 + b1, 0.0)
    h2 = jnp.maximum(h1 @ w2 + b2, 0.0)
    return h2 @ w3 + b3


if __name__ == "__main__":
    key = jax.random.PRNGKey(0)
    k_param, k_coord = jax.random.split(key)

    params = init_params(k_param)

    # N deliberately not a multiple of the tile: exercises the pad+slice path.
    N = 1000
    coords = jax.random.uniform(k_coord, (N, IN_DIM), jnp.float32)
    ref = jax.block_until_ready(trunknet_ref(coords, params))

    # Default path: bf16 MXU (f32 accumulation), f32 output.
    out = jax.block_until_ready(trunknet_forward(coords, params))
    assert out.shape == (N, P_DIM) and out.dtype == jnp.float32
    assert jnp.max(jnp.abs(out - ref)) < 5e-2, "bf16-MXU path mismatch"

    # f32 verification path: exact-semantics check vs the plain-JAX reference.
    out_f32 = jax.block_until_ready(trunknet_forward(coords, params, use_bf16=False))
    assert jnp.max(jnp.abs(out_f32 - ref)) < 1e-4, "f32 path mismatch"

    # Multi-tile path: exercises the even-grid / tile-shrink heuristic.
    N2 = 4100
    coords2 = jax.random.uniform(k_coord, (N2, IN_DIM), jnp.float32)
    out2 = jax.block_until_ready(trunknet_forward(coords2, params))
    ref2 = trunknet_ref(coords2, params)
    assert out2.shape == (N2, P_DIM)
    assert jnp.max(jnp.abs(out2 - ref2)) < 5e-2, "multi-tile mismatch"

    # Opt-in bf16 output (halves HBM writeback on v6e); loose tolerance.
    out_bf16 = jax.block_until_ready(
        trunknet_forward(coords, params, out_dtype=jnp.bfloat16))
    assert out_bf16.dtype == jnp.bfloat16
    assert jnp.max(jnp.abs(out_bf16.astype(jnp.float32) - ref)) < 1e-1, "bf16-out mismatch"

    print("KERNEL_OK")
</pallas_src>

<mosaic_0001>
module attributes {stable_mosaic.version = 11 : i64} {
  func.func @trunknet_kernel(%arg0: i32, %arg1: memref<512x2xf32, #tpu.memory_space<vmem>>, %arg2: memref<2x256xf32, #tpu.memory_space<vmem>>, %arg3: memref<1x256xf32, #tpu.memory_space<vmem>>, %arg4: memref<256x512xbf16, #tpu.memory_space<vmem>>, %arg5: memref<1x512xf32, #tpu.memory_space<vmem>>, %arg6: memref<512x256xbf16, #tpu.memory_space<vmem>>, %arg7: memref<1x256xf32, #tpu.memory_space<vmem>>, %arg8: memref<512x256xf32, #tpu.memory_space<vmem>>) attributes {dimension_semantics = [#tpu.dimension_semantics<parallel>], iteration_bounds = array<i64: 2>, scalar_prefetch = 0 : i64, scratch_operands = 0 : i64, tpu.core_type = #tpu.core_type<tc>, window_params = [{transform_indices = @transform_0, window_bounds = array<i64: 512, 2>}, {pipeline_mode = #tpu.pipeline_mode<synchronous>, transform_indices = @transform_1, window_bounds = array<i64: 2, 256>}, {pipeline_mode = #tpu.pipeline_mode<synchronous>, transform_indices = @transform_2, window_bounds = array<i64: 1, 256>}, {pipeline_mode = #tpu.pipeline_mode<synchronous>, transform_indices = @transform_3, window_bounds = array<i64: 256, 512>}, {pipeline_mode = #tpu.pipeline_mode<synchronous>, transform_indices = @transform_4, window_bounds = array<i64: 1, 512>}, {pipeline_mode = #tpu.pipeline_mode<synchronous>, transform_indices = @transform_5, window_bounds = array<i64: 512, 256>}, {pipeline_mode = #tpu.pipeline_mode<synchronous>, transform_indices = @transform_6, window_bounds = array<i64: 1, 256>}, {transform_indices = @transform_7, window_bounds = array<i64: 512, 256>}]} {
    %c0 = arith.constant 0 : index
    %c0_0 = arith.constant 0 : index
    %0 = vector.load %arg1[%c0, %c0_0] : memref<512x2xf32, #tpu.memory_space<vmem>>, vector<512x2xf32>
    %1 = vector.extract_strided_slice %0 {offsets = [0, 0], sizes = [512, 1], strides = [1, 1]} : vector<512x2xf32> to vector<512x1xf32>
    %c0_1 = arith.constant 0 : index
    %c0_2 = arith.constant 0 : index
    %2 = vector.load %arg2[%c0_1, %c0_2] : memref<2x256xf32, #tpu.memory_space<vmem>>, vector<1x256xf32>
    %3 = vector.broadcast %1 : vector<512x1xf32> to vector<512x256xf32>
    %4 = vector.broadcast %2 : vector<1x256xf32> to vector<512x256xf32>
    %5 = arith.mulf %3, %4 : vector<512x256xf32>
    %6 = vector.extract_strided_slice %0 {offsets = [0, 1], sizes = [512, 1], strides = [1, 1]} : vector<512x2xf32> to vector<512x1xf32>
    %c1 = arith.constant 1 : index
    %c0_3 = arith.constant 0 : index
    %7 = vector.load %arg2[%c1, %c0_3] : memref<2x256xf32, #tpu.memory_space<vmem>>, vector<1x256xf32>
    %8 = vector.broadcast %6 : vector<512x1xf32> to vector<512x256xf32>
    %9 = vector.broadcast %7 : vector<1x256xf32> to vector<512x256xf32>
    %10 = arith.mulf %8, %9 : vector<512x256xf32>
    %11 = arith.addf %5, %10 : vector<512x256xf32>
    %c0_4 = arith.constant 0 : index
    %c0_5 = arith.constant 0 : index
    %12 = vector.load %arg3[%c0_4, %c0_5] : memref<1x256xf32, #tpu.memory_space<vmem>>, vector<1x256xf32>
    %13 = vector.broadcast %12 : vector<1x256xf32> to vector<512x256xf32>
    %14 = arith.addf %11, %13 : vector<512x256xf32>
    %cst = arith.constant 0.000000e+00 : f32
    %15 = vector.broadcast %cst : f32 to vector<512x256xf32>
    %16 = arith.maximumf %14, %15 : vector<512x256xf32>
    %17 = arith.truncf %16 : vector<512x256xf32> to vector<512x256xbf16>
    %c0_6 = arith.constant 0 : index
    %c0_7 = arith.constant 0 : index
    %18 = vector.load %arg4[%c0_6, %c0_7] : memref<256x512xbf16, #tpu.memory_space<vmem>>, vector<256x512xbf16>
    %cst_8 = arith.constant dense<0.000000e+00> : vector<512x512xf32>
    %19 = tpu.matmul %17, %18, %cst_8 {dimension_numbers = #tpu.dot_dimension_numbers<[1], [0], [0], [1], [0, 0, 1, 1], [], []>} : vector<512x256xbf16>, vector<256x512xbf16>, vector<512x512xf32> -> vector<512x512xf32>
    %c0_9 = arith.constant 0 : index
    %c0_10 = arith.constant 0 : index
    %20 = vector.load %arg5[%c0_9, %c0_10] : memref<1x512xf32, #tpu.memory_space<vmem>>, vector<1x512xf32>
    %21 = vector.broadcast %20 : vector<1x512xf32> to vector<512x512xf32>
    %22 = arith.addf %19, %21 : vector<512x512xf32>
    %cst_11 = arith.constant 0.000000e+00 : f32
    %23 = vector.broadcast %cst_11 : f32 to vector<512x512xf32>
    %24 = arith.maximumf %22, %23 : vector<512x512xf32>
    %25 = arith.truncf %24 : vector<512x512xf32> to vector<512x512xbf16>
    %c0_12 = arith.constant 0 : index
    %c0_13 = arith.constant 0 : index
    %26 = vector.load %arg6[%c0_12, %c0_13] : memref<512x256xbf16, #tpu.memory_space<vmem>>, vector<512x256xbf16>
    %cst_14 = arith.constant dense<0.000000e+00> : vector<512x256xf32>
    %27 = tpu.matmul %25, %26, %cst_14 {dimension_numbers = #tpu.dot_dimension_numbers<[1], [0], [0], [1], [0, 0, 1, 1], [], []>} : vector<512x512xbf16>, vector<512x256xbf16>, vector<512x256xf32> -> vector<512x256xf32>
    %c0_15 = arith.constant 0 : index
    %c0_16 = arith.constant 0 : index
    %28 = vector.load %arg7[%c0_15, %c0_16] : memref<1x256xf32, #tpu.memory_space<vmem>>, vector<1x256xf32>
    %29 = vector.broadcast %28 : vector<1x256xf32> to vector<512x256xf32>
    %30 = arith.addf %27, %29 : vector<512x256xf32>
    %c0_17 = arith.constant 0 : index
    %c0_18 = arith.constant 0 : index
    %31 = vector.load %arg8[%c0_17, %c0_18] : memref<512x256xf32, #tpu.memory_space<vmem>>, vector<512x256xf32>
    tpu.vector_store %arg8[%c0_17, %c0_18], %30 {strides = array<i32>} : memref<512x256xf32, #tpu.memory_space<vmem>>, vector<512x256xf32>,
    return
  }
  func.func @transform_0(%arg0: i32) -> (i32, i32) {
    %c0_i32 = arith.constant 0 : i32
    %c0_i32_0 = arith.constant 0 : i32
    return %arg0, %c0_i32 : i32, i32
  }
  func.func @transform_1(%arg0: i32) -> (i32, i32) {
    %c0_i32 = arith.constant 0 : i32
    %c0_i32_0 = arith.constant 0 : i32
    %c0_i32_1 = arith.constant 0 : i32
    return %c0_i32, %c0_i32_0 : i32, i32
  }
  func.func @transform_2(%arg0: i32) -> (i32, i32) {
    %c0_i32 = arith.constant 0 : i32
    %c0_i32_0 = arith.constant 0 : i32
    %c0_i32_1 = arith.constant 0 : i32
    return %c0_i32, %c0_i32_0 : i32, i32
  }
  func.func @transform_3(%arg0: i32) -> (i32, i32) {
    %c0_i32 = arith.constant 0 : i32
    %c0_i32_0 = arith.constant 0 : i32
    %c0_i32_1 = arith.constant 0 : i32
    return %c0_i32, %c0_i32_0 : i32, i32
  }
  func.func @transform_4(%arg0: i32) -> (i32, i32) {
    %c0_i32 = arith.constant 0 : i32
    %c0_i32_0 = arith.constant 0 : i32
    %c0_i32_1 = arith.constant 0 : i32
    return %c0_i32, %c0_i32_0 : i32, i32
  }
  func.func @transform_5(%arg0: i32) -> (i32, i32) {
    %c0_i32 = arith.constant 0 : i32
    %c0_i32_0 = arith.constant 0 : i32
    %c0_i32_1 = arith.constant 0 : i32
    return %c0_i32, %c0_i32_0 : i32, i32
  }
  func.func @transform_6(%arg0: i32) -> (i32, i32) {
    %c0_i32 = arith.constant 0 : i32
    %c0_i32_0 = arith.constant 0 : i32
    %c0_i32_1 = arith.constant 0 : i32
    return %c0_i32, %c0_i32_0 : i32, i32
  }
  func.func @transform_7(%arg0: i32) -> (i32, i32) {
    %c0_i32 = arith.constant 0 : i32
    %c0_i32_0 = arith.constant 0 : i32
    return %arg0, %c0_i32 : i32, i32
  }
}

</mosaic_0001>

<llo_original>
// kernel: tpu_custom_call.1
$region0: #{tpu_custom_call.1}
  #allocation0 [shape = 'u32[]', space=smem, size = 0x4, offset = 0x4, fixed_abs, tag = 'smem constant byte address 0x4 - core index']
  #allocation1 [shape = 'u32[144,128]{1,0:T(1,128)}', space=vmem, size = 0x12000, scoped, tag = 'internal scratch']
  %s0 = inlined_call_operand.vmem [shape: f32[1024,2], index: 0, kind: input, shape index: {}]
  %s1 = inlined_call_operand.vmem [shape: f32[2,256], index: 1, kind: input, shape index: {}]
  %s2 = inlined_call_operand.vmem [shape: f32[1,256], index: 2, kind: input, shape index: {}]
  %s3 = inlined_call_operand.vmem [shape: bf16[256,512], index: 3, kind: input, shape index: {}]
  %s4 = inlined_call_operand.vmem [shape: f32[1,512], index: 4, kind: input, shape index: {}]
  %s5 = inlined_call_operand.vmem [shape: bf16[512,256], index: 5, kind: input, shape index: {}]
  %s6 = inlined_call_operand.vmem [shape: f32[1,256], index: 6, kind: input, shape index: {}]
  %s7 = inlined_call_operand.hbm [shape: f32[1024,256], index: 7, kind: output, shape index: {}]
  %s8 = sld [smem:[#allocation0]]
  $region61: #{tpu_custom_call.1} parent=0
    _
  %s10 = ssub.s32 1, %s8
  %s11 = scalar_select 0, %s10, %s8
  $region1: #{tpu_custom_call.1} parent=0
    #allocation2 [shape = 'u8[1048576]{0}', space=vmem, size = 0x100000, scoped, tag = 'output window, operand 0']
    #allocation3 [shape = 's32[2]{0}', space=sflag, size = 0x8, scoped, tag = 'scoped memory for tpu_custom_call.1']
    %12 = vsyncpa [#allocation3], 0
    %s13 = scalar_lea.sflag [#allocation3], 1
    %14 = vsyncpa %s13, 0
    loop: start=0, step=1, limit=4
    $region2: #{tpu_custom_call.1} parent=1 // loop_pre_header
      _
    $region3: #{tpu_custom_call.1} parent=1 // loop_header
      %s16 = sphi 0, %s20
      %p17 = scmp.ge.s32.totalorder %s16, 4
      %s26 = sphi 0, %s28
      %s29 = sphi 0, %s26
      %s30 = sphi 0, %s29
      %s46 = sphi 0, %s30
      %s50 = sphi 0, %s50
      %s52 = sphi 0, %s50
      %s53 = sphi 0, %s52
      %s67 = sphi 0, %s53
      %s71 = sphi 0, %s71
      %s73 = sphi 0, %s71
      %s74 = sphi 0, %s73
      %s88 = sphi 0, %s74
      %s92 = sphi 0, %s92
      %s94 = sphi 0, %s92
      %s95 = sphi 0, %s94
      %s109 = sphi 0, %s95
      %s113 = sphi 0, %s113
      %s115 = sphi 0, %s113
      %s116 = sphi 0, %s115
      %s130 = sphi 0, %s116
      %s134 = sphi 0, %s134
      %s136 = sphi 0, %s134
      %s137 = sphi 0, %s136
      %s151 = sphi 0, %s137
      %s155 = sphi 0, %s155
      %s157 = sphi 0, %s155
      %s158 = sphi 0, %s157
      %s172 = sphi 0, %s158
      %s178 = sphi 0, %s180
      %s181 = sphi 0, %s178
      %s182 = sphi 0, %s181
      %s198 = sphi 0, %s182
    $region4: #{tpu_custom_call.1} parent=1 // loop_header_branch
      %19 = sbr.rel (%p17) target = $region8
    $region5: #{tpu_custom_call.1} parent=1 // loop_body
      %s21 = ssub.s32 %s16, 1
      %s22 = ssub.s32 %s16, 2
      %s23 = sadd.s32 %s16, 1
      %s24 = ssub.s32 %s16, %s23
      %p25 = scmp.eq.s32.totalorder %s24, 0
      %s27 = sadd.s32 %s26, 1
      %s28 = scalar_select %p25, %s26, %s27
      %p31 = pneg %p25
      %p32 = scmp.eq.s32.totalorder %s16, 1
      %p33 = por %p31, %p32
      %p34 = scmp.ne.s32.totalorder %s26, %s29
      %p35 = scmp.eq.s32.totalorder %s16, 0
      %p36 = por %p34, %p35
      %p37 = scmp.ne.s32.totalorder %s26, %s29
      %p38 = scmp.eq.s32.totalorder %s21, 1
      %p39 = por %p37, %p38
      %p40 = scmp.ne.s32.totalorder %s29, %s30
      %p41 = scmp.eq.s32.totalorder %s21, 0
      %p42 = por %p40, %p41
      %p43 = scmp.ne.s32.totalorder %s29, %s30
      %p44 = scmp.eq.s32.totalorder %s22, 1
      %p45 = por %p43, %p44
      %p47 = scmp.ne.s32.totalorder %s30, %s46
      %p48 = scmp.eq.s32.totalorder %s22, 0
      %p49 = por %p47, %p48
      %s51 = sadd.s32 %s50, 1
      %p54 = scmp.eq.s32.totalorder %s16, 1
      %p55 = scmp.ne.s32.totalorder %s50, %s52
      %p56 = scmp.eq.s32.totalorder %s16, 0
      %p57 = por %p55, %p56
      %p58 = scmp.ne.s32.totalorder %s50, %s52
      %p59 = scmp.eq.s32.totalorder %s21, 1
      %p60 = por %p58, %p59
      %p61 = scmp.ne.s32.totalorder %s52, %s53
      %p62 = scmp.eq.s32.totalorder %s21, 0
      %p63 = por %p61, %p62
      %p64 = scmp.ne.s32.totalorder %s52, %s53
      %p65 = scmp.eq.s32.totalorder %s22, 1
      %p66 = por %p64, %p65
      %p68 = scmp.ne.s32.totalorder %s53, %s67
      %p69 = scmp.eq.s32.totalorder %s22, 0
      %p70 = por %p68, %p69
      %s72 = sadd.s32 %s71, 1
      %p75 = scmp.eq.s32.totalorder %s16, 1
      %p76 = scmp.ne.s32.totalorder %s71, %s73
      %p77 = scmp.eq.s32.totalorder %s16, 0
      %p78 = por %p76, %p77
      %p79 = scmp.ne.s32.totalorder %s71, %s73
      %p80 = scmp.eq.s32.totalorder %s21, 1
      %p81 = por %p79, %p80
      %p82 = scmp.ne.s32.totalorder %s73, %s74
      %p83 = scmp.eq.s32.totalorder %s21, 0
      %p84 = por %p82, %p83
      %p85 = scmp.ne.s32.totalorder %s73, %s74
      %p86 = scmp.eq.s32.totalorder %s22, 1
      %p87 = por %p85, %p86
      %p89 = scmp.ne.s32.totalorder %s74, %s88
      %p90 = scmp.eq.s32.totalorder %s22, 0
      %p91 = por %p89, %p90
      %s93 = sadd.s32 %s92, 1
      %p96 = scmp.eq.s32.totalorder %s16, 1
      %p97 = scmp.ne.s32.totalorder %s92, %s94
      %p98 = scmp.eq.s32.totalorder %s16, 0
      %p99 = por %p97, %p98
      %p100 = scmp.ne.s32.totalorder %s92, %s94
      %p101 = scmp.eq.s32.totalorder %s21, 1
      %p102 = por %p100, %p101
      %p103 = scmp.ne.s32.totalorder %s94, %s95
      %p104 = scmp.eq.s32.totalorder %s21, 0
      %p105 = por %p103, %p104
      %p106 = scmp.ne.s32.totalorder %s94, %s95
      %p107 = scmp.eq.s32.totalorder %s22, 1
      %p108 = por %p106, %p107
      %p110 = scmp.ne.s32.totalorder %s95, %s109
      %p111 = scmp.eq.s32.totalorder %s22, 0
      %p112 = por %p110, %p111
      %s114 = sadd.s32 %s113, 1
      %p117 = scmp.eq.s32.totalorder %s16, 1
      %p118 = scmp.ne.s32.totalorder %s113, %s115
      %p119 = scmp.eq.s32.totalorder %s16, 0
      %p120 = por %p118, %p119
      %p121 = scmp.ne.s32.totalorder %s113, %s115
      %p122 = scmp.eq.s32.totalorder %s21, 1
      %p123 = por %p121, %p122
      %p124 = scmp.ne.s32.totalorder %s115, %s116
      %p125 = scmp.eq.s32.totalorder %s21, 0
      %p126 = por %p124, %p125
      %p127 = scmp.ne.s32.totalorder %s115, %s116
      %p128 = scmp.eq.s32.totalorder %s22, 1
      %p129 = por %p127, %p128
      %p131 = scmp.ne.s32.totalorder %s116, %s130
      %p132 = scmp.eq.s32.totalorder %s22, 0
      %p133 = por %p131, %p132
      %s135 = sadd.s32 %s134, 1
      %p138 = scmp.eq.s32.totalorder %s16, 1
      %p139 = scmp.ne.s32.totalorder %s134, %s136
      %p140 = scmp.eq.s32.totalorder %s16, 0
      %p141 = por %p139, %p140
      %p142 = scmp.ne.s32.totalorder %s134, %s136
      %p143 = scmp.eq.s32.totalorder %s21, 1
      %p144 = por %p142, %p143
      %p145 = scmp.ne.s32.totalorder %s136, %s137
      %p146 = scmp.eq.s32.totalorder %s21, 0
      %p147 = por %p145, %p146
      %p148 = scmp.ne.s32.totalorder %s136, %s137
      %p149 = scmp.eq.s32.totalorder %s22, 1
      %p150 = por %p148, %p149
      %p152 = scmp.ne.s32.totalorder %s137, %s151
      %p153 = scmp.eq.s32.totalorder %s22, 0
      %p154 = por %p152, %p153
      %s156 = sadd.s32 %s155, 1
      %p159 = scmp.eq.s32.totalorder %s16, 1
      %p160 = scmp.ne.s32.totalorder %s155, %s157
      %p161 = scmp.eq.s32.totalorder %s16, 0
      %p162 = por %p160, %p161
      %p163 = scmp.ne.s32.totalorder %s155, %s157
      %p164 = scmp.eq.s32.totalorder %s21, 1
      %p165 = por %p163, %p164
      %p166 = scmp.ne.s32.totalorder %s157, %s158
      %p167 = scmp.eq.s32.totalorder %s21, 0
      %p168 = por %p166, %p167
      %p169 = scmp.ne.s32.totalorder %s157, %s158
      %p170 = scmp.eq.s32.totalorder %s22, 1
      %p171 = por %p169, %p170
      %p173 = scmp.ne.s32.totalorder %s158, %s172
      %p174 = scmp.eq.s32.totalorder %s22, 0
      %p175 = por %p173, %p174
      %s176 = ssub.s32 %s16, %s23
      %p177 = scmp.eq.s32.totalorder %s176, 0
      %s179 = sadd.s32 %s178, 1
      %s180 = scalar_select %p177, %s178, %s179
      %p183 = pneg %p177
      %p184 = scmp.eq.s32.totalorder %s16, 1
      %p185 = por %p183, %p184
      %p186 = scmp.ne.s32.totalorder %s178, %s181
      %p187 = scmp.eq.s32.totalorder %s16, 0
      %p188 = por %p186, %p187
      %p189 = scmp.ne.s32.totalorder %s178, %s181
      %p190 = scmp.eq.s32.totalorder %s21, 1
      %p191 = por %p189, %p190
      %p192 = scmp.ne.s32.totalorder %s181, %s182
      %p193 = scmp.eq.s32.totalorder %s21, 0
      %p194 = por %p192, %p193
      %p195 = scmp.ne.s32.totalorder %s181, %s182
      %p196 = scmp.eq.s32.totalorder %s22, 1
      %p197 = por %p195, %p196
      %p199 = scmp.ne.s32.totalorder %s182, %s198
      %p200 = scmp.eq.s32.totalorder %s22, 0
      %p201 = por %p199, %p200
      %p202 = scmp.le.s32.totalorder 1, %s16
      %p203 = scmp.lt.s32.totalorder %s16, 3
      %p204 = pnand %p202, %p203
      %p205 = pneg %p204
      // Predicated region
      $region9: #{tpu_custom_call.1} parent=5 // pred_check
        _
      $region10: #{tpu_custom_call.1} parent=5 // pred_check_branch
        %207 = sbr.rel (%p204) target = $region12
      $region11: #{tpu_custom_call.1} parent=5 // pred_region
        %s208 = ssub.s32 %s16, 1
        // Predicated region
        $region13: #{tpu_custom_call.1} parent=11 // pred_check
          %p209 = pneg %p63
        $region14: #{tpu_custom_call.1} parent=11 // pred_check_branch
          %211 = sbr.rel (%p209) target = $region16
        $region15: #{tpu_custom_call.1} parent=11 // pred_region
          _
        $region16: #{tpu_custom_call.1} parent=11 // pred_fallthru
          _
        // Predicated region
        $region17: #{tpu_custom_call.1} parent=11 // pred_check
          %p212 = pneg %p84
        $region18: #{tpu_custom_call.1} parent=11 // pred_check_branch
          %214 = sbr.rel (%p212) target = $region20
        $region19: #{tpu_custom_call.1} parent=11 // pred_region
          _
        $region20: #{tpu_custom_call.1} parent=11 // pred_fallthru
          _
        // Predicated region
        $region21: #{tpu_custom_call.1} parent=11 // pred_check
          %p215 = pneg %p105
        $region22: #{tpu_custom_call.1} parent=11 // pred_check_branch
          %217 = sbr.rel (%p215) target = $region24
        $region23: #{tpu_custom_call.1} parent=11 // pred_region
          _
        $region24: #{tpu_custom_call.1} parent=11 // pred_fallthru
          _
        // Predicated region
        $region25: #{tpu_custom_call.1} parent=11 // pred_check
          %p218 = pneg %p126
        $region26: #{tpu_custom_call.1} parent=11 // pred_check_branch
          %220 = sbr.rel (%p218) target = $region28
        $region27: #{tpu_custom_call.1} parent=11 // pred_region
          _
        $region28: #{tpu_custom_call.1} parent=11 // pred_fallthru
          _
        // Predicated region
        $region29: #{tpu_custom_call.1} parent=11 // pred_check
          %p221 = pneg %p147
        $region30: #{tpu_custom_call.1} parent=11 // pred_check_branch
          %223 = sbr.rel (%p221) target = $region32
        $region31: #{tpu_custom_call.1} parent=11 // pred_region
          _
        $region32: #{tpu_custom_call.1} parent=11 // pred_fallthru
          _
        // Predicated region
        $region33: #{tpu_custom_call.1} parent=11 // pred_check
          %p224 = pneg %p168
        $region34: #{tpu_custom_call.1} parent=11 // pred_check_branch
          %226 = sbr.rel (%p224) target = $region36
        $region35: #{tpu_custom_call.1} parent=11 // pred_region
          _
        $region36: #{tpu_custom_call.1} parent=11 // pred_fallthru
          _
      $region12: #{tpu_custom_call.1} parent=5 // pred_fallthru
        _
      %p227 = scmp.lt.s32.totalorder %s16, 2
      // Predicated region
      $region37: #{tpu_custom_call.1} parent=5 // pred_check
        %p228 = pneg %p227
      $region38: #{tpu_custom_call.1} parent=5 // pred_check_branch
        %230 = sbr.rel (%p228) target = $region40
      $region39: #{tpu_custom_call.1} parent=5 // pred_region
        // Predicated region
        $region41: #{tpu_custom_call.1} parent=39 // pred_check
          %p231 = pneg %p36
        $region42: #{tpu_custom_call.1} parent=39 // pred_check_branch
          %233 = sbr.rel (%p231) target = $region44
        $region43: #{tpu_custom_call.1} parent=39 // pred_region
          %s234 = smul.u32 64, %s16
          %p235 = scmp.lt.s32.totalorder %s234, 127
          %s236 = scalar_select %p235, %s234, 127
          %s237 = smul.addr %s236, 8
          %s238 = scalar_lea.vmem %s0, %s237
          %s239 = smul.u32 64, %s16
        $region44: #{tpu_custom_call.1} parent=39 // pred_fallthru
          _
      $region40: #{tpu_custom_call.1} parent=5 // pred_fallthru
        _
      %p240 = scmp.le.s32.totalorder 1, %s16
      %p241 = scmp.lt.s32.totalorder %s16, 3
      %p242 = pnand %p240, %p241
      %p243 = pneg %p242
      // Predicated region
      $region45: #{tpu_custom_call.1} parent=5 // pred_check
        _
      $region46: #{tpu_custom_call.1} parent=5 // pred_check_branch
        %245 = sbr.rel (%p242) target = $region48
      $region47: #{tpu_custom_call.1} parent=5 // pred_region
        %s246 = ssub.s32 %s16, 1
        %s247 = smul.u32 64, %s21
        %p248 = scmp.lt.s32.totalorder %s247, 127
        %s249 = scalar_select %p248, %s247, 127
        %s250 = smul.addr %s249, 8
        %s251 = scalar_lea.vmem %s0, %s250
        %p252 = pneg %p42
        %p253 = pneg %p39
        %p254 = pneg %p63
        %p255 = pneg %p60
        %p256 = pneg %p84
        %p257 = pneg %p81
        %p258 = pneg %p105
        %p259 = pneg %p102
        %p260 = pneg %p126
        %p261 = pneg %p123
        %p262 = pneg %p147
        %p263 = pneg %p144
        %p264 = pneg %p168
        %p265 = pneg %p165
        %p266 = pneg %p194
        %p267 = pneg %p191
        %s268 = sand.u32 %s181, 1
        %s269 = scalar_lea.sflag [#allocation3], %s268
        %s270 = sand.u32 %s181, 1
        %s271 = smul.addr %s270, 1024
        %s272 = scalar_lea.vmem [#allocation2], %s271
        %s273 = smul.u32 64, %s21
        %p274 = scmp.lt.s32.totalorder %s273, 127
        %s275 = scalar_select %p274, %s273, 127
        %s276 = smul.addr %s275, 8
        %s277 = scalar_lea.vmem %s0, %s276
        %s278 = smul.u32 64, %s21
        %s279 = smul.u32 64, %s21
        %v280 = vld [vmem:[%s277] sm:$0xff]
        %v281 = vld [vmem:[%s277 + $0x8] sm:$0xff]
        %v282 = vld [vmem:[%s277 + $0x10] sm:$0xff]
        %v283 = vld [vmem:[%s277 + $0x18] sm:$0xff]
        %v284 = vld [vmem:[%s277 + $0x20] sm:$0xff]
        %v285 = vld [vmem:[%s277 + $0x28] sm:$0xff]
        %v286 = vld [vmem:[%s277 + $0x30] sm:$0xff]
        %v287 = vld [vmem:[%s277 + $0x38] sm:$0xff]
        %v288 = vld [vmem:[%s277 + $0x40] sm:$0xff]
        %v289 = vld [vmem:[%s277 + $0x48] sm:$0xff]
        %v290 = vld [vmem:[%s277 + $0x50] sm:$0xff]
        %v291 = vld [vmem:[%s277 + $0x58] sm:$0xff]
        %v292 = vld [vmem:[%s277 + $0x60] sm:$0xff]
        %v293 = vld [vmem:[%s277 + $0x68] sm:$0xff]
        %v294 = vld [vmem:[%s277 + $0x70] sm:$0xff]
        %v295 = vld [vmem:[%s277 + $0x78] sm:$0xff]
        %v296 = vld [vmem:[%s277 + $0x80] sm:$0xff]
        %v297 = vld [vmem:[%s277 + $0x88] sm:$0xff]
        %v298 = vld [vmem:[%s277 + $0x90] sm:$0xff]
        %v299 = vld [vmem:[%s277 + $0x98] sm:$0xff]
        %v300 = vld [vmem:[%s277 + $0xa0] sm:$0xff]
        %v301 = vld [vmem:[%s277 + $0xa8] sm:$0xff]
        %v302 = vld [vmem:[%s277 + $0xb0] sm:$0xff]
        %v303 = vld [vmem:[%s277 + $0xb8] sm:$0xff]
        %v304 = vld [vmem:[%s277 + $0xc0] sm:$0xff]
        %v305 = vld [vmem:[%s277 + $0xc8] sm:$0xff]
        %v306 = vld [vmem:[%s277 + $0xd0] sm:$0xff]
        %v307 = vld [vmem:[%s277 + $0xd8] sm:$0xff]
        %v308 = vld [vmem:[%s277 + $0xe0] sm:$0xff]
        %v309 = vld [vmem:[%s277 + $0xe8] sm:$0xff]
        %v310 = vld [vmem:[%s277 + $0xf0] sm:$0xff]
        %v311 = vld [vmem:[%s277 + $0xf8] sm:$0xff]
        %v312 = vld [vmem:[%s277 + $0x100] sm:$0xff]
        %v313 = vld [vmem:[%s277 + $0x108] sm:$0xff]
        %v314 = vld [vmem:[%s277 + $0x110] sm:$0xff]
        %v315 = vld [vmem:[%s277 + $0x118] sm:$0xff]
        %v316 = vld [vmem:[%s277 + $0x120] sm:$0xff]
        %v317 = vld [vmem:[%s277 + $0x128] sm:$0xff]
        %v318 = vld [vmem:[%s277 + $0x130] sm:$0xff]
        %v319 = vld [vmem:[%s277 + $0x138] sm:$0xff]
        %v320 = vld [vmem:[%s277 + $0x140] sm:$0xff]
        %v321 = vld [vmem:[%s277 + $0x148] sm:$0xff]
        %v322 = vld [vmem:[%s277 + $0x150] sm:$0xff]
        %v323 = vld [vmem:[%s277 + $0x158] sm:$0xff]
        %v324 = vld [vmem:[%s277 + $0x160] sm:$0xff]
        %v325 = vld [vmem:[%s277 + $0x168] sm:$0xff]
        %v326 = vld [vmem:[%s277 + $0x170] sm:$0xff]
        %v327 = vld [vmem:[%s277 + $0x178] sm:$0xff]
        %v328 = vld [vmem:[%s277 + $0x180] sm:$0xff]
        %v329 = vld [vmem:[%s277 + $0x188] sm:$0xff]
        %v330 = vld [vmem:[%s277 + $0x190] sm:$0xff]
        %v331 = vld [vmem:[%s277 + $0x198] sm:$0xff]
        %v332 = vld [vmem:[%s277 + $0x1a0] sm:$0xff]
        %v333 = vld [vmem:[%s277 + $0x1a8] sm:$0xff]
        %v334 = vld [vmem:[%s277 + $0x1b0] sm:$0xff]
        %v335 = vld [vmem:[%s277 + $0x1b8] sm:$0xff]
        %v336 = vld [vmem:[%s277 + $0x1c0] sm:$0xff]
        %v337 = vld [vmem:[%s277 + $0x1c8] sm:$0xff]
        %v338 = vld [vmem:[%s277 + $0x1d0] sm:$0xff]
        %v339 = vld [vmem:[%s277 + $0x1d8] sm:$0xff]
        %v340 = vld [vmem:[%s277 + $0x1e0] sm:$0xff]
        %v341 = vld [vmem:[%s277 + $0x1e8] sm:$0xff]
        %v342 = vld [vmem:[%s277 + $0x1f0] sm:$0xff]
        %v343 = vld [vmem:[%s277 + $0x1f8] sm:$0xff]
        %v344 = vld [vmem:[%s1] ss:$2 sm:$0x3]
        %346 = vset.pattern.permute.xlu0 0
        %347 = vperm.xlu0 %346, %v280
        %v348 = vpop.permute.xlu0 %347
        %351 = vset.pattern.permute.xlu0 0
        %352 = vperm.xlu0 %351, %v281
        %v353 = vpop.permute.xlu0 %352
        %356 = vset.pattern.permute.xlu0 0
        %357 = vperm.xlu0 %356, %v282
        %v358 = vpop.permute.xlu0 %357
        %361 = vset.pattern.permute.xlu0 0
        %362 = vperm.xlu0 %361, %v283
        %v363 = vpop.permute.xlu0 %362
        %366 = vset.pattern.permute.xlu0 0
        %367 = vperm.xlu0 %366, %v284
        %v368 = vpop.permute.xlu0 %367
        %371 = vset.pattern.permute.xlu0 0
        %372 = vperm.xlu0 %371, %v285
        %v373 = vpop.permute.xlu0 %372
        %376 = vset.pattern.permute.xlu0 0
        %377 = vperm.xlu0 %376, %v286
        %v378 = vpop.permute.xlu0 %377
        %381 = vset.pattern.permute.xlu0 0
        %382 = vperm.xlu0 %381, %v287
        %v383 = vpop.permute.xlu0 %382
        %386 = vset.pattern.permute.xlu0 0
        %387 = vperm.xlu0 %386, %v288
        %v388 = vpop.permute.xlu0 %387
        %391 = vset.pattern.permute.xlu0 0
        %392 = vperm.xlu0 %391, %v289
        %v393 = vpop.permute.xlu0 %392
        %396 = vset.pattern.permute.xlu0 0
        %397 = vperm.xlu0 %396, %v290
        %v398 = vpop.permute.xlu0 %397
        %401 = vset.pattern.permute.xlu0 0
        %402 = vperm.xlu0 %401, %v291
        %v403 = vpop.permute.xlu0 %402
        %406 = vset.pattern.permute.xlu0 0
        %407 = vperm.xlu0 %406, %v292
        %v408 = vpop.permute.xlu0 %407
        %411 = vset.pattern.permute.xlu0 0
        %412 = vperm.xlu0 %411, %v293
        %v413 = vpop.permute.xlu0 %412
        %416 = vset.pattern.permute.xlu0 0
        %417 = vperm.xlu0 %416, %v294
        %v418 = vpop.permute.xlu0 %417
        %421 = vset.pattern.permute.xlu0 0
        %422 = vperm.xlu0 %421, %v295
        %v423 = vpop.permute.xlu0 %422
        %426 = vset.pattern.permute.xlu0 0
        %427 = vperm.xlu0 %426, %v296
        %v428 = vpop.permute.xlu0 %427
        %431 = vset.pattern.permute.xlu0 0
        %432 = vperm.xlu0 %431, %v297
        %v433 = vpop.permute.xlu0 %432
        %436 = vset.pattern.permute.xlu0 0
        %437 = vperm.xlu0 %436, %v298
        %v438 = vpop.permute.xlu0 %437
        %441 = vset.pattern.permute.xlu0 0
        %442 = vperm.xlu0 %441, %v299
        %v443 = vpop.permute.xlu0 %442
        %446 = vset.pattern.permute.xlu0 0
        %447 = vperm.xlu0 %446, %v300
        %v448 = vpop.permute.xlu0 %447
        %451 = vset.pattern.permute.xlu0 0
        %452 = vperm.xlu0 %451, %v301
        %v453 = vpop.permute.xlu0 %452
        %456 = vset.pattern.permute.xlu0 0
        %457 = vperm.xlu0 %456, %v302
        %v458 = vpop.permute.xlu0 %457
        %461 = vset.pattern.permute.xlu0 0
        %462 = vperm.xlu0 %461, %v303
        %v463 = vpop.permute.xlu0 %462
        %466 = vset.pattern.permute.xlu0 0
        %467 = vperm.xlu0 %466, %v304
        %v468 = vpop.permute.xlu0 %467
        %471 = vset.pattern.permute.xlu0 0
        %472 = vperm.xlu0 %471, %v305
        %v473 = vpop.permute.xlu0 %472
        %476 = vset.pattern.permute.xlu0 0
        %477 = vperm.xlu0 %476, %v306
        %v478 = vpop.permute.xlu0 %477
        %481 = vset.pattern.permute.xlu0 0
        %482 = vperm.xlu0 %481, %v307
        %v483 = vpop.permute.xlu0 %482
        %486 = vset.pattern.permute.xlu0 0
        %487 = vperm.xlu0 %486, %v308
        %v488 = vpop.permute.xlu0 %487
        %491 = vset.pattern.permute.xlu0 0
        %492 = vperm.xlu0 %491, %v309
        %v493 = vpop.permute.xlu0 %492
        %496 = vset.pattern.permute.xlu0 0
        %497 = vperm.xlu0 %496, %v310
        %v498 = vpop.permute.xlu0 %497
        %501 = vset.pattern.permute.xlu0 0
        %502 = vperm.xlu0 %501, %v311
        %v503 = vpop.permute.xlu0 %502
        %506 = vset.pattern.permute.xlu0 0
        %507 = vperm.xlu0 %506, %v312
        %v508 = vpop.permute.xlu0 %507
        %511 = vset.pattern.permute.xlu0 0
        %512 = vperm.xlu0 %511, %v313
        %v513 = vpop.permute.xlu0 %512
        %516 = vset.pattern.permute.xlu0 0
        %517 = vperm.xlu0 %516, %v314
        %v518 = vpop.permute.xlu0 %517
        %521 = vset.pattern.permute.xlu0 0
        %522 = vperm.xlu0 %521, %v315
        %v523 = vpop.permute.xlu0 %522
        %526 = vset.pattern.permute.xlu0 0
        %527 = vperm.xlu0 %526, %v316
        %v528 = vpop.permute.xlu0 %527
        %531 = vset.pattern.permute.xlu0 0
        %532 = vperm.xlu0 %531, %v317
        %v533 = vpop.permute.xlu0 %532
        %536 = vset.pattern.permute.xlu0 0
        %537 = vperm.xlu0 %536, %v318
        %v538 = vpop.permute.xlu0 %537
        %541 = vset.pattern.permute.xlu0 0
        %542 = vperm.xlu0 %541, %v319
        %v543 = vpop.permute.xlu0 %542
        %546 = vset.pattern.permute.xlu0 0
        %547 = vperm.xlu0 %546, %v320
        %v548 = vpop.permute.xlu0 %547
        %551 = vset.pattern.permute.xlu0 0
        %552 = vperm.xlu0 %551, %v321
        %v553 = vpop.permute.xlu0 %552
        %556 = vset.pattern.permute.xlu0 0
        %557 = vperm.xlu0 %556, %v322
        %v558 = vpop.permute.xlu0 %557
        %561 = vset.pattern.permute.xlu0 0
        %562 = vperm.xlu0 %561, %v323
        %v563 = vpop.permute.xlu0 %562
        %566 = vset.pattern.permute.xlu0 0
        %567 = vperm.xlu0 %566, %v324
        %v568 = vpop.permute.xlu0 %567
        %571 = vset.pattern.permute.xlu0 0
        %572 = vperm.xlu0 %571, %v325
        %v573 = vpop.permute.xlu0 %572
        %576 = vset.pattern.permute.xlu0 0
        %577 = vperm.xlu0 %576, %v326
        %v578 = vpop.permute.xlu0 %577
        %581 = vset.pattern.permute.xlu0 0
        %582 = vperm.xlu0 %581, %v327
        %v583 = vpop.permute.xlu0 %582
        %586 = vset.pattern.permute.xlu0 0
        %587 = vperm.xlu0 %586, %v328
        %v588 = vpop.permute.xlu0 %587
        %591 = vset.pattern.permute.xlu0 0
        %592 = vperm.xlu0 %591, %v329
        %v593 = vpop.permute.xlu0 %592
        %596 = vset.pattern.permute.xlu0 0
        %597 = vperm.xlu0 %596, %v330
        %v598 = vpop.permute.xlu0 %597
        %601 = vset.pattern.permute.xlu0 0
        %602 = vperm.xlu0 %601, %v331
        %v603 = vpop.permute.xlu0 %602
        %606 = vset.pattern.permute.xlu0 0
        %607 = vperm.xlu0 %606, %v332
        %v608 = vpop.permute.xlu0 %607
        %611 = vset.pattern.permute.xlu0 0
        %612 = vperm.xlu0 %611, %v333
        %v613 = vpop.permute.xlu0 %612
        %616 = vset.pattern.permute.xlu0 0
        %617 = vperm.xlu0 %616, %v334
        %v618 = vpop.permute.xlu0 %617
        %621 = vset.pattern.permute.xlu0 0
        %622 = vperm.xlu0 %621, %v335
        %v623 = vpop.permute.xlu0 %622
        %626 = vset.pattern.permute.xlu0 0
        %627 = vperm.xlu0 %626, %v336
        %v628 = vpop.permute.xlu0 %627
        %631 = vset.pattern.permute.xlu0 0
        %632 = vperm.xlu0 %631, %v337
        %v633 = vpop.permute.xlu0 %632
        %636 = vset.pattern.permute.xlu0 0
        %637 = vperm.xlu0 %636, %v338
        %v638 = vpop.permute.xlu0 %637
        %641 = vset.pattern.permute.xlu0 0
        %642 = vperm.xlu0 %641, %v339
        %v643 = vpop.permute.xlu0 %642
        %646 = vset.pattern.permute.xlu0 0
        %647 = vperm.xlu0 %646, %v340
        %v648 = vpop.permute.xlu0 %647
        %651 = vset.pattern.permute.xlu0 0
        %652 = vperm.xlu0 %651, %v341
        %v653 = vpop.permute.xlu0 %652
        %656 = vset.pattern.permute.xlu0 0
        %657 = vperm.xlu0 %656, %v342
        %v658 = vpop.permute.xlu0 %657
        %661 = vset.pattern.permute.xlu0 0
        %662 = vperm.xlu0 %661, %v343
        %v663 = vpop.permute.xlu0 %662
        %v666 = vlaneseq
        %v667 = vshrl.u32 %v666, 7
        %v668 = vsub.s32 0, %v667
        %v669 = vrot.slane %v344, %v668
        %v670 = vlaneseq
        %v671 = vshrl.u32 %v670, 7
        %v672 = vsub.s32 1, %v671
        %v673 = vrot.slane %v344, %v672
        %v676 = vmul.f32 %v348, %v669
        %v677 = vmul.f32 %v348, %v673
        %v678 = vmul.f32 %v353, %v669
        %v679 = vmul.f32 %v353, %v673
        %v680 = vmul.f32 %v358, %v669
        %v681 = vmul.f32 %v358, %v673
        %v682 = vmul.f32 %v363, %v669
        %v683 = vmul.f32 %v363, %v673
        %v684 = vmul.f32 %v368, %v669
        %v685 = vmul.f32 %v368, %v673
        %v686 = vmul.f32 %v373, %v669
        %v687 = vmul.f32 %v373, %v673
        %v688 = vmul.f32 %v378, %v669
        %v689 = vmul.f32 %v378, %v673
        %v690 = vmul.f32 %v383, %v669
        %v691 = vmul.f32 %v383, %v673
        %v692 = vmul.f32 %v388, %v669
        %v693 = vmul.f32 %v388, %v673
        %v694 = vmul.f32 %v393, %v669
        %v695 = vmul.f32 %v393, %v673
        %v696 = vmul.f32 %v398, %v669
        %v697 = vmul.f32 %v398, %v673
        %v698 = vmul.f32 %v403, %v669
        %v699 = vmul.f32 %v403, %v673
        %v700 = vmul.f32 %v408, %v669
        %v701 = vmul.f32 %v408, %v673
        %v702 = vmul.f32 %v413, %v669
        %v703 = vmul.f32 %v413, %v673
        %v704 = vmul.f32 %v418, %v669
        %v705 = vmul.f32 %v418, %v673
        %v706 = vmul.f32 %v423, %v669
        %v707 = vmul.f32 %v423, %v673
        %v708 = vmul.f32 %v428, %v669
        %v709 = vmul.f32 %v428, %v673
        %v710 = vmul.f32 %v433, %v669
        %v711 = vmul.f32 %v433, %v673
        %v712 = vmul.f32 %v438, %v669
        %v713 = vmul.f32 %v438, %v673
        %v714 = vmul.f32 %v443, %v669
        %v715 = vmul.f32 %v443, %v673
        %v716 = vmul.f32 %v448, %v669
        %v717 = vmul.f32 %v448, %v673
        %v718 = vmul.f32 %v453, %v669
        %v719 = vmul.f32 %v453, %v673
        %v720 = vmul.f32 %v458, %v669
        %v721 = vmul.f32 %v458, %v673
        %v722 = vmul.f32 %v463, %v669
        %v723 = vmul.f32 %v463, %v673
        %v724 = vmul.f32 %v468, %v669
        %v725 = vmul.f32 %v468, %v673
        %v726 = vmul.f32 %v473, %v669
        %v727 = vmul.f32 %v473, %v673
        %v728 = vmul.f32 %v478, %v669
        %v729 = vmul.f32 %v478, %v673
        %v730 = vmul.f32 %v483, %v669
        %v731 = vmul.f32 %v483, %v673
        %v732 = vmul.f32 %v488, %v669
        %v733 = vmul.f32 %v488, %v673
        %v734 = vmul.f32 %v493, %v669
        %v735 = vmul.f32 %v493, %v673
        %v736 = vmul.f32 %v498, %v669
        %v737 = vmul.f32 %v498, %v673
        %v738 = vmul.f32 %v503, %v669
        %v739 = vmul.f32 %v503, %v673
        %v740 = vmul.f32 %v508, %v669
        %v741 = vmul.f32 %v508, %v673
        %v742 = vmul.f32 %v513, %v669
        %v743 = vmul.f32 %v513, %v673
        %v744 = vmul.f32 %v518, %v669
        %v745 = vmul.f32 %v518, %v673
        %v746 = vmul.f32 %v523, %v669
        %v747 = vmul.f32 %v523, %v673
        %v748 = vmul.f32 %v528, %v669
        %v749 = vmul.f32 %v528, %v673
        %v750 = vmul.f32 %v533, %v669
        %v751 = vmul.f32 %v533, %v673
        %v752 = vmul.f32 %v538, %v669
        %v753 = vmul.f32 %v538, %v673
        %v754 = vmul.f32 %v543, %v669
        %v755 = vmul.f32 %v543, %v673
        %v756 = vmul.f32 %v548, %v669
        %v757 = vmul.f32 %v548, %v673
        %v758 = vmul.f32 %v553, %v669
        %v759 = vmul.f32 %v553, %v673
        %v760 = vmul.f32 %v558, %v669
        %v761 = vmul.f32 %v558, %v673
        %v762 = vmul.f32 %v563, %v669
        %v763 = vmul.f32 %v563, %v673
        %v764 = vmul.f32 %v568, %v669
        %v765 = vmul.f32 %v568, %v673
        %v766 = vmul.f32 %v573, %v669
        %v767 = vmul.f32 %v573, %v673
        %v768 = vmul.f32 %v578, %v669
        %v769 = vmul.f32 %v578, %v673
        %v770 = vmul.f32 %v583, %v669
        %v771 = vmul.f32 %v583, %v673
        %v772 = vmul.f32 %v588, %v669
        %v773 = vmul.f32 %v588, %v673
        %v774 = vmul.f32 %v593, %v669
        %v775 = vmul.f32 %v593, %v673
        %v776 = vmul.f32 %v598, %v669
        %v777 = vmul.f32 %v598, %v673
        %v778 = vmul.f32 %v603, %v669
        %v779 = vmul.f32 %v603, %v673
        %v780 = vmul.f32 %v608, %v669
        %v781 = vmul.f32 %v608, %v673
        %v782 = vmul.f32 %v613, %v669
        %v783 = vmul.f32 %v613, %v673
        %v784 = vmul.f32 %v618, %v669
        %v785 = vmul.f32 %v618, %v673
        %v786 = vmul.f32 %v623, %v669
        %v787 = vmul.f32 %v623, %v673
        %v788 = vmul.f32 %v628, %v669
        %v789 = vmul.f32 %v628, %v673
        %v790 = vmul.f32 %v633, %v669
        %v791 = vmul.f32 %v633, %v673
        %v792 = vmul.f32 %v638, %v669
        %v793 = vmul.f32 %v638, %v673
        %v794 = vmul.f32 %v643, %v669
        %v795 = vmul.f32 %v643, %v673
        %v796 = vmul.f32 %v648, %v669
        %v797 = vmul.f32 %v648, %v673
        %v798 = vmul.f32 %v653, %v669
        %v799 = vmul.f32 %v653, %v673
        %v800 = vmul.f32 %v658, %v669
        %v801 = vmul.f32 %v658, %v673
        %v802 = vmul.f32 %v663, %v669
        %v803 = vmul.f32 %v663, %v673
        %s804 = scalar_lea.vmem %s1, 1
        %v805 = vld [vmem:[%s804] ss:$2 sm:$0x3]
        %806 = vset.pattern.permute.xlu0 1
        %807 = vperm.xlu0 %806, %v280
        %v808 = vpop.permute.xlu0 %807
        %810 = vset.pattern.permute.xlu0 1
        %811 = vperm.xlu0 %810, %v281
        %v812 = vpop.permute.xlu0 %811
        %814 = vset.pattern.permute.xlu0 1
        %815 = vperm.xlu0 %814, %v282
        %v816 = vpop.permute.xlu0 %815
        %818 = vset.pattern.permute.xlu0 1
        %819 = vperm.xlu0 %818, %v283
        %v820 = vpop.permute.xlu0 %819
        %822 = vset.pattern.permute.xlu0 1
        %823 = vperm.xlu0 %822, %v284
        %v824 = vpop.permute.xlu0 %823
        %826 = vset.pattern.permute.xlu0 1
        %827 = vperm.xlu0 %826, %v285
        %v828 = vpop.permute.xlu0 %827
        %830 = vset.pattern.permute.xlu0 1
        %831 = vperm.xlu0 %830, %v286
        %v832 = vpop.permute.xlu0 %831
        %834 = vset.pattern.permute.xlu0 1
        %835 = vperm.xlu0 %834, %v287
        %v836 = vpop.permute.xlu0 %835
        %838 = vset.pattern.permute.xlu0 1
        %839 = vperm.xlu0 %838, %v288
        %v840 = vpop.permute.xlu0 %839
        %842 = vset.pattern.permute.xlu0 1
        %843 = vperm.xlu0 %842, %v289
        %v844 = vpop.permute.xlu0 %843
        %846 = vset.pattern.permute.xlu0 1
        %847 = vperm.xlu0 %846, %v290
        %v848 = vpop.permute.xlu0 %847
        %850 = vset.pattern.permute.xlu0 1
        %851 = vperm.xlu0 %850, %v291
        %v852 = vpop.permute.xlu0 %851
        %854 = vset.pattern.permute.xlu0 1
        %855 = vperm.xlu0 %854, %v292
        %v856 = vpop.permute.xlu0 %855
        %858 = vset.pattern.permute.xlu0 1
        %859 = vperm.xlu0 %858, %v293
        %v860 = vpop.permute.xlu0 %859
        %862 = vset.pattern.permute.xlu0 1
        %863 = vperm.xlu0 %862, %v294
        %v864 = vpop.permute.xlu0 %863
        %866 = vset.pattern.permute.xlu0 1
        %867 = vperm.xlu0 %866, %v295
        %v868 = vpop.permute.xlu0 %867
        %870 = vset.pattern.permute.xlu0 1
        %871 = vperm.xlu0 %870, %v296
        %v872 = vpop.permute.xlu0 %871
        %874 = vset.pattern.permute.xlu0 1
        %875 = vperm.xlu0 %874, %v297
        %v876 = vpop.permute.xlu0 %875
        %878 = vset.pattern.permute.xlu0 1
        %879 = vperm.xlu0 %878, %v298
        %v880 = vpop.permute.xlu0 %879
        %882 = vset.pattern.permute.xlu0 1
        %883 = vperm.xlu0 %882, %v299
        %v884 = vpop.permute.xlu0 %883
        %886 = vset.pattern.permute.xlu0 1
        %887 = vperm.xlu0 %886, %v300
        %v888 = vpop.permute.xlu0 %887
        %890 = vset.pattern.permute.xlu0 1
        %891 = vperm.xlu0 %890, %v301
        %v892 = vpop.permute.xlu0 %891
        %894 = vset.pattern.permute.xlu0 1
        %895 = vperm.xlu0 %894, %v302
        %v896 = vpop.permute.xlu0 %895
        %898 = vset.pattern.permute.xlu0 1
        %899 = vperm.xlu0 %898, %v303
        %v900 = vpop.permute.xlu0 %899
        %902 = vset.pattern.permute.xlu0 1
        %903 = vperm.xlu0 %902, %v304
        %v904 = vpop.permute.xlu0 %903
        %906 = vset.pattern.permute.xlu0 1
        %907 = vperm.xlu0 %906, %v305
        %v908 = vpop.permute.xlu0 %907
        %910 = vset.pattern.permute.xlu0 1
        %911 = vperm.xlu0 %910, %v306
        %v912 = vpop.permute.xlu0 %911
        %914 = vset.pattern.permute.xlu0 1
        %915 = vperm.xlu0 %914, %v307
        %v916 = vpop.permute.xlu0 %915
        %918 = vset.pattern.permute.xlu0 1
        %919 = vperm.xlu0 %918, %v308
        %v920 = vpop.permute.xlu0 %919
        %922 = vset.pattern.permute.xlu0 1
        %923 = vperm.xlu0 %922, %v309
        %v924 = vpop.permute.xlu0 %923
        %926 = vset.pattern.permute.xlu0 1
        %927 = vperm.xlu0 %926, %v310
        %v928 = vpop.permute.xlu0 %927
        %930 = vset.pattern.permute.xlu0 1
        %931 = vperm.xlu0 %930, %v311
        %v932 = vpop.permute.xlu0 %931
        %934 = vset.pattern.permute.xlu0 1
        %935 = vperm.xlu0 %934, %v312
        %v936 = vpop.permute.xlu0 %935
        %938 = vset.pattern.permute.xlu0 1
        %939 = vperm.xlu0 %938, %v313
        %v940 = vpop.permute.xlu0 %939
        %942 = vset.pattern.permute.xlu0 1
        %943 = vperm.xlu0 %942, %v314
        %v944 = vpop.permute.xlu0 %943
        %946 = vset.pattern.permute.xlu0 1
        %947 = vperm.xlu0 %946, %v315
        %v948 = vpop.permute.xlu0 %947
        %950 = vset.pattern.permute.xlu0 1
        %951 = vperm.xlu0 %950, %v316
        %v952 = vpop.permute.xlu0 %951
        %954 = vset.pattern.permute.xlu0 1
        %955 = vperm.xlu0 %954, %v317
        %v956 = vpop.permute.xlu0 %955
        %958 = vset.pattern.permute.xlu0 1
        %959 = vperm.xlu0 %958, %v318
        %v960 = vpop.permute.xlu0 %959
        %962 = vset.pattern.permute.xlu0 1
        %963 = vperm.xlu0 %962, %v319
        %v964 = vpop.permute.xlu0 %963
        %966 = vset.pattern.permute.xlu0 1
        %967 = vperm.xlu0 %966, %v320
        %v968 = vpop.permute.xlu0 %967
        %970 = vset.pattern.permute.xlu0 1
        %971 = vperm.xlu0 %970, %v321
        %v972 = vpop.permute.xlu0 %971
        %974 = vset.pattern.permute.xlu0 1
        %975 = vperm.xlu0 %974, %v322
        %v976 = vpop.permute.xlu0 %975
        %978 = vset.pattern.permute.xlu0 1
        %979 = vperm.xlu0 %978, %v323
        %v980 = vpop.permute.xlu0 %979
        %982 = vset.pattern.permute.xlu0 1
        %983 = vperm.xlu0 %982, %v324
        %v984 = vpop.permute.xlu0 %983
        %986 = vset.pattern.permute.xlu0 1
        %987 = vperm.xlu0 %986, %v325
        %v988 = vpop.permute.xlu0 %987
        %990 = vset.pattern.permute.xlu0 1
        %991 = vperm.xlu0 %990, %v326
        %v992 = vpop.permute.xlu0 %991
        %994 = vset.pattern.permute.xlu0 1
        %995 = vperm.xlu0 %994, %v327
        %v996 = vpop.permute.xlu0 %995
        %998 = vset.pattern.permute.xlu0 1
        %999 = vperm.xlu0 %998, %v328
        %v1000 = vpop.permute.xlu0 %999
        %1002 = vset.pattern.permute.xlu0 1
        %1003 = vperm.xlu0 %1002, %v329
        %v1004 = vpop.permute.xlu0 %1003
        %1006 = vset.pattern.permute.xlu0 1
        %1007 = vperm.xlu0 %1006, %v330
        %v1008 = vpop.permute.xlu0 %1007
        %1010 = vset.pattern.permute.xlu0 1
        %1011 = vperm.xlu0 %1010, %v331
        %v1012 = vpop.permute.xlu0 %1011
        %1014 = vset.pattern.permute.xlu0 1
        %1015 = vperm.xlu0 %1014, %v332
        %v1016 = vpop.permute.xlu0 %1015
        %1018 = vset.pattern.permute.xlu0 1
        %1019 = vperm.xlu0 %1018, %v333
        %v1020 = vpop.permute.xlu0 %1019
        %1022 = vset.pattern.permute.xlu0 1
        %1023 = vperm.xlu0 %1022, %v334
        %v1024 = vpop.permute.xlu0 %1023
        %1026 = vset.pattern.permute.xlu0 1
        %1027 = vperm.xlu0 %1026, %v335
        %v1028 = vpop.permute.xlu0 %1027
        %1030 = vset.pattern.permute.xlu0 1
        %1031 = vperm.xlu0 %1030, %v336
        %v1032 = vpop.permute.xlu0 %1031
        %1034 = vset.pattern.permute.xlu0 1
        %1035 = vperm.xlu0 %1034, %v337
        %v1036 = vpop.permute.xlu0 %1035
        %1038 = vset.pattern.permute.xlu0 1
        %1039 = vperm.xlu0 %1038, %v338
        %v1040 = vpop.permute.xlu0 %1039
        %1042 = vset.pattern.permute.xlu0 1
        %1043 = vperm.xlu0 %1042, %v339
        %v1044 = vpop.permute.xlu0 %1043
        %1046 = vset.pattern.permute.xlu0 1
        %1047 = vperm.xlu0 %1046, %v340
        %v1048 = vpop.permute.xlu0 %1047
        %1050 = vset.pattern.permute.xlu0 1
        %1051 = vperm.xlu0 %1050, %v341
        %v1052 = vpop.permute.xlu0 %1051
        %1054 = vset.pattern.permute.xlu0 1
        %1055 = vperm.xlu0 %1054, %v342
        %v1056 = vpop.permute.xlu0 %1055
        %1058 = vset.pattern.permute.xlu0 1
        %1059 = vperm.xlu0 %1058, %v343
        %v1060 = vpop.permute.xlu0 %1059
        %v1063 = vlaneseq
        %v1064 = vshrl.u32 %v1063, 7
        %v1065 = vsub.s32 0, %v1064
        %v1066 = vrot.slane %v805, %v1065
        %v1067 = vlaneseq
        %v1068 = vshrl.u32 %v1067, 7
        %v1069 = vsub.s32 1, %v1068
        %v1070 = vrot.slane %v805, %v1069
        %v1073 = vmul.f32 %v808, %v1066
        %v1074 = vmul.f32 %v808, %v1070
        %v1075 = vmul.f32 %v812, %v1066
        %v1076 = vmul.f32 %v812, %v1070
        %v1077 = vmul.f32 %v816, %v1066
        %v1078 = vmul.f32 %v816, %v1070
        %v1079 = vmul.f32 %v820, %v1066
        %v1080 = vmul.f32 %v820, %v1070
        %v1081 = vmul.f32 %v824, %v1066
        %v1082 = vmul.f32 %v824, %v1070
        %v1083 = vmul.f32 %v828, %v1066
        %v1084 = vmul.f32 %v828, %v1070
        %v1085 = vmul.f32 %v832, %v1066
        %v1086 = vmul.f32 %v832, %v1070
        %v1087 = vmul.f32 %v836, %v1066
        %v1088 = vmul.f32 %v836, %v1070
        %v1089 = vmul.f32 %v840, %v1066
        %v1090 = vmul.f32 %v840, %v1070
        %v1091 = vmul.f32 %v844, %v1066
        %v1092 = vmul.f32 %v844, %v1070
        %v1093 = vmul.f32 %v848, %v1066
        %v1094 = vmul.f32 %v848, %v1070
        %v1095 = vmul.f32 %v852, %v1066
        %v1096 = vmul.f32 %v852, %v1070
        %v1097 = vmul.f32 %v856, %v1066
        %v1098 = vmul.f32 %v856, %v1070
        %v1099 = vmul.f32 %v860, %v1066
        %v1100 = vmul.f32 %v860, %v1070
        %v1101 = vmul.f32 %v864, %v1066
        %v1102 = vmul.f32 %v864, %v1070
        %v1103 = vmul.f32 %v868, %v1066
        %v1104 = vmul.f32 %v868, %v1070
        %v1105 = vmul.f32 %v872, %v1066
        %v1106 = vmul.f32 %v872, %v1070
        %v1107 = vmul.f32 %v876, %v1066
        %v1108 = vmul.f32 %v876, %v1070
        %v1109 = vmul.f32 %v880, %v1066
        %v1110 = vmul.f32 %v880, %v1070
        %v1111 = vmul.f32 %v884, %v1066
        %v1112 = vmul.f32 %v884, %v1070
        %v1113 = vmul.f32 %v888, %v1066
        %v1114 = vmul.f32 %v888, %v1070
        %v1115 = vmul.f32 %v892, %v1066
        %v1116 = vmul.f32 %v892, %v1070
        %v1117 = vmul.f32 %v896, %v1066
        %v1118 = vmul.f32 %v896, %v1070
        %v1119 = vmul.f32 %v900, %v1066
        %v1120 = vmul.f32 %v900, %v1070
        %v1121 = vmul.f32 %v904, %v1066
        %v1122 = vmul.f32 %v904, %v1070
        %v1123 = vmul.f32 %v908, %v1066
        %v1124 = vmul.f32 %v908, %v1070
        %v1125 = vmul.f32 %v912, %v1066
        %v1126 = vmul.f32 %v912, %v1070
        %v1127 = vmul.f32 %v916, %v1066
        %v1128 = vmul.f32 %v916, %v1070
        %v1129 = vmul.f32 %v920, %v1066
        %v1130 = vmul.f32 %v920, %v1070
        %v1131 = vmul.f32 %v924, %v1066
        %v1132 = vmul.f32 %v924, %v1070
        %v1133 = vmul.f32 %v928, %v1066
        %v1134 = vmul.f32 %v928, %v1070
        %v1135 = vmul.f32 %v932, %v1066
        %v1136 = vmul.f32 %v932, %v1070
        %v1137 = vmul.f32 %v936, %v1066
        %v1138 = vmul.f32 %v936, %v1070
        %v1139 = vmul.f32 %v940, %v1066
        %v1140 = vmul.f32 %v940, %v1070
        %v1141 = vmul.f32 %v944, %v1066
        %v1142 = vmul.f32 %v944, %v1070
        %v1143 = vmul.f32 %v948, %v1066
        %v1144 = vmul.f32 %v948, %v1070
        %v1145 = vmul.f32 %v952, %v1066
        %v1146 = vmul.f32 %v952, %v1070
        %v1147 = vmul.f32 %v956, %v1066
        %v1148 = vmul.f32 %v956, %v1070
        %v1149 = vmul.f32 %v960, %v1066
        %v1150 = vmul.f32 %v960, %v1070
        %v1151 = vmul.f32 %v964, %v1066
        %v1152 = vmul.f32 %v964, %v1070
        %v1153 = vmul.f32 %v968, %v1066
        %v1154 = vmul.f32 %v968, %v1070
        %v1155 = vmul.f32 %v972, %v1066
        %v1156 = vmul.f32 %v972, %v1070
        %v1157 = vmul.f32 %v976, %v1066
        %v1158 = vmul.f32 %v976, %v1070
        %v1159 = vmul.f32 %v980, %v1066
        %v1160 = vmul.f32 %v980, %v1070
        %v1161 = vmul.f32 %v984, %v1066
        %v1162 = vmul.f32 %v984, %v1070
        %v1163 = vmul.f32 %v988, %v1066
        %v1164 = vmul.f32 %v988, %v1070
        %v1165 = vmul.f32 %v992, %v1066
        %v1166 = vmul.f32 %v992, %v1070
        %v1167 = vmul.f32 %v996, %v1066
        %v1168 = vmul.f32 %v996, %v1070
        %v1169 = vmul.f32 %v1000, %v1066
        %v1170 = vmul.f32 %v1000, %v1070
        %v1171 = vmul.f32 %v1004, %v1066
        %v1172 = vmul.f32 %v1004, %v1070
        %v1173 = vmul.f32 %v1008, %v1066
        %v1174 = vmul.f32 %v1008, %v1070
        %v1175 = vmul.f32 %v1012, %v1066
        %v1176 = vmul.f32 %v1012, %v1070
        %v1177 = vmul.f32 %v1016, %v1066
        %v1178 = vmul.f32 %v1016, %v1070
        %v1179 = vmul.f32 %v1020, %v1066
        %v1180 = vmul.f32 %v1020, %v1070
        %v1181 = vmul.f32 %v1024, %v1066
        %v1182 = vmul.f32 %v1024, %v1070
        %v1183 = vmul.f32 %v1028, %v1066
        %v1184 = vmul.f32 %v1028, %v1070
        %v1185 = vmul.f32 %v1032, %v1066
        %v1186 = vmul.f32 %v1032, %v1070
        %v1187 = vmul.f32 %v1036, %v1066
        %v1188 = vmul.f32 %v1036, %v1070
        %v1189 = vmul.f32 %v1040, %v1066
        %v1190 = vmul.f32 %v1040, %v1070
        %v1191 = vmul.f32 %v1044, %v1066
        %v1192 = vmul.f32 %v1044, %v1070
        %v1193 = vmul.f32 %v1048, %v1066
        %v1194 = vmul.f32 %v1048, %v1070
        %v1195 = vmul.f32 %v1052, %v1066
        %v1196 = vmul.f32 %v1052, %v1070
        %v1197 = vmul.f32 %v1056, %v1066
        %v1198 = vmul.f32 %v1056, %v1070
        %v1199 = vmul.f32 %v1060, %v1066
        %v1200 = vmul.f32 %v1060, %v1070
        %v1201 = vadd.f32 %v676, %v1073
        %v1202 = vadd.f32 %v677, %v1074
        %v1203 = vadd.f32 %v678, %v1075
        %v1204 = vadd.f32 %v679, %v1076
        %v1205 = vadd.f32 %v680, %v1077
        %v1206 = vadd.f32 %v681, %v1078
        %v1207 = vadd.f32 %v682, %v1079
        %v1208 = vadd.f32 %v683, %v1080
        %v1209 = vadd.f32 %v684, %v1081
        %v1210 = vadd.f32 %v685, %v1082
        %v1211 = vadd.f32 %v686, %v1083
        %v1212 = vadd.f32 %v687, %v1084
        %v1213 = vadd.f32 %v688, %v1085
        %v1214 = vadd.f32 %v689, %v1086
        %v1215 = vadd.f32 %v690, %v1087
        %v1216 = vadd.f32 %v691, %v1088
        %v1217 = vadd.f32 %v692, %v1089
        %v1218 = vadd.f32 %v693, %v1090
        %v1219 = vadd.f32 %v694, %v1091
        %v1220 = vadd.f32 %v695, %v1092
        %v1221 = vadd.f32 %v696, %v1093
        %v1222 = vadd.f32 %v697, %v1094
        %v1223 = vadd.f32 %v698, %v1095
        %v1224 = vadd.f32 %v699, %v1096
        %v1225 = vadd.f32 %v700, %v1097
        %v1226 = vadd.f32 %v701, %v1098
        %v1227 = vadd.f32 %v702, %v1099
        %v1228 = vadd.f32 %v703, %v1100
        %v1229 = vadd.f32 %v704, %v1101
        %v1230 = vadd.f32 %v705, %v1102
        %v1231 = vadd.f32 %v706, %v1103
        %v1232 = vadd.f32 %v707, %v1104
        %v1233 = vadd.f32 %v708, %v1105
        %v1234 = vadd.f32 %v709, %v1106
        %v1235 = vadd.f32 %v710, %v1107
        %v1236 = vadd.f32 %v711, %v1108
        %v1237 = vadd.f32 %v712, %v1109
        %v1238 = vadd.f32 %v713, %v1110
        %v1239 = vadd.f32 %v714, %v1111
        %v1240 = vadd.f32 %v715, %v1112
        %v1241 = vadd.f32 %v716, %v1113
        %v1242 = vadd.f32 %v717, %v1114
        %v1243 = vadd.f32 %v718, %v1115
        %v1244 = vadd.f32 %v719, %v1116
        %v1245 = vadd.f32 %v720, %v1117
        %v1246 = vadd.f32 %v721, %v1118
        %v1247 = vadd.f32 %v722, %v1119
        %v1248 = vadd.f32 %v723, %v1120
        %v1249 = vadd.f32 %v724, %v1121
        %v1250 = vadd.f32 %v725, %v1122
        %v1251 = vadd.f32 %v726, %v1123
        %v1252 = vadd.f32 %v727, %v1124
        %v1253 = vadd.f32 %v728, %v1125
        %v1254 = vadd.f32 %v729, %v1126
        %v1255 = vadd.f32 %v730, %v1127
        %v1256 = vadd.f32 %v731, %v1128
        %v1257 = vadd.f32 %v732, %v1129
        %v1258 = vadd.f32 %v733, %v1130
        %v1259 = vadd.f32 %v734, %v1131
        %v1260 = vadd.f32 %v735, %v1132
        %v1261 = vadd.f32 %v736, %v1133
        %v1262 = vadd.f32 %v737, %v1134
        %v1263 = vadd.f32 %v738, %v1135
        %v1264 = vadd.f32 %v739, %v1136
        %v1265 = vadd.f32 %v740, %v1137
        %v1266 = vadd.f32 %v741, %v1138
        %v1267 = vadd.f32 %v742, %v1139
        %v1268 = vadd.f32 %v743, %v1140
        %v1269 = vadd.f32 %v744, %v1141
        %v1270 = vadd.f32 %v745, %v1142
        %v1271 = vadd.f32 %v746, %v1143
        %v1272 = vadd.f32 %v747, %v1144
        %v1273 = vadd.f32 %v748, %v1145
        %v1274 = vadd.f32 %v749, %v1146
        %v1275 = vadd.f32 %v750, %v1147
        %v1276 = vadd.f32 %v751, %v1148
        %v1277 = vadd.f32 %v752, %v1149
        %v1278 = vadd.f32 %v753, %v1150
        %v1279 = vadd.f32 %v754, %v1151
        %v1280 = vadd.f32 %v755, %v1152
        %v1281 = vadd.f32 %v756, %v1153
        %v1282 = vadd.f32 %v757, %v1154
        %v1283 = vadd.f32 %v758, %v1155
        %v1284 = vadd.f32 %v759, %v1156
        %v1285 = vadd.f32 %v760, %v1157
        %v1286 = vadd.f32 %v761, %v1158
        %v1287 = vadd.f32 %v762, %v1159
        %v1288 = vadd.f32 %v763, %v1160
        %v1289 = vadd.f32 %v764, %v1161
        %v1290 = vadd.f32 %v765, %v1162
        %v1291 = vadd.f32 %v766, %v1163
        %v1292 = vadd.f32 %v767, %v1164
        %v1293 = vadd.f32 %v768, %v1165
        %v1294 = vadd.f32 %v769, %v1166
        %v1295 = vadd.f32 %v770, %v1167
        %v1296 = vadd.f32 %v771, %v1168
        %v1297 = vadd.f32 %v772, %v1169
        %v1298 = vadd.f32 %v773, %v1170
        %v1299 = vadd.f32 %v774, %v1171
        %v1300 = vadd.f32 %v775, %v1172
        %v1301 = vadd.f32 %v776, %v1173
        %v1302 = vadd.f32 %v777, %v1174
        %v1303 = vadd.f32 %v778, %v1175
        %v1304 = vadd.f32 %v779, %v1176
        %v1305 = vadd.f32 %v780, %v1177
        %v1306 = vadd.f32 %v781, %v1178
        %v1307 = vadd.f32 %v782, %v1179
        %v1308 = vadd.f32 %v783, %v1180
        %v1309 = vadd.f32 %v784, %v1181
        %v1310 = vadd.f32 %v785, %v1182
        %v1311 = vadd.f32 %v786, %v1183
        %v1312 = vadd.f32 %v787, %v1184
        %v1313 = vadd.f32 %v788, %v1185
        %v1314 = vadd.f32 %v789, %v1186
        %v1315 = vadd.f32 %v790, %v1187
        %v1316 = vadd.f32 %v791, %v1188
        %v1317 = vadd.f32 %v792, %v1189
        %v1318 = vadd.f32 %v793, %v1190
        %v1319 = vadd.f32 %v794, %v1191
        %v1320 = vadd.f32 %v795, %v1192
        %v1321 = vadd.f32 %v796, %v1193
        %v1322 = vadd.f32 %v797, %v1194
        %v1323 = vadd.f32 %v798, %v1195
        %v1324 = vadd.f32 %v799, %v1196
        %v1325 = vadd.f32 %v800, %v1197
        %v1326 = vadd.f32 %v801, %v1198
        %v1327 = vadd.f32 %v802, %v1199
        %v1328 = vadd.f32 %v803, %v1200
        %v1329 = vld [vmem:[%s2] sm:$0x3]
        %v1331 = vlaneseq
        %v1332 = vshrl.u32 %v1331, 7
        %v1333 = vsub.s32 0, %v1332
        %v1334 = vrot.slane %v1329, %v1333
        %v1335 = vlaneseq
        %v1336 = vshrl.u32 %v1335, 7
        %v1337 = vsub.s32 1, %v1336
        %v1338 = vrot.slane %v1329, %v1337
        %v1341 = vadd.f32 %v1201, %v1334
        %v1342 = vadd.f32 %v1202, %v1338
        %v1343 = vadd.f32 %v1203, %v1334
        %v1344 = vadd.f32 %v1204, %v1338
        %v1345 = vadd.f32 %v1205, %v1334
        %v1346 = vadd.f32 %v1206, %v1338
        %v1347 = vadd.f32 %v1207, %v1334
        %v1348 = vadd.f32 %v1208, %v1338
        %v1349 = vadd.f32 %v1209, %v1334
        %v1350 = vadd.f32 %v1210, %v1338
        %v1351 = vadd.f32 %v1211, %v1334
        %v1352 = vadd.f32 %v1212, %v1338
        %v1353 = vadd.f32 %v1213, %v1334
        %v1354 = vadd.f32 %v1214, %v1338
        %v1355 = vadd.f32 %v1215, %v1334
        %v1356 = vadd.f32 %v1216, %v1338
        %v1357 = vadd.f32 %v1217, %v1334
        %v1358 = vadd.f32 %v1218, %v1338
        %v1359 = vadd.f32 %v1219, %v1334
        %v1360 = vadd.f32 %v1220, %v1338
        %v1361 = vadd.f32 %v1221, %v1334
        %v1362 = vadd.f32 %v1222, %v1338
        %v1363 = vadd.f32 %v1223, %v1334
        %v1364 = vadd.f32 %v1224, %v1338
        %v1365 = vadd.f32 %v1225, %v1334
        %v1366 = vadd.f32 %v1226, %v1338
        %v1367 = vadd.f32 %v1227, %v1334
        %v1368 = vadd.f32 %v1228, %v1338
        %v1369 = vadd.f32 %v1229, %v1334
        %v1370 = vadd.f32 %v1230, %v1338
        %v1371 = vadd.f32 %v1231, %v1334
        %v1372 = vadd.f32 %v1232, %v1338
        %v1373 = vadd.f32 %v1233, %v1334
        %v1374 = vadd.f32 %v1234, %v1338
        %v1375 = vadd.f32 %v1235, %v1334
        %v1376 = vadd.f32 %v1236, %v1338
        %v1377 = vadd.f32 %v1237, %v1334
        %v1378 = vadd.f32 %v1238, %v1338
        %v1379 = vadd.f32 %v1239, %v1334
        %v1380 = vadd.f32 %v1240, %v1338
        %v1381 = vadd.f32 %v1241, %v1334
        %v1382 = vadd.f32 %v1242, %v1338
        %v1383 = vadd.f32 %v1243, %v1334
        %v1384 = vadd.f32 %v1244, %v1338
        %v1385 = vadd.f32 %v1245, %v1334
        %v1386 = vadd.f32 %v1246, %v1338
        %v1387 = vadd.f32 %v1247, %v1334
        %v1388 = vadd.f32 %v1248, %v1338
        %v1389 = vadd.f32 %v1249, %v1334
        %v1390 = vadd.f32 %v1250, %v1338
        %v1391 = vadd.f32 %v1251, %v1334
        %v1392 = vadd.f32 %v1252, %v1338
        %v1393 = vadd.f32 %v1253, %v1334
        %v1394 = vadd.f32 %v1254, %v1338
        %v1395 = vadd.f32 %v1255, %v1334
        %v1396 = vadd.f32 %v1256, %v1338
        %v1397 = vadd.f32 %v1257, %v1334
        %v1398 = vadd.f32 %v1258, %v1338
        %v1399 = vadd.f32 %v1259, %v1334
        %v1400 = vadd.f32 %v1260, %v1338
        %v1401 = vadd.f32 %v1261, %v1334
        %v1402 = vadd.f32 %v1262, %v1338
        %v1403 = vadd.f32 %v1263, %v1334
        %v1404 = vadd.f32 %v1264, %v1338
        %v1405 = vadd.f32 %v1265, %v1334
        %v1406 = vadd.f32 %v1266, %v1338
        %v1407 = vadd.f32 %v1267, %v1334
        %v1408 = vadd.f32 %v1268, %v1338
        %v1409 = vadd.f32 %v1269, %v1334
        %v1410 = vadd.f32 %v1270, %v1338
        %v1411 = vadd.f32 %v1271, %v1334
        %v1412 = vadd.f32 %v1272, %v1338
        %v1413 = vadd.f32 %v1273, %v1334
        %v1414 = vadd.f32 %v1274, %v1338
        %v1415 = vadd.f32 %v1275, %v1334
        %v1416 = vadd.f32 %v1276, %v1338
        %v1417 = vadd.f32 %v1277, %v1334
        %v1418 = vadd.f32 %v1278, %v1338
        %v1419 = vadd.f32 %v1279, %v1334
        %v1420 = vadd.f32 %v1280, %v1338
        %v1421 = vadd.f32 %v1281, %v1334
        %v1422 = vadd.f32 %v1282, %v1338
        %v1423 = vadd.f32 %v1283, %v1334
        %v1424 = vadd.f32 %v1284, %v1338
        %v1425 = vadd.f32 %v1285, %v1334
        %v1426 = vadd.f32 %v1286, %v1338
        %v1427 = vadd.f32 %v1287, %v1334
        %v1428 = vadd.f32 %v1288, %v1338
        %v1429 = vadd.f32 %v1289, %v1334
        %v1430 = vadd.f32 %v1290, %v1338
        %v1431 = vadd.f32 %v1291, %v1334
        %v1432 = vadd.f32 %v1292, %v1338
        %v1433 = vadd.f32 %v1293, %v1334
        %v1434 = vadd.f32 %v1294, %v1338
        %v1435 = vadd.f32 %v1295, %v1334
        %v1436 = vadd.f32 %v1296, %v1338
        %v1437 = vadd.f32 %v1297, %v1334
        %v1438 = vadd.f32 %v1298, %v1338
        %v1439 = vadd.f32 %v1299, %v1334
        %v1440 = vadd.f32 %v1300, %v1338
        %v1441 = vadd.f32 %v1301, %v1334
        %v1442 = vadd.f32 %v1302, %v1338
        %v1443 = vadd.f32 %v1303, %v1334
        %v1444 = vadd.f32 %v1304, %v1338
        %v1445 = vadd.f32 %v1305, %v1334
        %v1446 = vadd.f32 %v1306, %v1338
        %v1447 = vadd.f32 %v1307, %v1334
        %v1448 = vadd.f32 %v1308, %v1338
        %v1449 = vadd.f32 %v1309, %v1334
        %v1450 = vadd.f32 %v1310, %v1338
        %v1451 = vadd.f32 %v1311, %v1334
        %v1452 = vadd.f32 %v1312, %v1338
        %v1453 = vadd.f32 %v1313, %v1334
        %v1454 = vadd.f32 %v1314, %v1338
        %v1455 = vadd.f32 %v1315, %v1334
        %v1456 = vadd.f32 %v1316, %v1338
        %v1457 = vadd.f32 %v1317, %v1334
        %v1458 = vadd.f32 %v1318, %v1338
        %v1459 = vadd.f32 %v1319, %v1334
        %v1460 = vadd.f32 %v1320, %v1338
        %v1461 = vadd.f32 %v1321, %v1334
        %v1462 = vadd.f32 %v1322, %v1338
        %v1463 = vadd.f32 %v1323, %v1334
        %v1464 = vadd.f32 %v1324, %v1338
        %v1465 = vadd.f32 %v1325, %v1334
        %v1466 = vadd.f32 %v1326, %v1338
        %v1467 = vadd.f32 %v1327, %v1334
        %v1468 = vadd.f32 %v1328, %v1338
        %v1469 = vmax.f32 %v1341, 0.0
        %v1470 = vmax.f32 %v1342, 0.0
        %v1471 = vmax.f32 %v1343, 0.0
        %v1472 = vmax.f32 %v1344, 0.0
        %v1473 = vmax.f32 %v1345, 0.0
        %v1474 = vmax.f32 %v1346, 0.0
        %v1475 = vmax.f32 %v1347, 0.0
        %v1476 = vmax.f32 %v1348, 0.0
        %v1477 = vmax.f32 %v1349, 0.0
        %v1478 = vmax.f32 %v1350, 0.0
        %v1479 = vmax.f32 %v1351, 0.0
        %v1480 = vmax.f32 %v1352, 0.0
        %v1481 = vmax.f32 %v1353, 0.0
        %v1482 = vmax.f32 %v1354, 0.0
        %v1483 = vmax.f32 %v1355, 0.0
        %v1484 = vmax.f32 %v1356, 0.0
        %v1485 = vmax.f32 %v1357, 0.0
        %v1486 = vmax.f32 %v1358, 0.0
        %v1487 = vmax.f32 %v1359, 0.0
        %v1488 = vmax.f32 %v1360, 0.0
        %v1489 = vmax.f32 %v1361, 0.0
        %v1490 = vmax.f32 %v1362, 0.0
        %v1491 = vmax.f32 %v1363, 0.0
        %v1492 = vmax.f32 %v1364, 0.0
        %v1493 = vmax.f32 %v1365, 0.0
        %v1494 = vmax.f32 %v1366, 0.0
        %v1495 = vmax.f32 %v1367, 0.0
        %v1496 = vmax.f32 %v1368, 0.0
        %v1497 = vmax.f32 %v1369, 0.0
        %v1498 = vmax.f32 %v1370, 0.0
        %v1499 = vmax.f32 %v1371, 0.0
        %v1500 = vmax.f32 %v1372, 0.0
        %v1501 = vmax.f32 %v1373, 0.0
        %v1502 = vmax.f32 %v1374, 0.0
        %v1503 = vmax.f32 %v1375, 0.0
        %v1504 = vmax.f32 %v1376, 0.0
        %v1505 = vmax.f32 %v1377, 0.0
        %v1506 = vmax.f32 %v1378, 0.0
        %v1507 = vmax.f32 %v1379, 0.0
        %v1508 = vmax.f32 %v1380, 0.0
        %v1509 = vmax.f32 %v1381, 0.0
        %v1510 = vmax.f32 %v1382, 0.0
        %v1511 = vmax.f32 %v1383, 0.0
        %v1512 = vmax.f32 %v1384, 0.0
        %v1513 = vmax.f32 %v1385, 0.0
        %v1514 = vmax.f32 %v1386, 0.0
        %v1515 = vmax.f32 %v1387, 0.0
        %v1516 = vmax.f32 %v1388, 0.0
        %v1517 = vmax.f32 %v1389, 0.0
        %v1518 = vmax.f32 %v1390, 0.0
        %v1519 = vmax.f32 %v1391, 0.0
        %v1520 = vmax.f32 %v1392, 0.0
        %v1521 = vmax.f32 %v1393, 0.0
        %v1522 = vmax.f32 %v1394, 0.0
        %v1523 = vmax.f32 %v1395, 0.0
        %v1524 = vmax.f32 %v1396, 0.0
        %v1525 = vmax.f32 %v1397, 0.0
        %v1526 = vmax.f32 %v1398, 0.0
        %v1527 = vmax.f32 %v1399, 0.0
        %v1528 = vmax.f32 %v1400, 0.0
        %v1529 = vmax.f32 %v1401, 0.0
        %v1530 = vmax.f32 %v1402, 0.0
        %v1531 = vmax.f32 %v1403, 0.0
        %v1532 = vmax.f32 %v1404, 0.0
        %v1533 = vmax.f32 %v1405, 0.0
        %v1534 = vmax.f32 %v1406, 0.0
        %v1535 = vmax.f32 %v1407, 0.0
        %v1536 = vmax.f32 %v1408, 0.0
        %v1537 = vmax.f32 %v1409, 0.0
        %v1538 = vmax.f32 %v1410, 0.0
        %v1539 = vmax.f32 %v1411, 0.0
        %v1540 = vmax.f32 %v1412, 0.0
        %v1541 = vmax.f32 %v1413, 0.0
        %v1542 = vmax.f32 %v1414, 0.0
        %v1543 = vmax.f32 %v1415, 0.0
        %v1544 = vmax.f32 %v1416, 0.0
        %v1545 = vmax.f32 %v1417, 0.0
        %v1546 = vmax.f32 %v1418, 0.0
        %v1547 = vmax.f32 %v1419, 0.0
        %v1548 = vmax.f32 %v1420, 0.0
        %v1549 = vmax.f32 %v1421, 0.0
        %v1550 = vmax.f32 %v1422, 0.0
        %v1551 = vmax.f32 %v1423, 0.0
        %v1552 = vmax.f32 %v1424, 0.0
        %v1553 = vmax.f32 %v1425, 0.0
        %v1554 = vmax.f32 %v1426, 0.0
        %v1555 = vmax.f32 %v1427, 0.0
        %v1556 = vmax.f32 %v1428, 0.0
        %v1557 = vmax.f32 %v1429, 0.0
        %v1558 = vmax.f32 %v1430, 0.0
        %v1559 = vmax.f32 %v1431, 0.0
        %v1560 = vmax.f32 %v1432, 0.0
        %v1561 = vmax.f32 %v1433, 0.0
        %v1562 = vmax.f32 %v1434, 0.0
        %v1563 = vmax.f32 %v1435, 0.0
        %v1564 = vmax.f32 %v1436, 0.0
        %v1565 = vmax.f32 %v1437, 0.0
        %v1566 = vmax.f32 %v1438, 0.0
        %v1567 = vmax.f32 %v1439, 0.0
        %v1568 = vmax.f32 %v1440, 0.0
        %v1569 = vmax.f32 %v1441, 0.0
        %v1570 = vmax.f32 %v1442, 0.0
        %v1571 = vmax.f32 %v1443, 0.0
        %v1572 = vmax.f32 %v1444, 0.0
        %v1573 = vmax.f32 %v1445, 0.0
        %v1574 = vmax.f32 %v1446, 0.0
        %v1575 = vmax.f32 %v1447, 0.0
        %v1576 = vmax.f32 %v1448, 0.0
        %v1577 = vmax.f32 %v1449, 0.0
        %v1578 = vmax.f32 %v1450, 0.0
        %v1579 = vmax.f32 %v1451, 0.0
        %v1580 = vmax.f32 %v1452, 0.0
        %v1581 = vmax.f32 %v1453, 0.0
        %v1582 = vmax.f32 %v1454, 0.0
        %v1583 = vmax.f32 %v1455, 0.0
        %v1584 = vmax.f32 %v1456, 0.0
        %v1585 = vmax.f32 %v1457, 0.0
        %v1586 = vmax.f32 %v1458, 0.0
        %v1587 = vmax.f32 %v1459, 0.0
        %v1588 = vmax.f32 %v1460, 0.0
        %v1589 = vmax.f32 %v1461, 0.0
        %v1590 = vmax.f32 %v1462, 0.0
        %v1591 = vmax.f32 %v1463, 0.0
        %v1592 = vmax.f32 %v1464, 0.0
        %v1593 = vmax.f32 %v1465, 0.0
        %v1594 = vmax.f32 %v1466, 0.0
        %v1595 = vmax.f32 %v1467, 0.0
        %v1596 = vmax.f32 %v1468, 0.0
        %v1597 = vpack.c.bf16 %v1471, %v1469
        %v1598 = vpack.c.bf16 %v1472, %v1470
        %v1599 = vpack.c.bf16 %v1475, %v1473
        %v1600 = vpack.c.bf16 %v1476, %v1474
        %v1601 = vpack.c.bf16 %v1479, %v1477
        %v1602 = vpack.c.bf16 %v1480, %v1478
        %v1603 = vpack.c.bf16 %v1483, %v1481
        %v1604 = vpack.c.bf16 %v1484, %v1482
        %v1605 = vpack.c.bf16 %v1487, %v1485
        %v1606 = vpack.c.bf16 %v1488, %v1486
        %v1607 = vpack.c.bf16 %v1491, %v1489
        %v1608 = vpack.c.bf16 %v1492, %v1490
        %v1609 = vpack.c.bf16 %v1495, %v1493
        %v1610 = vpack.c.bf16 %v1496, %v1494
        %v1611 = vpack.c.bf16 %v1499, %v1497
        %v1612 = vpack.c.bf16 %v1500, %v1498
        %v1613 = vpack.c.bf16 %v1503, %v1501
        %v1614 = vpack.c.bf16 %v1504, %v1502
        %v1615 = vpack.c.bf16 %v1507, %v1505
        %v1616 = vpack.c.bf16 %v1508, %v1506
        %v1617 = vpack.c.bf16 %v1511, %v1509
        %v1618 = vpack.c.bf16 %v1512, %v1510
        %v1619 = vpack.c.bf16 %v1515, %v1513
        %v1620 = vpack.c.bf16 %v1516, %v1514
        %v1621 = vpack.c.bf16 %v1519, %v1517
        %v1622 = vpack.c.bf16 %v1520, %v1518
        %v1623 = vpack.c.bf16 %v1523, %v1521
        %v1624 = vpack.c.bf16 %v1524, %v1522
        %v1625 = vpack.c.bf16 %v1527, %v1525
        %v1626 = vpack.c.bf16 %v1528, %v1526
        %v1627 = vpack.c.bf16 %v1531, %v1529
        %v1628 = vpack.c.bf16 %v1532, %v1530
        %v1629 = vpack.c.bf16 %v1535, %v1533
        %v1630 = vpack.c.bf16 %v1536, %v1534
        %v1631 = vpack.c.bf16 %v1539, %v1537
        %v1632 = vpack.c.bf16 %v1540, %v1538
        %v1633 = vpack.c.bf16 %v1543, %v1541
        %v1634 = vpack.c.bf16 %v1544, %v1542
        %v1635 = vpack.c.bf16 %v1547, %v1545
        %v1636 = vpack.c.bf16 %v1548, %v1546
        %v1637 = vpack.c.bf16 %v1551, %v1549
        %v1638 = vpack.c.bf16 %v1552, %v1550
        %v1639 = vpack.c.bf16 %v1555, %v1553
        %v1640 = vpack.c.bf16 %v1556, %v1554
        %v1641 = vpack.c.bf16 %v1559, %v1557
        %v1642 = vpack.c.bf16 %v1560, %v1558
        %v1643 = vpack.c.bf16 %v1563, %v1561
        %v1644 = vpack.c.bf16 %v1564, %v1562
        %v1645 = vpack.c.bf16 %v1567, %v1565
        %v1646 = vpack.c.bf16 %v1568, %v1566
        %v1647 = vpack.c.bf16 %v1571, %v1569
        %v1648 = vpack.c.bf16 %v1572, %v1570
        %v1649 = vpack.c.bf16 %v1575, %v1573
        %v1650 = vpack.c.bf16 %v1576, %v1574
        %v1651 = vpack.c.bf16 %v1579, %v1577
        %v1652 = vpack.c.bf16 %v1580, %v1578
        %v1653 = vpack.c.bf16 %v1583, %v1581
        %v1654 = vpack.c.bf16 %v1584, %v1582
        %v1655 = vpack.c.bf16 %v1587, %v1585
        %v1656 = vpack.c.bf16 %v1588, %v1586
        %v1657 = vpack.c.bf16 %v1591, %v1589
        %v1658 = vpack.c.bf16 %v1592, %v1590
        %v1659 = vpack.c.bf16 %v1595, %v1593
        %v1660 = vpack.c.bf16 %v1596, %v1594
        %v1661 = vld [vmem:[%s3] sm:$0xff]
        %v1662 = vld [vmem:[%s3 + $0x8] sm:$0xff]
        %v1663 = vld [vmem:[%s3 + $0x10] sm:$0xff]
        %v1664 = vld [vmem:[%s3 + $0x18] sm:$0xff]
        %v1665 = vld [vmem:[%s3 + $0x20] sm:$0xff]
        %v1666 = vld [vmem:[%s3 + $0x28] sm:$0xff]
        %v1667 = vld [vmem:[%s3 + $0x30] sm:$0xff]
        %v1668 = vld [vmem:[%s3 + $0x38] sm:$0xff]
        %v1669 = vld [vmem:[%s3 + $0x40] sm:$0xff]
        %v1670 = vld [vmem:[%s3 + $0x48] sm:$0xff]
        %v1671 = vld [vmem:[%s3 + $0x50] sm:$0xff]
        %v1672 = vld [vmem:[%s3 + $0x58] sm:$0xff]
        %v1673 = vld [vmem:[%s3 + $0x60] sm:$0xff]
        %v1674 = vld [vmem:[%s3 + $0x68] sm:$0xff]
        %v1675 = vld [vmem:[%s3 + $0x70] sm:$0xff]
        %v1676 = vld [vmem:[%s3 + $0x78] sm:$0xff]
        %v1677 = vld [vmem:[%s3 + $0x80] sm:$0xff]
        %v1678 = vld [vmem:[%s3 + $0x88] sm:$0xff]
        %v1679 = vld [vmem:[%s3 + $0x90] sm:$0xff]
        %v1680 = vld [vmem:[%s3 + $0x98] sm:$0xff]
        %v1681 = vld [vmem:[%s3 + $0xa0] sm:$0xff]
        %v1682 = vld [vmem:[%s3 + $0xa8] sm:$0xff]
        %v1683 = vld [vmem:[%s3 + $0xb0] sm:$0xff]
        %v1684 = vld [vmem:[%s3 + $0xb8] sm:$0xff]
        %v1685 = vld [vmem:[%s3 + $0xc0] sm:$0xff]
        %v1686 = vld [vmem:[%s3 + $0xc8] sm:$0xff]
        %v1687 = vld [vmem:[%s3 + $0xd0] sm:$0xff]
        %v1688 = vld [vmem:[%s3 + $0xd8] sm:$0xff]
        %v1689 = vld [vmem:[%s3 + $0xe0] sm:$0xff]
        %v1690 = vld [vmem:[%s3 + $0xe8] sm:$0xff]
        %v1691 = vld [vmem:[%s3 + $0xf0] sm:$0xff]
        %v1692 = vld [vmem:[%s3 + $0xf8] sm:$0xff]
        %v1693 = vld [vmem:[%s3 + $0x100] sm:$0xff]
        %v1694 = vld [vmem:[%s3 + $0x108] sm:$0xff]
        %v1695 = vld [vmem:[%s3 + $0x110] sm:$0xff]
        %v1696 = vld [vmem:[%s3 + $0x118] sm:$0xff]
        %v1697 = vld [vmem:[%s3 + $0x120] sm:$0xff]
        %v1698 = vld [vmem:[%s3 + $0x128] sm:$0xff]
        %v1699 = vld [vmem:[%s3 + $0x130] sm:$0xff]
        %v1700 = vld [vmem:[%s3 + $0x138] sm:$0xff]
        %v1701 = vld [vmem:[%s3 + $0x140] sm:$0xff]
        %v1702 = vld [vmem:[%s3 + $0x148] sm:$0xff]
        %v1703 = vld [vmem:[%s3 + $0x150] sm:$0xff]
        %v1704 = vld [vmem:[%s3 + $0x158] sm:$0xff]
        %v1705 = vld [vmem:[%s3 + $0x160] sm:$0xff]
        %v1706 = vld [vmem:[%s3 + $0x168] sm:$0xff]
        %v1707 = vld [vmem:[%s3 + $0x170] sm:$0xff]
        %v1708 = vld [vmem:[%s3 + $0x178] sm:$0xff]
        %v1709 = vld [vmem:[%s3 + $0x180] sm:$0xff]
        %v1710 = vld [vmem:[%s3 + $0x188] sm:$0xff]
        %v1711 = vld [vmem:[%s3 + $0x190] sm:$0xff]
        %v1712 = vld [vmem:[%s3 + $0x198] sm:$0xff]
        %v1713 = vld [vmem:[%s3 + $0x1a0] sm:$0xff]
        %v1714 = vld [vmem:[%s3 + $0x1a8] sm:$0xff]
        %v1715 = vld [vmem:[%s3 + $0x1b0] sm:$0xff]
        %v1716 = vld [vmem:[%s3 + $0x1b8] sm:$0xff]
        %v1717 = vld [vmem:[%s3 + $0x1c0] sm:$0xff]
        %v1718 = vld [vmem:[%s3 + $0x1c8] sm:$0xff]
        %v1719 = vld [vmem:[%s3 + $0x1d0] sm:$0xff]
        %v1720 = vld [vmem:[%s3 + $0x1d8] sm:$0xff]
        %v1721 = vld [vmem:[%s3 + $0x1e0] sm:$0xff]
        %v1722 = vld [vmem:[%s3 + $0x1e8] sm:$0xff]
        %v1723 = vld [vmem:[%s3 + $0x1f0] sm:$0xff]
        %v1724 = vld [vmem:[%s3 + $0x1f8] sm:$0xff]
        %v1725 = vld [vmem:[%s4] sm:$0xf]
        %v1727 = vlaneseq
        %v1728 = vshrl.u32 %v1727, 7
        %v1729 = vsub.s32 0, %v1728
        %v1730 = vrot.slane %v1725, %v1729
        %v1731 = vlaneseq
        %v1732 = vshrl.u32 %v1731, 7
        %v1733 = vsub.s32 1, %v1732
        %v1734 = vrot.slane %v1725, %v1733
        %v1735 = vlaneseq
        %v1736 = vshrl.u32 %v1735, 7
        %v1737 = vsub.s32 2, %v1736
        %v1738 = vrot.slane %v1725, %v1737
        %v1739 = vlaneseq
        %v1740 = vshrl.u32 %v1739, 7
        %v1741 = vsub.s32 3, %v1740
        %v1742 = vrot.slane %v1725, %v1741
        %v1811 = vunpack.c.l.b16 %v1661
        %v1812 = vunpack.c.h.b16 %v1661
        %v1813 = vunpack.c.l.b16 %v1662
        %v1814 = vunpack.c.h.b16 %v1662
        %v1815 = vunpack.c.l.b16 %v1663
        %v1816 = vunpack.c.h.b16 %v1663
        %v1817 = vunpack.c.l.b16 %v1664
        %v1818 = vunpack.c.h.b16 %v1664
        %v1819 = vunpack.c.l.b16 %v1665
        %v1820 = vunpack.c.h.b16 %v1665
        %v1821 = vunpack.c.l.b16 %v1666
        %v1822 = vunpack.c.h.b16 %v1666
        %v1823 = vunpack.c.l.b16 %v1667
        %v1824 = vunpack.c.h.b16 %v1667
        %v1825 = vunpack.c.l.b16 %v1668
        %v1826 = vunpack.c.h.b16 %v1668
        %v1827 = vunpack.c.l.b16 %v1669
        %v1828 = vunpack.c.h.b16 %v1669
        %v1829 = vunpack.c.l.b16 %v1670
        %v1830 = vunpack.c.h.b16 %v1670
        %v1831 = vunpack.c.l.b16 %v1671
        %v1832 = vunpack.c.h.b16 %v1671
        %v1833 = vunpack.c.l.b16 %v1672
        %v1834 = vunpack.c.h.b16 %v1672
        %v1835 = vunpack.c.l.b16 %v1673
        %v1836 = vunpack.c.h.b16 %v1673
        %v1837 = vunpack.c.l.b16 %v1674
        %v1838 = vunpack.c.h.b16 %v1674
        %v1839 = vunpack.c.l.b16 %v1675
        %v1840 = vunpack.c.h.b16 %v1675
        %v1841 = vunpack.c.l.b16 %v1676
        %v1842 = vunpack.c.h.b16 %v1676
        %v1843 = vunpack.c.l.b16 %v1677
        %v1844 = vunpack.c.h.b16 %v1677
        %v1845 = vunpack.c.l.b16 %v1678
        %v1846 = vunpack.c.h.b16 %v1678
        %v1847 = vunpack.c.l.b16 %v1679
        %v1848 = vunpack.c.h.b16 %v1679
        %v1849 = vunpack.c.l.b16 %v1680
        %v1850 = vunpack.c.h.b16 %v1680
        %v1851 = vunpack.c.l.b16 %v1681
        %v1852 = vunpack.c.h.b16 %v1681
        %v1853 = vunpack.c.l.b16 %v1682
        %v1854 = vunpack.c.h.b16 %v1682
        %v1855 = vunpack.c.l.b16 %v1683
        %v1856 = vunpack.c.h.b16 %v1683
        %v1857 = vunpack.c.l.b16 %v1684
        %v1858 = vunpack.c.h.b16 %v1684
        %v1859 = vunpack.c.l.b16 %v1685
        %v1860 = vunpack.c.h.b16 %v1685
        %v1861 = vunpack.c.l.b16 %v1686
        %v1862 = vunpack.c.h.b16 %v1686
        %v1863 = vunpack.c.l.b16 %v1687
        %v1864 = vunpack.c.h.b16 %v1687
        %v1865 = vunpack.c.l.b16 %v1688
        %v1866 = vunpack.c.h.b16 %v1688
        %v1867 = vunpack.c.l.b16 %v1689
        %v1868 = vunpack.c.h.b16 %v1689
        %v1869 = vunpack.c.l.b16 %v1690
        %v1870 = vunpack.c.h.b16 %v1690
        %v1871 = vunpack.c.l.b16 %v1691
        %v1872 = vunpack.c.h.b16 %v1691
        %v1873 = vunpack.c.l.b16 %v1692
        %v1874 = vunpack.c.h.b16 %v1692
        %v1875 = vunpack.c.l.b16 %v1693
        %v1876 = vunpack.c.h.b16 %v1693
        %v1877 = vunpack.c.l.b16 %v1694
        %v1878 = vunpack.c.h.b16 %v1694
        %v1879 = vunpack.c.l.b16 %v1695
        %v1880 = vunpack.c.h.b16 %v1695
        %v1881 = vunpack.c.l.b16 %v1696
        %v1882 = vunpack.c.h.b16 %v1696
        %v1883 = vunpack.c.l.b16 %v1697
        %v1884 = vunpack.c.h.b16 %v1697
        %v1885 = vunpack.c.l.b16 %v1698
        %v1886 = vunpack.c.h.b16 %v1698
        %v1887 = vunpack.c.l.b16 %v1699
        %v1888 = vunpack.c.h.b16 %v1699
        %v1889 = vunpack.c.l.b16 %v1700
        %v1890 = vunpack.c.h.b16 %v1700
        %v1891 = vunpack.c.l.b16 %v1701
        %v1892 = vunpack.c.h.b16 %v1701
        %v1893 = vunpack.c.l.b16 %v1702
        %v1894 = vunpack.c.h.b16 %v1702
        %v1895 = vunpack.c.l.b16 %v1703
        %v1896 = vunpack.c.h.b16 %v1703
        %v1897 = vunpack.c.l.b16 %v1704
        %v1898 = vunpack.c.h.b16 %v1704
        %v1899 = vunpack.c.l.b16 %v1705
        %v1900 = vunpack.c.h.b16 %v1705
        %v1901 = vunpack.c.l.b16 %v1706
        %v1902 = vunpack.c.h.b16 %v1706
        %v1903 = vunpack.c.l.b16 %v1707
        %v1904 = vunpack.c.h.b16 %v1707
        %v1905 = vunpack.c.l.b16 %v1708
        %v1906 = vunpack.c.h.b16 %v1708
        %v1907 = vunpack.c.l.b16 %v1709
        %v1908 = vunpack.c.h.b16 %v1709
        %v1909 = vunpack.c.l.b16 %v1710
        %v1910 = vunpack.c.h.b16 %v1710
        %v1911 = vunpack.c.l.b16 %v1711
        %v1912 = vunpack.c.h.b16 %v1711
        %v1913 = vunpack.c.l.b16 %v1712
        %v1914 = vunpack.c.h.b16 %v1712
        %v1915 = vunpack.c.l.b16 %v1713
        %v1916 = vunpack.c.h.b16 %v1713
        %v1917 = vunpack.c.l.b16 %v1714
        %v1918 = vunpack.c.h.b16 %v1714
        %v1919 = vunpack.c.l.b16 %v1715
        %v1920 = vunpack.c.h.b16 %v1715
        %v1921 = vunpack.c.l.b16 %v1716
        %v1922 = vunpack.c.h.b16 %v1716
        %v1923 = vunpack.c.l.b16 %v1717
        %v1924 = vunpack.c.h.b16 %v1717
        %v1925 = vunpack.c.l.b16 %v1718
        %v1926 = vunpack.c.h.b16 %v1718
        %v1927 = vunpack.c.l.b16 %v1719
        %v1928 = vunpack.c.h.b16 %v1719
        %v1929 = vunpack.c.l.b16 %v1720
        %v1930 = vunpack.c.h.b16 %v1720
        %v1931 = vunpack.c.l.b16 %v1721
        %v1932 = vunpack.c.h.b16 %v1721
        %v1933 = vunpack.c.l.b16 %v1722
        %v1934 = vunpack.c.h.b16 %v1722
        %v1935 = vunpack.c.l.b16 %v1723
        %v1936 = vunpack.c.h.b16 %v1723
        %v1937 = vunpack.c.l.b16 %v1724
        %v1938 = vunpack.c.h.b16 %v1724
        %v1939 = vpack.c.b16 %v1815, %v1811
        %v1940 = vpack.c.b16 %v1816, %v1812
        %v1941 = vpack.c.b16 %v1817, %v1813
        %v1942 = vpack.c.b16 %v1818, %v1814
        %v1943 = vpack.c.b16 %v1823, %v1819
        %v1944 = vpack.c.b16 %v1824, %v1820
        %v1945 = vpack.c.b16 %v1825, %v1821
        %v1946 = vpack.c.b16 %v1826, %v1822
        %v1947 = vpack.c.b16 %v1831, %v1827
        %v1948 = vpack.c.b16 %v1832, %v1828
        %v1949 = vpack.c.b16 %v1833, %v1829
        %v1950 = vpack.c.b16 %v1834, %v1830
        %v1951 = vpack.c.b16 %v1839, %v1835
        %v1952 = vpack.c.b16 %v1840, %v1836
        %v1953 = vpack.c.b16 %v1841, %v1837
        %v1954 = vpack.c.b16 %v1842, %v1838
        %v1955 = vpack.c.b16 %v1847, %v1843
        %v1956 = vpack.c.b16 %v1848, %v1844
        %v1957 = vpack.c.b16 %v1849, %v1845
        %v1958 = vpack.c.b16 %v1850, %v1846
        %v1959 = vpack.c.b16 %v1855, %v1851
        %v1960 = vpack.c.b16 %v1856, %v1852
        %v1961 = vpack.c.b16 %v1857, %v1853
        %v1962 = vpack.c.b16 %v1858, %v1854
        %v1963 = vpack.c.b16 %v1863, %v1859
        %v1964 = vpack.c.b16 %v1864, %v1860
        %v1965 = vpack.c.b16 %v1865, %v1861
        %v1966 = vpack.c.b16 %v1866, %v1862
        %v1967 = vpack.c.b16 %v1871, %v1867
        %v1968 = vpack.c.b16 %v1872, %v1868
        %v1969 = vpack.c.b16 %v1873, %v1869
        %v1970 = vpack.c.b16 %v1874, %v1870
        %v1971 = vpack.c.b16 %v1879, %v1875
        %v1972 = vpack.c.b16 %v1880, %v1876
        %v1973 = vpack.c.b16 %v1881, %v1877
        %v1974 = vpack.c.b16 %v1882, %v1878
        %v1975 = vpack.c.b16 %v1887, %v1883
        %v1976 = vpack.c.b16 %v1888, %v1884
        %v1977 = vpack.c.b16 %v1889, %v1885
        %v1978 = vpack.c.b16 %v1890, %v1886
        %v1979 = vpack.c.b16 %v1895, %v1891
        %v1980 = vpack.c.b16 %v1896, %v1892
        %v1981 = vpack.c.b16 %v1897, %v1893
        %v1982 = vpack.c.b16 %v1898, %v1894
        %v1983 = vpack.c.b16 %v1903, %v1899
        %v1984 = vpack.c.b16 %v1904, %v1900
        %v1985 = vpack.c.b16 %v1905, %v1901
        %v1986 = vpack.c.b16 %v1906, %v1902
        %v1987 = vpack.c.b16 %v1911, %v1907
        %v1988 = vpack.c.b16 %v1912, %v1908
        %v1989 = vpack.c.b16 %v1913, %v1909
        %v1990 = vpack.c.b16 %v1914, %v1910
        %v1991 = vpack.c.b16 %v1919, %v1915
        %v1992 = vpack.c.b16 %v1920, %v1916
        %v1993 = vpack.c.b16 %v1921, %v1917
        %v1994 = vpack.c.b16 %v1922, %v1918
        %v1995 = vpack.c.b16 %v1927, %v1923
        %v1996 = vpack.c.b16 %v1928, %v1924
        %v1997 = vpack.c.b16 %v1929, %v1925
        %v1998 = vpack.c.b16 %v1930, %v1926
        %v1999 = vpack.c.b16 %v1935, %v1931
        %v2000 = vpack.c.b16 %v1936, %v1932
        %v2001 = vpack.c.b16 %v1937, %v1933
        %v2002 = vpack.c.b16 %v1938, %v1934
        %2067 = vmatprep.subr.bf16.mxu0 %v1940
        %2068 = vmatpush1.bf16.msra.mxu0 %v1939
        %2069 = vmatprep.subr.bf16.mxu0 %v1944
        %2070 = vmatpush1.bf16.msra.mxu0 %v1943
        %2071 = vmatprep.subr.bf16.mxu0 %v1948
        %2072 = vmatpush1.bf16.msra.mxu0 %v1947
        %2073 = vmatprep.subr.bf16.mxu0 %v1952
        %2074 = vmatpush1.bf16.msra.mxu0 %v1951
        %2075 = vmatprep.subr.bf16.mxu0 %v1956
        %2076 = vmatpush1.bf16.msra.mxu0 %v1955
        %2077 = vmatprep.subr.bf16.mxu0 %v1960
        %2078 = vmatpush1.bf16.msra.mxu0 %v1959
        %2079 = vmatprep.subr.bf16.mxu0 %v1964
        %2080 = vmatpush1.bf16.msra.mxu0 %v1963
        %2081 = vmatprep.subr.bf16.mxu0 %v1968
        %2082 = vmatpush1.bf16.msra.mxu0 %v1967
        %2083 = vmatprep.subr.bf16.mxu0 %v1972
        %2084 = vmatpush1.bf16.msra.mxu0 %v1971
        %2085 = vmatprep.subr.bf16.mxu0 %v1976
        %2086 = vmatpush1.bf16.msra.mxu0 %v1975
        %2087 = vmatprep.subr.bf16.mxu0 %v1980
        %2088 = vmatpush1.bf16.msra.mxu0 %v1979
        %2089 = vmatprep.subr.bf16.mxu0 %v1984
        %2090 = vmatpush1.bf16.msra.mxu0 %v1983
        %2091 = vmatprep.subr.bf16.mxu0 %v1988
        %2092 = vmatpush1.bf16.msra.mxu0 %v1987
        %2093 = vmatprep.subr.bf16.mxu0 %v1992
        %2094 = vmatpush1.bf16.msra.mxu0 %v1991
        %2095 = vmatprep.subr.bf16.mxu0 %v1996
        %2096 = vmatpush1.bf16.msra.mxu0 %v1995
        %2097 = vmatprep.subr.bf16.mxu0 %v2000
        %2098 = vmatpush1.bf16.msra.mxu0 %v1999
        %2099 = vmatprep.mubr.bf16.mxu0 %v1598
        %2100 = vmatmul.mubr.bf16.gmra.mrb[0].mxu0 %v1597
        %v2101 = vpop.f32.mrb[0].mxu0
        %v2102 = vadd.f32 %v1730, %v2101
        %v2103 = vpop.f32.mrb[0].mxu0
        %v2104 = vadd.f32 %v1734, %v2103
        %v2105 = vpop.f32.mrb[0].mxu0
        %v2106 = vadd.f32 %v1730, %v2105
        %v2107 = vpop.f32.mrb[0].mxu0
        %v2108 = vadd.f32 %v1734, %v2107
        %2109 = vmatprep.mubr.bf16.mxu0 %v1600
        %2110 = vmatmul.mubr.bf16.gmra.mrb[0].mxu0 %v1599
        %v2111 = vpop.f32.mrb[0].mxu0
        %v2112 = vadd.f32 %v1730, %v2111
        %v2113 = vpop.f32.mrb[0].mxu0
        %v2114 = vadd.f32 %v1734, %v2113
        %v2115 = vpop.f32.mrb[0].mxu0
        %v2116 = vadd.f32 %v1730, %v2115
        %v2117 = vpop.f32.mrb[0].mxu0
        %v2118 = vadd.f32 %v1734, %v2117
        %2119 = vmatprep.mubr.bf16.mxu0 %v1602
        %2120 = vmatmul.mubr.bf16.gmra.mrb[0].mxu0 %v1601
        %v2121 = vpop.f32.mrb[0].mxu0
        %v2122 = vadd.f32 %v1730, %v2121
        %v2123 = vpop.f32.mrb[0].mxu0
        %v2124 = vadd.f32 %v1734, %v2123
        %v2125 = vpop.f32.mrb[0].mxu0
        %v2126 = vadd.f32 %v1730, %v2125
        %v2127 = vpop.f32.mrb[0].mxu0
        %v2128 = vadd.f32 %v1734, %v2127
        %2129 = vmatprep.mubr.bf16.mxu0 %v1604
        %2130 = vmatmul.mubr.bf16.gmra.mrb[0].mxu0 %v1603
        %v2131 = vpop.f32.mrb[0].mxu0
        %v2132 = vadd.f32 %v1730, %v2131
        %v2133 = vpop.f32.mrb[0].mxu0
        %v2134 = vadd.f32 %v1734, %v2133
        %v2135 = vpop.f32.mrb[0].mxu0
        %v2136 = vadd.f32 %v1730, %v2135
        %v2137 = vpop.f32.mrb[0].mxu0
        %v2138 = vadd.f32 %v1734, %v2137
        %2139 = vmatprep.mubr.bf16.mxu0 %v1606
        %2140 = vmatmul.mubr.bf16.gmra.mrb[0].mxu0 %v1605
        %v2141 = vpop.f32.mrb[0].mxu0
        %v2142 = vadd.f32 %v1730, %v2141
        %v2143 = vpop.f32.mrb[0].mxu0
        %v2144 = vadd.f32 %v1734, %v2143
        %v2145 = vpop.f32.mrb[0].mxu0
        %v2146 = vadd.f32 %v1730, %v2145
        %v2147 = vpop.f32.mrb[0].mxu0
        %v2148 = vadd.f32 %v1734, %v2147
        %2149 = vmatprep.mubr.bf16.mxu0 %v1608
        %2150 = vmatmul.mubr.bf16.gmra.mrb[0].mxu0 %v1607
        %v2151 = vpop.f32.mrb[0].mxu0
        %v2152 = vadd.f32 %v1730, %v2151
        %v2153 = vpop.f32.mrb[0].mxu0
        %v2154 = vadd.f32 %v1734, %v2153
        %v2155 = vpop.f32.mrb[0].mxu0
        %v2156 = vadd.f32 %v1730, %v2155
        %v2157 = vpop.f32.mrb[0].mxu0
        %v2158 = vadd.f32 %v1734, %v2157
        %2159 = vmatprep.mubr.bf16.mxu0 %v1610
        %2160 = vmatmul.mubr.bf16.gmra.mrb[0].mxu0 %v1609
        %v2161 = vpop.f32.mrb[0].mxu0
        %v2162 = vadd.f32 %v1730, %v2161
        %v2163 = vpop.f32.mrb[0].mxu0
        %v2164 = vadd.f32 %v1734, %v2163
        %v2165 = vpop.f32.mrb[0].mxu0
        %v2166 = vadd.f32 %v1730, %v2165
        %v2167 = vpop.f32.mrb[0].mxu0
        %v2168 = vadd.f32 %v1734, %v2167
        %2169 = vmatprep.mubr.bf16.mxu0 %v1612
        %2170 = vmatmul.mubr.bf16.gmra.mrb[0].mxu0 %v1611
        %v2171 = vpop.f32.mrb[0].mxu0
        %v2172 = vadd.f32 %v1730, %v2171
        %v2173 = vpop.f32.mrb[0].mxu0
        %v2174 = vadd.f32 %v1734, %v2173
        %v2175 = vpop.f32.mrb[0].mxu0
        %v2176 = vadd.f32 %v1730, %v2175
        %v2177 = vpop.f32.mrb[0].mxu0
        %v2178 = vadd.f32 %v1734, %v2177
        %2179 = vmatprep.mubr.bf16.mxu0 %v1614
        %2180 = vmatmul.mubr.bf16.gmra.mrb[0].mxu0 %v1613
        %v2181 = vpop.f32.mrb[0].mxu0
        %v2182 = vadd.f32 %v1730, %v2181
        %v2183 = vpop.f32.mrb[0].mxu0
        %v2184 = vadd.f32 %v1734, %v2183
        %v2185 = vpop.f32.mrb[0].mxu0
        %v2186 = vadd.f32 %v1730, %v2185
        %v2187 = vpop.f32.mrb[0].mxu0
        %v2188 = vadd.f32 %v1734, %v2187
        %2189 = vmatprep.mubr.bf16.mxu0 %v1616
        %2190 = vmatmul.mubr.bf16.gmra.mrb[0].mxu0 %v1615
        %v2191 = vpop.f32.mrb[0].mxu0
        %v2192 = vadd.f32 %v1730, %v2191
        %v2193 = vpop.f32.mrb[0].mxu0
        %v2194 = vadd.f32 %v1734, %v2193
        %v2195 = vpop.f32.mrb[0].mxu0
        %v2196 = vadd.f32 %v1730, %v2195
        %v2197 = vpop.f32.mrb[0].mxu0
        %v2198 = vadd.f32 %v1734, %v2197
        %2199 = vmatprep.mubr.bf16.mxu0 %v1618
        %2200 = vmatmul.mubr.bf16.gmra.mrb[0].mxu0 %v1617
        %v2201 = vpop.f32.mrb[0].mxu0
        %v2202 = vadd.f32 %v1730, %v2201
        %v2203 = vpop.f32.mrb[0].mxu0
        %v2204 = vadd.f32 %v1734, %v2203
        %v2205 = vpop.f32.mrb[0].mxu0
        %v2206 = vadd.f32 %v1730, %v2205
        %v2207 = vpop.f32.mrb[0].mxu0
        %v2208 = vadd.f32 %v1734, %v2207
        %2209 = vmatprep.mubr.bf16.mxu0 %v1620
        %2210 = vmatmul.mubr.bf16.gmra.mrb[0].mxu0 %v1619
        %v2211 = vpop.f32.mrb[0].mxu0
        %v2212 = vadd.f32 %v1730, %v2211
        %v2213 = vpop.f32.mrb[0].mxu0
        %v2214 = vadd.f32 %v1734, %v2213
        %v2215 = vpop.f32.mrb[0].mxu0
        %v2216 = vadd.f32 %v1730, %v2215
        %v2217 = vpop.f32.mrb[0].mxu0
        %v2218 = vadd.f32 %v1734, %v2217
        %2219 = vmatprep.mubr.bf16.mxu0 %v1622
        %2220 = vmatmul.mubr.bf16.gmra.mrb[0].mxu0 %v1621
        %v2221 = vpop.f32.mrb[0].mxu0
        %v2222 = vadd.f32 %v1730, %v2221
        %v2223 = vpop.f32.mrb[0].mxu0
        %v2224 = vadd.f32 %v1734, %v2223
        %v2225 = vpop.f32.mrb[0].mxu0
        %v2226 = vadd.f32 %v1730, %v2225
        %v2227 = vpop.f32.mrb[0].mxu0
        %v2228 = vadd.f32 %v1734, %v2227
        %2229 = vmatprep.mubr.bf16.mxu0 %v1624
        %2230 = vmatmul.mubr.bf16.gmra.mrb[0].mxu0 %v1623
        %v2231 = vpop.f32.mrb[0].mxu0
        %v2232 = vadd.f32 %v1730, %v2231
        %v2233 = vpop.f32.mrb[0].mxu0
        %v2234 = vadd.f32 %v1734, %v2233
        %v2235 = vpop.f32.mrb[0].mxu0
        %v2236 = vadd.f32 %v1730, %v2235
        %v2237 = vpop.f32.mrb[0].mxu0
        %v2238 = vadd.f32 %v1734, %v2237
        %2239 = vmatprep.mubr.bf16.mxu0 %v1626
        %2240 = vmatmul.mubr.bf16.gmra.mrb[0].mxu0 %v1625
        %v2241 = vpop.f32.mrb[0].mxu0
        %v2242 = vadd.f32 %v1730, %v2241
        %v2243 = vpop.f32.mrb[0].mxu0
        %v2244 = vadd.f32 %v1734, %v2243
        %v2245 = vpop.f32.mrb[0].mxu0
        %v2246 = vadd.f32 %v1730, %v2245
        %v2247 = vpop.f32.mrb[0].mxu0
        %v2248 = vadd.f32 %v1734, %v2247
        %2249 = vmatprep.mubr.bf16.mxu0 %v1628
        %2250 = vmatmul.mubr.bf16.gmra.mrb[0].mxu0 %v1627
        %v2251 = vpop.f32.mrb[0].mxu0
        %v2252 = vadd.f32 %v1730, %v2251
        %v2253 = vpop.f32.mrb[0].mxu0
        %v2254 = vadd.f32 %v1734, %v2253
        %v2255 = vpop.f32.mrb[0].mxu0
        %v2256 = vadd.f32 %v1730, %v2255
        %v2257 = vpop.f32.mrb[0].mxu0
        %v2258 = vadd.f32 %v1734, %v2257
        %2259 = vmatprep.mubr.bf16.mxu0 %v1630
        %2260 = vmatmul.mubr.bf16.gmra.mrb[0].mxu0 %v1629
        %v2261 = vpop.f32.mrb[0].mxu0
        %v2262 = vadd.f32 %v1730, %v2261
        %v2263 = vpop.f32.mrb[0].mxu0
        %v2264 = vadd.f32 %v1734, %v2263
        %v2265 = vpop.f32.mrb[0].mxu0
        %v2266 = vadd.f32 %v1730, %v2265
        %v2267 = vpop.f32.mrb[0].mxu0
        %v2268 = vadd.f32 %v1734, %v2267
        %2269 = vmatprep.mubr.bf16.mxu0 %v1632
        %2270 = vmatmul.mubr.bf16.gmra.mrb[0].mxu0 %v1631
        %v2271 = vpop.f32.mrb[0].mxu0
        %v2272 = vadd.f32 %v1730, %v2271
        %v2273 = vpop.f32.mrb[0].mxu0
        %v2274 = vadd.f32 %v1734, %v2273
        %v2275 = vpop.f32.mrb[0].mxu0
        %v2276 = vadd.f32 %v1730, %v2275
        %v2277 = vpop.f32.mrb[0].mxu0
        %v2278 = vadd.f32 %v1734, %v2277
        %2279 = vmatprep.mubr.bf16.mxu0 %v1634
        %2280 = vmatmul.mubr.bf16.gmra.mrb[0].mxu0 %v1633
        %v2281 = vpop.f32.mrb[0].mxu0
        %v2282 = vadd.f32 %v1730, %v2281
        %v2283 = vpop.f32.mrb[0].mxu0
        %v2284 = vadd.f32 %v1734, %v2283
        %v2285 = vpop.f32.mrb[0].mxu0
        %v2286 = vadd.f32 %v1730, %v2285
        %v2287 = vpop.f32.mrb[0].mxu0
        %v2288 = vadd.f32 %v1734, %v2287
        %2289 = vmatprep.mubr.bf16.mxu0 %v1636
        %2290 = vmatmul.mubr.bf16.gmra.mrb[0].mxu0 %v1635
        %v2291 = vpop.f32.mrb[0].mxu0
        %v2292 = vadd.f32 %v1730, %v2291
        %v2293 = vpop.f32.mrb[0].mxu0
        %v2294 = vadd.f32 %v1734, %v2293
        %v2295 = vpop.f32.mrb[0].mxu0
        %v2296 = vadd.f32 %v1730, %v2295
        %v2297 = vpop.f32.mrb[0].mxu0
        %v2298 = vadd.f32 %v1734, %v2297
        %2299 = vmatprep.mubr.bf16.mxu0 %v1638
        %2300 = vmatmul.mubr.bf16.gmra.mrb[0].mxu0 %v1637
        %v2301 = vpop.f32.mrb[0].mxu0
        %v2302 = vadd.f32 %v1730, %v2301
        %v2303 = vpop.f32.mrb[0].mxu0
        %v2304 = vadd.f32 %v1734, %v2303
        %v2305 = vpop.f32.mrb[0].mxu0
        %v2306 = vadd.f32 %v1730, %v2305
        %v2307 = vpop.f32.mrb[0].mxu0
        %v2308 = vadd.f32 %v1734, %v2307
        %2309 = vmatprep.mubr.bf16.mxu0 %v1640
        %2310 = vmatmul.mubr.bf16.gmra.mrb[0].mxu0 %v1639
        %v2311 = vpop.f32.mrb[0].mxu0
        %v2312 = vadd.f32 %v1730, %v2311
        %v2313 = vpop.f32.mrb[0].mxu0
        %v2314 = vadd.f32 %v1734, %v2313
        %v2315 = vpop.f32.mrb[0].mxu0
        %v2316 = vadd.f32 %v1730, %v2315
        %v2317 = vpop.f32.mrb[0].mxu0
        %v2318 = vadd.f32 %v1734, %v2317
        %2319 = vmatprep.mubr.bf16.mxu0 %v1642
        %2320 = vmatmul.mubr.bf16.gmra.mrb[0].mxu0 %v1641
        %v2321 = vpop.f32.mrb[0].mxu0
        %v2322 = vadd.f32 %v1730, %v2321
        %v2323 = vpop.f32.mrb[0].mxu0
        %v2324 = vadd.f32 %v1734, %v2323
        %v2325 = vpop.f32.mrb[0].mxu0
        %v2326 = vadd.f32 %v1730, %v2325
        %v2327 = vpop.f32.mrb[0].mxu0
        %v2328 = vadd.f32 %v1734, %v2327
        %2329 = vmatprep.mubr.bf16.mxu0 %v1644
        %2330 = vmatmul.mubr.bf16.gmra.mrb[0].mxu0 %v1643
        %v2331 = vpop.f32.mrb[0].mxu0
        %v2332 = vadd.f32 %v1730, %v2331
        %v2333 = vpop.f32.mrb[0].mxu0
        %v2334 = vadd.f32 %v1734, %v2333
        %v2335 = vpop.f32.mrb[0].mxu0
        %v2336 = vadd.f32 %v1730, %v2335
        %v2337 = vpop.f32.mrb[0].mxu0
        %v2338 = vadd.f32 %v1734, %v2337
        %2339 = vmatprep.mubr.bf16.mxu0 %v1646
        %2340 = vmatmul.mubr.bf16.gmra.mrb[0].mxu0 %v1645
        %v2341 = vpop.f32.mrb[0].mxu0
        %v2342 = vadd.f32 %v1730, %v2341
        %v2343 = vpop.f32.mrb[0].mxu0
        %v2344 = vadd.f32 %v1734, %v2343
        %v2345 = vpop.f32.mrb[0].mxu0
        %v2346 = vadd.f32 %v1730, %v2345
        %v2347 = vpop.f32.mrb[0].mxu0
        %v2348 = vadd.f32 %v1734, %v2347
        %2349 = vmatprep.mubr.bf16.mxu0 %v1648
        %2350 = vmatmul.mubr.bf16.gmra.mrb[0].mxu0 %v1647
        %v2351 = vpop.f32.mrb[0].mxu0
        %v2352 = vadd.f32 %v1730, %v2351
        %v2353 = vpop.f32.mrb[0].mxu0
        %v2354 = vadd.f32 %v1734, %v2353
        %v2355 = vpop.f32.mrb[0].mxu0
        %v2356 = vadd.f32 %v1730, %v2355
        %v2357 = vpop.f32.mrb[0].mxu0
        %v2358 = vadd.f32 %v1734, %v2357
        %2359 = vmatprep.mubr.bf16.mxu0 %v1650
        %2360 = vmatmul.mubr.bf16.gmra.mrb[0].mxu0 %v1649
        %v2361 = vpop.f32.mrb[0].mxu0
        %v2362 = vadd.f32 %v1730, %v2361
        %v2363 = vpop.f32.mrb[0].mxu0
        %v2364 = vadd.f32 %v1734, %v2363
        %v2365 = vpop.f32.mrb[0].mxu0
        %v2366 = vadd.f32 %v1730, %v2365
        %v2367 = vpop.f32.mrb[0].mxu0
        %v2368 = vadd.f32 %v1734, %v2367
        %2369 = vmatprep.mubr.bf16.mxu0 %v1652
        %2370 = vmatmul.mubr.bf16.gmra.mrb[0].mxu0 %v1651
        %v2371 = vpop.f32.mrb[0].mxu0
        %v2372 = vadd.f32 %v1730, %v2371
        %v2373 = vpop.f32.mrb[0].mxu0
        %v2374 = vadd.f32 %v1734, %v2373
        %v2375 = vpop.f32.mrb[0].mxu0
        %v2376 = vadd.f32 %v1730, %v2375
        %v2377 = vpop.f32.mrb[0].mxu0
        %v2378 = vadd.f32 %v1734, %v2377
        %2379 = vmatprep.mubr.bf16.mxu0 %v1654
        %2380 = vmatmul.mubr.bf16.gmra.mrb[0].mxu0 %v1653
        %v2381 = vpop.f32.mrb[0].mxu0
        %v2382 = vadd.f32 %v1730, %v2381
        %v2383 = vpop.f32.mrb[0].mxu0
        %v2384 = vadd.f32 %v1734, %v2383
        %v2385 = vpop.f32.mrb[0].mxu0
        %v2386 = vadd.f32 %v1730, %v2385
        %v2387 = vpop.f32.mrb[0].mxu0
        %v2388 = vadd.f32 %v1734, %v2387
        %2389 = vmatprep.mubr.bf16.mxu0 %v1656
        %2390 = vmatmul.mubr.bf16.gmra.mrb[0].mxu0 %v1655
        %v2391 = vpop.f32.mrb[0].mxu0
        %v2392 = vadd.f32 %v1730, %v2391
        %v2393 = vpop.f32.mrb[0].mxu0
        %v2394 = vadd.f32 %v1734, %v2393
        %v2395 = vpop.f32.mrb[0].mxu0
        %v2396 = vadd.f32 %v1730, %v2395
        %v2397 = vpop.f32.mrb[0].mxu0
        %v2398 = vadd.f32 %v1734, %v2397
        %2399 = vmatprep.mubr.bf16.mxu0 %v1658
        %2400 = vmatmul.mubr.bf16.gmra.mrb[0].mxu0 %v1657
        %v2401 = vpop.f32.mrb[0].mxu0
        %v2402 = vadd.f32 %v1730, %v2401
        %v2403 = vpop.f32.mrb[0].mxu0
        %v2404 = vadd.f32 %v1734, %v2403
        %v2405 = vpop.f32.mrb[0].mxu0
        %v2406 = vadd.f32 %v1730, %v2405
        %v2407 = vpop.f32.mrb[0].mxu0
        %v2408 = vadd.f32 %v1734, %v2407
        %2409 = vmatprep.mubr.bf16.mxu0 %v1660
        %2410 = vmatmul.mubr.bf16.gmra.mrb[0].mxu0 %v1659
        %v2411 = vpop.f32.mrb[0].mxu0
        %v2412 = vadd.f32 %v1730, %v2411
        %v2413 = vpop.f32.mrb[0].mxu0
        %v2414 = vadd.f32 %v1734, %v2413
        %v2415 = vpop.f32.mrb[0].mxu0
        %v2416 = vadd.f32 %v1730, %v2415
        %v2417 = vpop.f32.mrb[0].mxu0
        %v2418 = vadd.f32 %v1734, %v2417
        %2419 = vdwg.mxu0
        %2420 = vmatprep.subr.bf16.mxu0 %v1942
        %2421 = vmatpush1.bf16.msra.mxu0 %v1941
        %2422 = vmatprep.subr.bf16.mxu0 %v1946
        %2423 = vmatpush1.bf16.msra.mxu0 %v1945
        %2424 = vmatprep.subr.bf16.mxu0 %v1950
        %2425 = vmatpush1.bf16.msra.mxu0 %v1949
        %2426 = vmatprep.subr.bf16.mxu0 %v1954
        %2427 = vmatpush1.bf16.msra.mxu0 %v1953
        %2428 = vmatprep.subr.bf16.mxu0 %v1958
        %2429 = vmatpush1.bf16.msra.mxu0 %v1957
        %2430 = vmatprep.subr.bf16.mxu0 %v1962
        %2431 = vmatpush1.bf16.msra.mxu0 %v1961
        %2432 = vmatprep.subr.bf16.mxu0 %v1966
        %2433 = vmatpush1.bf16.msra.mxu0 %v1965
        %2434 = vmatprep.subr.bf16.mxu0 %v1970
        %2435 = vmatpush1.bf16.msra.mxu0 %v1969
        %2436 = vmatprep.subr.bf16.mxu0 %v1974
        %2437 = vmatpush1.bf16.msra.mxu0 %v1973
        %2438 = vmatprep.subr.bf16.mxu0 %v1978
        %2439 = vmatpush1.bf16.msra.mxu0 %v1977
        %2440 = vmatprep.subr.bf16.mxu0 %v1982
        %2441 = vmatpush1.bf16.msra.mxu0 %v1981
        %2442 = vmatprep.subr.bf16.mxu0 %v1986
        %2443 = vmatpush1.bf16.msra.mxu0 %v1985
        %2444 = vmatprep.subr.bf16.mxu0 %v1990
        %2445 = vmatpush1.bf16.msra.mxu0 %v1989
        %2446 = vmatprep.subr.bf16.mxu0 %v1994
        %2447 = vmatpush1.bf16.msra.mxu0 %v1993
        %2448 = vmatprep.subr.bf16.mxu0 %v1998
        %2449 = vmatpush1.bf16.msra.mxu0 %v1997
        %2450 = vmatprep.subr.bf16.mxu0 %v2002
        %2451 = vmatpush1.bf16.msra.mxu0 %v2001
        %2452 = vmatprep.mubr.bf16.mxu0 %v1598
        %2453 = vmatmul.mubr.bf16.gmra.mrb[0].mxu0 %v1597
        %v2454 = vpop.f32.mrb[0].mxu0
        %v2455 = vadd.f32 %v1738, %v2454
        %v2456 = vpop.f32.mrb[0].mxu0
        %v2457 = vadd.f32 %v1742, %v2456
        %v2458 = vpop.f32.mrb[0].mxu0
        %v2459 = vadd.f32 %v1738, %v2458
        %v2460 = vpop.f32.mrb[0].mxu0
        %v2461 = vadd.f32 %v1742, %v2460
        %2462 = vmatprep.mubr.bf16.mxu0 %v1600
        %2463 = vmatmul.mubr.bf16.gmra.mrb[0].mxu0 %v1599
        %v2464 = vpop.f32.mrb[0].mxu0
        %v2465 = vadd.f32 %v1738, %v2464
        %v2466 = vpop.f32.mrb[0].mxu0
        %v2467 = vadd.f32 %v1742, %v2466
        %v2468 = vpop.f32.mrb[0].mxu0
        %v2469 = vadd.f32 %v1738, %v2468
        %v2470 = vpop.f32.mrb[0].mxu0
        %v2471 = vadd.f32 %v1742, %v2470
        %2472 = vmatprep.mubr.bf16.mxu0 %v1602
        %2473 = vmatmul.mubr.bf16.gmra.mrb[0].mxu0 %v1601
        %v2474 = vpop.f32.mrb[0].mxu0
        %v2475 = vadd.f32 %v1738, %v2474
        %v2476 = vpop.f32.mrb[0].mxu0
        %v2477 = vadd.f32 %v1742, %v2476
        %v2478 = vpop.f32.mrb[0].mxu0
        %v2479 = vadd.f32 %v1738, %v2478
        %v2480 = vpop.f32.mrb[0].mxu0
        %v2481 = vadd.f32 %v1742, %v2480
        %2482 = vmatprep.mubr.bf16.mxu0 %v1604
        %2483 = vmatmul.mubr.bf16.gmra.mrb[0].mxu0 %v1603
        %v2484 = vpop.f32.mrb[0].mxu0
        %v2485 = vadd.f32 %v1738, %v2484
        %v2486 = vpop.f32.mrb[0].mxu0
        %v2487 = vadd.f32 %v1742, %v2486
        %v2488 = vpop.f32.mrb[0].mxu0
        %v2489 = vadd.f32 %v1738, %v2488
        %v2490 = vpop.f32.mrb[0].mxu0
        %v2491 = vadd.f32 %v1742, %v2490
        %2492 = vmatprep.mubr.bf16.mxu0 %v1606
        %2493 = vmatmul.mubr.bf16.gmra.mrb[0].mxu0 %v1605
        %v2494 = vpop.f32.mrb[0].mxu0
        %v2495 = vadd.f32 %v1738, %v2494
        %v2496 = vpop.f32.mrb[0].mxu0
        %v2497 = vadd.f32 %v1742, %v2496
        %v2498 = vpop.f32.mrb[0].mxu0
        %v2499 = vadd.f32 %v1738, %v2498
        %v2500 = vpop.f32.mrb[0].mxu0
        %v2501 = vadd.f32 %v1742, %v2500
        %2502 = vmatprep.mubr.bf16.mxu0 %v1608
        %2503 = vmatmul.mubr.bf16.gmra.mrb[0].mxu0 %v1607
        %v2504 = vpop.f32.mrb[0].mxu0
        %v2505 = vadd.f32 %v1738, %v2504
        %v2506 = vpop.f32.mrb[0].mxu0
        %v2507 = vadd.f32 %v1742, %v2506
        %v2508 = vpop.f32.mrb[0].mxu0
        %v2509 = vadd.f32 %v1738, %v2508
        %v2510 = vpop.f32.mrb[0].mxu0
        %v2511 = vadd.f32 %v1742, %v2510
        %2512 = vmatprep.mubr.bf16.mxu0 %v1610
        %2513 = vmatmul.mubr.bf16.gmra.mrb[0].mxu0 %v1609
        %v2514 = vpop.f32.mrb[0].mxu0
        %v2515 = vadd.f32 %v1738, %v2514
        %v2516 = vpop.f32.mrb[0].mxu0
        %v2517 = vadd.f32 %v1742, %v2516
        %v2518 = vpop.f32.mrb[0].mxu0
        %v2519 = vadd.f32 %v1738, %v2518
        %v2520 = vpop.f32.mrb[0].mxu0
        %v2521 = vadd.f32 %v1742, %v2520
        %2522 = vmatprep.mubr.bf16.mxu0 %v1612
        %2523 = vmatmul.mubr.bf16.gmra.mrb[0].mxu0 %v1611
        %v2524 = vpop.f32.mrb[0].mxu0
        %v2525 = vadd.f32 %v1738, %v2524
        %v2526 = vpop.f32.mrb[0].mxu0
        %v2527 = vadd.f32 %v1742, %v2526
        %v2528 = vpop.f32.mrb[0].mxu0
        %v2529 = vadd.f32 %v1738, %v2528
        %v2530 = vpop.f32.mrb[0].mxu0
        %v2531 = vadd.f32 %v1742, %v2530
        %2532 = vmatprep.mubr.bf16.mxu0 %v1614
        %2533 = vmatmul.mubr.bf16.gmra.mrb[0].mxu0 %v1613
        %v2534 = vpop.f32.mrb[0].mxu0
        %v2535 = vadd.f32 %v1738, %v2534
        %v2536 = vpop.f32.mrb[0].mxu0
        %v2537 = vadd.f32 %v1742, %v2536
        %v2538 = vpop.f32.mrb[0].mxu0
        %v2539 = vadd.f32 %v1738, %v2538
        %v2540 = vpop.f32.mrb[0].mxu0
        %v2541 = vadd.f32 %v1742, %v2540
        %2542 = vmatprep.mubr.bf16.mxu0 %v1616
        %2543 = vmatmul.mubr.bf16.gmra.mrb[0].mxu0 %v1615
        %v2544 = vpop.f32.mrb[0].mxu0
        %v2545 = vadd.f32 %v1738, %v2544
        %v2546 = vpop.f32.mrb[0].mxu0
        %v2547 = vadd.f32 %v1742, %v2546
        %v2548 = vpop.f32.mrb[0].mxu0
        %v2549 = vadd.f32 %v1738, %v2548
        %v2550 = vpop.f32.mrb[0].mxu0
        %v2551 = vadd.f32 %v1742, %v2550
        %2552 = vmatprep.mubr.bf16.mxu0 %v1618
        %2553 = vmatmul.mubr.bf16.gmra.mrb[0].mxu0 %v1617
        %v2554 = vpop.f32.mrb[0].mxu0
        %v2555 = vadd.f32 %v1738, %v2554
        %v2556 = vpop.f32.mrb[0].mxu0
        %v2557 = vadd.f32 %v1742, %v2556
        %v2558 = vpop.f32.mrb[0].mxu0
        %v2559 = vadd.f32 %v1738, %v2558
        %v2560 = vpop.f32.mrb[0].mxu0
        %v2561 = vadd.f32 %v1742, %v2560
        %2562 = vmatprep.mubr.bf16.mxu0 %v1620
        %2563 = vmatmul.mubr.bf16.gmra.mrb[0].mxu0 %v1619
        %v2564 = vpop.f32.mrb[0].mxu0
        %v2565 = vadd.f32 %v1738, %v2564
        %v2566 = vpop.f32.mrb[0].mxu0
        %v2567 = vadd.f32 %v1742, %v2566
        %v2568 = vpop.f32.mrb[0].mxu0
        %v2569 = vadd.f32 %v1738, %v2568
        %v2570 = vpop.f32.mrb[0].mxu0
        %v2571 = vadd.f32 %v1742, %v2570
        %2572 = vmatprep.mubr.bf16.mxu0 %v1622
        %2573 = vmatmul.mubr.bf16.gmra.mrb[0].mxu0 %v1621
        %v2574 = vpop.f32.mrb[0].mxu0
        %v2575 = vadd.f32 %v1738, %v2574
        %v2576 = vpop.f32.mrb[0].mxu0
        %v2577 = vadd.f32 %v1742, %v2576
        %v2578 = vpop.f32.mrb[0].mxu0
        %v2579 = vadd.f32 %v1738, %v2578
        %v2580 = vpop.f32.mrb[0].mxu0
        %v2581 = vadd.f32 %v1742, %v2580
        %2582 = vmatprep.mubr.bf16.mxu0 %v1624
        %2583 = vmatmul.mubr.bf16.gmra.mrb[0].mxu0 %v1623
        %v2584 = vpop.f32.mrb[0].mxu0
        %v2585 = vadd.f32 %v1738, %v2584
        %v2586 = vpop.f32.mrb[0].mxu0
        %v2587 = vadd.f32 %v1742, %v2586
        %v2588 = vpop.f32.mrb[0].mxu0
        %v2589 = vadd.f32 %v1738, %v2588
        %v2590 = vpop.f32.mrb[0].mxu0
        %v2591 = vadd.f32 %v1742, %v2590
        %2592 = vmatprep.mubr.bf16.mxu0 %v1626
        %2593 = vmatmul.mubr.bf16.gmra.mrb[0].mxu0 %v1625
        %v2594 = vpop.f32.mrb[0].mxu0
        %v2595 = vadd.f32 %v1738, %v2594
        %v2596 = vpop.f32.mrb[0].mxu0
        %v2597 = vadd.f32 %v1742, %v2596
        %v2598 = vpop.f32.mrb[0].mxu0
        %v2599 = vadd.f32 %v1738, %v2598
        %v2600 = vpop.f32.mrb[0].mxu0
        %v2601 = vadd.f32 %v1742, %v2600
        %2602 = vmatprep.mubr.bf16.mxu0 %v1628
        %2603 = vmatmul.mubr.bf16.gmra.mrb[0].mxu0 %v1627
        %v2604 = vpop.f32.mrb[0].mxu0
        %v2605 = vadd.f32 %v1738, %v2604
        %v2606 = vpop.f32.mrb[0].mxu0
        %v2607 = vadd.f32 %v1742, %v2606
        %v2608 = vpop.f32.mrb[0].mxu0
        %v2609 = vadd.f32 %v1738, %v2608
        %v2610 = vpop.f32.mrb[0].mxu0
        %v2611 = vadd.f32 %v1742, %v2610
        %2612 = vmatprep.mubr.bf16.mxu0 %v1630
        %2613 = vmatmul.mubr.bf16.gmra.mrb[0].mxu0 %v1629
        %v2614 = vpop.f32.mrb[0].mxu0
        %v2615 = vadd.f32 %v1738, %v2614
        %v2616 = vpop.f32.mrb[0].mxu0
        %v2617 = vadd.f32 %v1742, %v2616
        %v2618 = vpop.f32.mrb[0].mxu0
        %v2619 = vadd.f32 %v1738, %v2618
        %v2620 = vpop.f32.mrb[0].mxu0
        %v2621 = vadd.f32 %v1742, %v2620
        %2622 = vmatprep.mubr.bf16.mxu0 %v1632
        %2623 = vmatmul.mubr.bf16.gmra.mrb[0].mxu0 %v1631
        %v2624 = vpop.f32.mrb[0].mxu0
        %v2625 = vadd.f32 %v1738, %v2624
        %v2626 = vpop.f32.mrb[0].mxu0
        %v2627 = vadd.f32 %v1742, %v2626
        %v2628 = vpop.f32.mrb[0].mxu0
        %v2629 = vadd.f32 %v1738, %v2628
        %v2630 = vpop.f32.mrb[0].mxu0
        %v2631 = vadd.f32 %v1742, %v2630
        %2632 = vmatprep.mubr.bf16.mxu0 %v1634
        %2633 = vmatmul.mubr.bf16.gmra.mrb[0].mxu0 %v1633
        %v2634 = vpop.f32.mrb[0].mxu0
        %v2635 = vadd.f32 %v1738, %v2634
        %v2636 = vpop.f32.mrb[0].mxu0
        %v2637 = vadd.f32 %v1742, %v2636
        %v2638 = vpop.f32.mrb[0].mxu0
        %v2639 = vadd.f32 %v1738, %v2638
        %v2640 = vpop.f32.mrb[0].mxu0
        %v2641 = vadd.f32 %v1742, %v2640
        %2642 = vmatprep.mubr.bf16.mxu0 %v1636
        %2643 = vmatmul.mubr.bf16.gmra.mrb[0].mxu0 %v1635
        %v2644 = vpop.f32.mrb[0].mxu0
        %v2645 = vadd.f32 %v1738, %v2644
        %v2646 = vpop.f32.mrb[0].mxu0
        %v2647 = vadd.f32 %v1742, %v2646
        %v2648 = vpop.f32.mrb[0].mxu0
        %v2649 = vadd.f32 %v1738, %v2648
        %v2650 = vpop.f32.mrb[0].mxu0
        %v2651 = vadd.f32 %v1742, %v2650
        %2652 = vmatprep.mubr.bf16.mxu0 %v1638
        %2653 = vmatmul.mubr.bf16.gmra.mrb[0].mxu0 %v1637
        %v2654 = vpop.f32.mrb[0].mxu0
        %v2655 = vadd.f32 %v1738, %v2654
        %v2656 = vpop.f32.mrb[0].mxu0
        %v2657 = vadd.f32 %v1742, %v2656
        %v2658 = vpop.f32.mrb[0].mxu0
        %v2659 = vadd.f32 %v1738, %v2658
        %v2660 = vpop.f32.mrb[0].mxu0
        %v2661 = vadd.f32 %v1742, %v2660
        %2662 = vmatprep.mubr.bf16.mxu0 %v1640
        %2663 = vmatmul.mubr.bf16.gmra.mrb[0].mxu0 %v1639
        %v2664 = vpop.f32.mrb[0].mxu0
        %v2665 = vadd.f32 %v1738, %v2664
        %v2666 = vpop.f32.mrb[0].mxu0
        %v2667 = vadd.f32 %v1742, %v2666
        %v2668 = vpop.f32.mrb[0].mxu0
        %v2669 = vadd.f32 %v1738, %v2668
        %v2670 = vpop.f32.mrb[0].mxu0
        %v2671 = vadd.f32 %v1742, %v2670
        %2672 = vmatprep.mubr.bf16.mxu0 %v1642
        %2673 = vmatmul.mubr.bf16.gmra.mrb[0].mxu0 %v1641
        %v2674 = vpop.f32.mrb[0].mxu0
        %v2675 = vadd.f32 %v1738, %v2674
        %v2676 = vpop.f32.mrb[0].mxu0
        %v2677 = vadd.f32 %v1742, %v2676
        %v2678 = vpop.f32.mrb[0].mxu0
        %v2679 = vadd.f32 %v1738, %v2678
        %v2680 = vpop.f32.mrb[0].mxu0
        %v2681 = vadd.f32 %v1742, %v2680
        %2682 = vmatprep.mubr.bf16.mxu0 %v1644
        %2683 = vmatmul.mubr.bf16.gmra.mrb[0].mxu0 %v1643
        %v2684 = vpop.f32.mrb[0].mxu0
        %v2685 = vadd.f32 %v1738, %v2684
        %v2686 = vpop.f32.mrb[0].mxu0
        %v2687 = vadd.f32 %v1742, %v2686
        %v2688 = vpop.f32.mrb[0].mxu0
        %v2689 = vadd.f32 %v1738, %v2688
        %v2690 = vpop.f32.mrb[0].mxu0
        %v2691 = vadd.f32 %v1742, %v2690
        %2692 = vmatprep.mubr.bf16.mxu0 %v1646
        %2693 = vmatmul.mubr.bf16.gmra.mrb[0].mxu0 %v1645
        %v2694 = vpop.f32.mrb[0].mxu0
        %v2695 = vadd.f32 %v1738, %v2694
        %v2696 = vpop.f32.mrb[0].mxu0
        %v2697 = vadd.f32 %v1742, %v2696
        %v2698 = vpop.f32.mrb[0].mxu0
        %v2699 = vadd.f32 %v1738, %v2698
        %v2700 = vpop.f32.mrb[0].mxu0
        %v2701 = vadd.f32 %v1742, %v2700
        %2702 = vmatprep.mubr.bf16.mxu0 %v1648
        %2703 = vmatmul.mubr.bf16.gmra.mrb[0].mxu0 %v1647
        %v2704 = vpop.f32.mrb[0].mxu0
        %v2705 = vadd.f32 %v1738, %v2704
        %v2706 = vpop.f32.mrb[0].mxu0
        %v2707 = vadd.f32 %v1742, %v2706
        %v2708 = vpop.f32.mrb[0].mxu0
        %v2709 = vadd.f32 %v1738, %v2708
        %v2710 = vpop.f32.mrb[0].mxu0
        %v2711 = vadd.f32 %v1742, %v2710
        %2712 = vmatprep.mubr.bf16.mxu0 %v1650
        %2713 = vmatmul.mubr.bf16.gmra.mrb[0].mxu0 %v1649
        %v2714 = vpop.f32.mrb[0].mxu0
        %v2715 = vadd.f32 %v1738, %v2714
        %v2716 = vpop.f32.mrb[0].mxu0
        %v2717 = vadd.f32 %v1742, %v2716
        %v2718 = vpop.f32.mrb[0].mxu0
        %v2719 = vadd.f32 %v1738, %v2718
        %v2720 = vpop.f32.mrb[0].mxu0
        %v2721 = vadd.f32 %v1742, %v2720
        %2722 = vmatprep.mubr.bf16.mxu0 %v1652
        %2723 = vmatmul.mubr.bf16.gmra.mrb[0].mxu0 %v1651
        %v2724 = vpop.f32.mrb[0].mxu0
        %v2725 = vadd.f32 %v1738, %v2724
        %v2726 = vpop.f32.mrb[0].mxu0
        %v2727 = vadd.f32 %v1742, %v2726
        %v2728 = vpop.f32.mrb[0].mxu0
        %v2729 = vadd.f32 %v1738, %v2728
        %v2730 = vpop.f32.mrb[0].mxu0
        %v2731 = vadd.f32 %v1742, %v2730
        %2732 = vmatprep.mubr.bf16.mxu0 %v1654
        %2733 = vmatmul.mubr.bf16.gmra.mrb[0].mxu0 %v1653
        %v2734 = vpop.f32.mrb[0].mxu0
        %v2735 = vadd.f32 %v1738, %v2734
        %v2736 = vpop.f32.mrb[0].mxu0
        %v2737 = vadd.f32 %v1742, %v2736
        %v2738 = vpop.f32.mrb[0].mxu0
        %v2739 = vadd.f32 %v1738, %v2738
        %v2740 = vpop.f32.mrb[0].mxu0
        %v2741 = vadd.f32 %v1742, %v2740
        %2742 = vmatprep.mubr.bf16.mxu0 %v1656
        %2743 = vmatmul.mubr.bf16.gmra.mrb[0].mxu0 %v1655
        %v2744 = vpop.f32.mrb[0].mxu0
        %v2745 = vadd.f32 %v1738, %v2744
        %v2746 = vpop.f32.mrb[0].mxu0
        %v2747 = vadd.f32 %v1742, %v2746
        %v2748 = vpop.f32.mrb[0].mxu0
        %v2749 = vadd.f32 %v1738, %v2748
        %v2750 = vpop.f32.mrb[0].mxu0
        %v2751 = vadd.f32 %v1742, %v2750
        %2752 = vmatprep.mubr.bf16.mxu0 %v1658
        %2753 = vmatmul.mubr.bf16.gmra.mrb[0].mxu0 %v1657
        %v2754 = vpop.f32.mrb[0].mxu0
        %v2755 = vadd.f32 %v1738, %v2754
        %v2756 = vpop.f32.mrb[0].mxu0
        %v2757 = vadd.f32 %v1742, %v2756
        %v2758 = vpop.f32.mrb[0].mxu0
        %v2759 = vadd.f32 %v1738, %v2758
        %v2760 = vpop.f32.mrb[0].mxu0
        %v2761 = vadd.f32 %v1742, %v2760
        %2762 = vmatprep.mubr.bf16.mxu0 %v1660
        %2763 = vmatmul.mubr.bf16.gmra.mrb[0].mxu0 %v1659
        %v2764 = vpop.f32.mrb[0].mxu0
        %v2765 = vadd.f32 %v1738, %v2764
        %v2766 = vpop.f32.mrb[0].mxu0
        %v2767 = vadd.f32 %v1742, %v2766
        %v2768 = vpop.f32.mrb[0].mxu0
        %v2769 = vadd.f32 %v1738, %v2768
        %v2770 = vpop.f32.mrb[0].mxu0
        %v2771 = vadd.f32 %v1742, %v2770
        %2772 = vdwg.mxu0
        %v2773 = vmax.f32 %v2102, 0.0
        %v2774 = vmax.f32 %v2104, 0.0
        %v2775 = vmax.f32 %v2455, 0.0
        %v2776 = vmax.f32 %v2457, 0.0
        %v2777 = vmax.f32 %v2106, 0.0
        %v2778 = vmax.f32 %v2108, 0.0
        %v2779 = vmax.f32 %v2459, 0.0
        %v2780 = vmax.f32 %v2461, 0.0
        %v2781 = vmax.f32 %v2112, 0.0
        %v2782 = vmax.f32 %v2114, 0.0
        %v2783 = vmax.f32 %v2465, 0.0
        %v2784 = vmax.f32 %v2467, 0.0
        %v2785 = vmax.f32 %v2116, 0.0
        %v2786 = vmax.f32 %v2118, 0.0
        %v2787 = vmax.f32 %v2469, 0.0
        %v2788 = vmax.f32 %v2471, 0.0
        %v2789 = vmax.f32 %v2122, 0.0
        %v2790 = vmax.f32 %v2124, 0.0
        %v2791 = vmax.f32 %v2475, 0.0
        %v2792 = vmax.f32 %v2477, 0.0
        %v2793 = vmax.f32 %v2126, 0.0
        %v2794 = vmax.f32 %v2128, 0.0
        %v2795 = vmax.f32 %v2479, 0.0
        %v2796 = vmax.f32 %v2481, 0.0
        %v2797 = vmax.f32 %v2132, 0.0
        %v2798 = vmax.f32 %v2134, 0.0
        %v2799 = vmax.f32 %v2485, 0.0
        %v2800 = vmax.f32 %v2487, 0.0
        %v2801 = vmax.f32 %v2136, 0.0
        %v2802 = vmax.f32 %v2138, 0.0
        %v2803 = vmax.f32 %v2489, 0.0
        %v2804 = vmax.f32 %v2491, 0.0
        %v2805 = vmax.f32 %v2142, 0.0
        %v2806 = vmax.f32 %v2144, 0.0
        %v2807 = vmax.f32 %v2495, 0.0
        %v2808 = vmax.f32 %v2497, 0.0
        %v2809 = vmax.f32 %v2146, 0.0
        %v2810 = vmax.f32 %v2148, 0.0
        %v2811 = vmax.f32 %v2499, 0.0
        %v2812 = vmax.f32 %v2501, 0.0
        %v2813 = vmax.f32 %v2152, 0.0
        %v2814 = vmax.f32 %v2154, 0.0
        %v2815 = vmax.f32 %v2505, 0.0
        %v2816 = vmax.f32 %v2507, 0.0
        %v2817 = vmax.f32 %v2156, 0.0
        %v2818 = vmax.f32 %v2158, 0.0
        %v2819 = vmax.f32 %v2509, 0.0
        %v2820 = vmax.f32 %v2511, 0.0
        %v2821 = vmax.f32 %v2162, 0.0
        %v2822 = vmax.f32 %v2164, 0.0
        %v2823 = vmax.f32 %v2515, 0.0
        %v2824 = vmax.f32 %v2517, 0.0
        %v2825 = vmax.f32 %v2166, 0.0
        %v2826 = vmax.f32 %v2168, 0.0
        %v2827 = vmax.f32 %v2519, 0.0
        %v2828 = vmax.f32 %v2521, 0.0
        %v2829 = vmax.f32 %v2172, 0.0
        %v2830 = vmax.f32 %v2174, 0.0
        %v2831 = vmax.f32 %v2525, 0.0
        %v2832 = vmax.f32 %v2527, 0.0
        %v2833 = vmax.f32 %v2176, 0.0
        %v2834 = vmax.f32 %v2178, 0.0
        %v2835 = vmax.f32 %v2529, 0.0
        %v2836 = vmax.f32 %v2531, 0.0
        %v2837 = vmax.f32 %v2182, 0.0
        %v2838 = vmax.f32 %v2184, 0.0
        %v2839 = vmax.f32 %v2535, 0.0
        %v2840 = vmax.f32 %v2537, 0.0
        %v2841 = vmax.f32 %v2186, 0.0
        %v2842 = vmax.f32 %v2188, 0.0
        %v2843 = vmax.f32 %v2539, 0.0
        %v2844 = vmax.f32 %v2541, 0.0
        %v2845 = vmax.f32 %v2192, 0.0
        %v2846 = vmax.f32 %v2194, 0.0
        %v2847 = vmax.f32 %v2545, 0.0
        %v2848 = vmax.f32 %v2547, 0.0
        %v2849 = vmax.f32 %v2196, 0.0
        %v2850 = vmax.f32 %v2198, 0.0
        %v2851 = vmax.f32 %v2549, 0.0
        %v2852 = vmax.f32 %v2551, 0.0
        %v2853 = vmax.f32 %v2202, 0.0
        %v2854 = vmax.f32 %v2204, 0.0
        %v2855 = vmax.f32 %v2555, 0.0
        %v2856 = vmax.f32 %v2557, 0.0
        %v2857 = vmax.f32 %v2206, 0.0
        %v2858 = vmax.f32 %v2208, 0.0
        %v2859 = vmax.f32 %v2559, 0.0
        %v2860 = vmax.f32 %v2561, 0.0
        %v2861 = vmax.f32 %v2212, 0.0
        %v2862 = vmax.f32 %v2214, 0.0
        %v2863 = vmax.f32 %v2565, 0.0
        %v2864 = vmax.f32 %v2567, 0.0
        %v2865 = vmax.f32 %v2216, 0.0
        %v2866 = vmax.f32 %v2218, 0.0
        %v2867 = vmax.f32 %v2569, 0.0
        %v2868 = vmax.f32 %v2571, 0.0
        %v2869 = vmax.f32 %v2222, 0.0
        %v2870 = vmax.f32 %v2224, 0.0
        %v2871 = vmax.f32 %v2575, 0.0
        %v2872 = vmax.f32 %v2577, 0.0
        %v2873 = vmax.f32 %v2226, 0.0
        %v2874 = vmax.f32 %v2228, 0.0
        %v2875 = vmax.f32 %v2579, 0.0
        %v2876 = vmax.f32 %v2581, 0.0
        %v2877 = vmax.f32 %v2232, 0.0
        %v2878 = vmax.f32 %v2234, 0.0
        %v2879 = vmax.f32 %v2585, 0.0
        %v2880 = vmax.f32 %v2587, 0.0
        %v2881 = vmax.f32 %v2236, 0.0
        %v2882 = vmax.f32 %v2238, 0.0
        %v2883 = vmax.f32 %v2589, 0.0
        %v2884 = vmax.f32 %v2591, 0.0
        %v2885 = vmax.f32 %v2242, 0.0
        %v2886 = vmax.f32 %v2244, 0.0
        %v2887 = vmax.f32 %v2595, 0.0
        %v2888 = vmax.f32 %v2597, 0.0
        %v2889 = vmax.f32 %v2246, 0.0
        %v2890 = vmax.f32 %v2248, 0.0
        %v2891 = vmax.f32 %v2599, 0.0
        %v2892 = vmax.f32 %v2601, 0.0
        %v2893 = vmax.f32 %v2252, 0.0
        %v2894 = vmax.f32 %v2254, 0.0
        %v2895 = vmax.f32 %v2605, 0.0
        %v2896 = vmax.f32 %v2607, 0.0
        %v2897 = vmax.f32 %v2256, 0.0
        %v2898 = vmax.f32 %v2258, 0.0
        %v2899 = vmax.f32 %v2609, 0.0
        %v2900 = vmax.f32 %v2611, 0.0
        %v2901 = vmax.f32 %v2262, 0.0
        %v2902 = vmax.f32 %v2264, 0.0
        %v2903 = vmax.f32 %v2615, 0.0
        %v2904 = vmax.f32 %v2617, 0.0
        %v2905 = vmax.f32 %v2266, 0.0
        %v2906 = vmax.f32 %v2268, 0.0
        %v2907 = vmax.f32 %v2619, 0.0
        %v2908 = vmax.f32 %v2621, 0.0
        %v2909 = vmax.f32 %v2272, 0.0
        %v2910 = vmax.f32 %v2274, 0.0
        %v2911 = vmax.f32 %v2625, 0.0
        %v2912 = vmax.f32 %v2627, 0.0
        %v2913 = vmax.f32 %v2276, 0.0
        %v2914 = vmax.f32 %v2278, 0.0
        %v2915 = vmax.f32 %v2629, 0.0
        %v2916 = vmax.f32 %v2631, 0.0
        %v2917 = vmax.f32 %v2282, 0.0
        %v2918 = vmax.f32 %v2284, 0.0
        %v2919 = vmax.f32 %v2635, 0.0
        %v2920 = vmax.f32 %v2637, 0.0
        %v2921 = vmax.f32 %v2286, 0.0
        %v2922 = vmax.f32 %v2288, 0.0
        %v2923 = vmax.f32 %v2639, 0.0
        %v2924 = vmax.f32 %v2641, 0.0
        %v2925 = vmax.f32 %v2292, 0.0
        %v2926 = vmax.f32 %v2294, 0.0
        %v2927 = vmax.f32 %v2645, 0.0
        %v2928 = vmax.f32 %v2647, 0.0
        %v2929 = vmax.f32 %v2296, 0.0
        %v2930 = vmax.f32 %v2298, 0.0
        %v2931 = vmax.f32 %v2649, 0.0
        %v2932 = vmax.f32 %v2651, 0.0
        %v2933 = vmax.f32 %v2302, 0.0
        %v2934 = vmax.f32 %v2304, 0.0
        %v2935 = vmax.f32 %v2655, 0.0
        %v2936 = vmax.f32 %v2657, 0.0
        %v2937 = vmax.f32 %v2306, 0.0
        %v2938 = vmax.f32 %v2308, 0.0
        %v2939 = vmax.f32 %v2659, 0.0
        %v2940 = vmax.f32 %v2661, 0.0
        %v2941 = vmax.f32 %v2312, 0.0
        %v2942 = vmax.f32 %v2314, 0.0
        %v2943 = vmax.f32 %v2665, 0.0
        %v2944 = vmax.f32 %v2667, 0.0
        %v2945 = vmax.f32 %v2316, 0.0
        %v2946 = vmax.f32 %v2318, 0.0
        %v2947 = vmax.f32 %v2669, 0.0
        %v2948 = vmax.f32 %v2671, 0.0
        %v2949 = vmax.f32 %v2322, 0.0
        %v2950 = vmax.f32 %v2324, 0.0
        %v2951 = vmax.f32 %v2675, 0.0
        %v2952 = vmax.f32 %v2677, 0.0
        %v2953 = vmax.f32 %v2326, 0.0
        %v2954 = vmax.f32 %v2328, 0.0
        %v2955 = vmax.f32 %v2679, 0.0
        %v2956 = vmax.f32 %v2681, 0.0
        %v2957 = vmax.f32 %v2332, 0.0
        %v2958 = vmax.f32 %v2334, 0.0
        %v2959 = vmax.f32 %v2685, 0.0
        %v2960 = vmax.f32 %v2687, 0.0
        %v2961 = vmax.f32 %v2336, 0.0
        %v2962 = vmax.f32 %v2338, 0.0
        %v2963 = vmax.f32 %v2689, 0.0
        %v2964 = vmax.f32 %v2691, 0.0
        %v2965 = vmax.f32 %v2342, 0.0
        %v2966 = vmax.f32 %v2344, 0.0
        %v2967 = vmax.f32 %v2695, 0.0
        %v2968 = vmax.f32 %v2697, 0.0
        %v2969 = vmax.f32 %v2346, 0.0
        %v2970 = vmax.f32 %v2348, 0.0
        %v2971 = vmax.f32 %v2699, 0.0
        %v2972 = vmax.f32 %v2701, 0.0
        %v2973 = vmax.f32 %v2352, 0.0
        %v2974 = vmax.f32 %v2354, 0.0
        %v2975 = vmax.f32 %v2705, 0.0
        %v2976 = vmax.f32 %v2707, 0.0
        %v2977 = vmax.f32 %v2356, 0.0
        %v2978 = vmax.f32 %v2358, 0.0
        %v2979 = vmax.f32 %v2709, 0.0
        %v2980 = vmax.f32 %v2711, 0.0
        %v2981 = vmax.f32 %v2362, 0.0
        %v2982 = vmax.f32 %v2364, 0.0
        %v2983 = vmax.f32 %v2715, 0.0
        %v2984 = vmax.f32 %v2717, 0.0
        %v2985 = vmax.f32 %v2366, 0.0
        %v2986 = vmax.f32 %v2368, 0.0
        %v2987 = vmax.f32 %v2719, 0.0
        %v2988 = vmax.f32 %v2721, 0.0
        %v2989 = vmax.f32 %v2372, 0.0
        %v2990 = vmax.f32 %v2374, 0.0
        %v2991 = vmax.f32 %v2725, 0.0
        %v2992 = vmax.f32 %v2727, 0.0
        %v2993 = vmax.f32 %v2376, 0.0
        %v2994 = vmax.f32 %v2378, 0.0
        %v2995 = vmax.f32 %v2729, 0.0
        %v2996 = vmax.f32 %v2731, 0.0
        %v2997 = vmax.f32 %v2382, 0.0
        %v2998 = vmax.f32 %v2384, 0.0
        %v2999 = vmax.f32 %v2735, 0.0
        %v3000 = vmax.f32 %v2737, 0.0
        %v3001 = vmax.f32 %v2386, 0.0
        %v3002 = vmax.f32 %v2388, 0.0
        %v3003 = vmax.f32 %v2739, 0.0
        %v3004 = vmax.f32 %v2741, 0.0
        %v3005 = vmax.f32 %v2392, 0.0
        %v3006 = vmax.f32 %v2394, 0.0
        %v3007 = vmax.f32 %v2745, 0.0
        %v3008 = vmax.f32 %v2747, 0.0
        %v3009 = vmax.f32 %v2396, 0.0
        %v3010 = vmax.f32 %v2398, 0.0
        %v3011 = vmax.f32 %v2749, 0.0
        %v3012 = vmax.f32 %v2751, 0.0
        %v3013 = vmax.f32 %v2402, 0.0
        %v3014 = vmax.f32 %v2404, 0.0
        %v3015 = vmax.f32 %v2755, 0.0
        %v3016 = vmax.f32 %v2757, 0.0
        %v3017 = vmax.f32 %v2406, 0.0
        %v3018 = vmax.f32 %v2408, 0.0
        %v3019 = vmax.f32 %v2759, 0.0
        %v3020 = vmax.f32 %v2761, 0.0
        %v3021 = vmax.f32 %v2412, 0.0
        %v3022 = vmax.f32 %v2414, 0.0
        %v3023 = vmax.f32 %v2765, 0.0
        %v3024 = vmax.f32 %v2767, 0.0
        %v3025 = vmax.f32 %v2416, 0.0
        %v3026 = vmax.f32 %v2418, 0.0
        %v3027 = vmax.f32 %v2769, 0.0
        %v3028 = vmax.f32 %v2771, 0.0
        %v3029 = vpack.c.bf16 %v2777, %v2773
        %v3030 = vpack.c.bf16 %v2778, %v2774
        %v3031 = vpack.c.bf16 %v2779, %v2775
        %v3032 = vpack.c.bf16 %v2780, %v2776
        %v3033 = vpack.c.bf16 %v2785, %v2781
        %v3034 = vpack.c.bf16 %v2786, %v2782
        %v3035 = vpack.c.bf16 %v2787, %v2783
        %v3036 = vpack.c.bf16 %v2788, %v2784
        %v3037 = vpack.c.bf16 %v2793, %v2789
        %v3038 = vpack.c.bf16 %v2794, %v2790
        %v3039 = vpack.c.bf16 %v2795, %v2791
        %v3040 = vpack.c.bf16 %v2796, %v2792
        %v3041 = vpack.c.bf16 %v2801, %v2797
        %v3042 = vpack.c.bf16 %v2802, %v2798
        %v3043 = vpack.c.bf16 %v2803, %v2799
        %v3044 = vpack.c.bf16 %v2804, %v2800
        %v3045 = vpack.c.bf16 %v2809, %v2805
        %v3046 = vpack.c.bf16 %v2810, %v2806
        %v3047 = vpack.c.bf16 %v2811, %v2807
        %v3048 = vpack.c.bf16 %v2812, %v2808
        %v3049 = vpack.c.bf16 %v2817, %v2813
        %v3050 = vpack.c.bf16 %v2818, %v2814
        %v3051 = vpack.c.bf16 %v2819, %v2815
        %v3052 = vpack.c.bf16 %v2820, %v2816
        %v3053 = vpack.c.bf16 %v2825, %v2821
        %v3054 = vpack.c.bf16 %v2826, %v2822
        %v3055 = vpack.c.bf16 %v2827, %v2823
        %v3056 = vpack.c.bf16 %v2828, %v2824
        %v3057 = vpack.c.bf16 %v2833, %v2829
        %v3058 = vpack.c.bf16 %v2834, %v2830
        %v3059 = vpack.c.bf16 %v2835, %v2831
        %v3060 = vpack.c.bf16 %v2836, %v2832
        %v3061 = vpack.c.bf16 %v2841, %v2837
        %v3062 = vpack.c.bf16 %v2842, %v2838
        %v3063 = vpack.c.bf16 %v2843, %v2839
        %v3064 = vpack.c.bf16 %v2844, %v2840
        %v3065 = vpack.c.bf16 %v2849, %v2845
        %v3066 = vpack.c.bf16 %v2850, %v2846
        %v3067 = vpack.c.bf16 %v2851, %v2847
        %v3068 = vpack.c.bf16 %v2852, %v2848
        %v3069 = vpack.c.bf16 %v2857, %v2853
        %v3070 = vpack.c.bf16 %v2858, %v2854
        %v3071 = vpack.c.bf16 %v2859, %v2855
        %v3072 = vpack.c.bf16 %v2860, %v2856
        %v3073 = vpack.c.bf16 %v2865, %v2861
        %v3074 = vpack.c.bf16 %v2866, %v2862
        %v3075 = vpack.c.bf16 %v2867, %v2863
        %v3076 = vpack.c.bf16 %v2868, %v2864
        %v3077 = vpack.c.bf16 %v2873, %v2869
        %v3078 = vpack.c.bf16 %v2874, %v2870
        %v3079 = vpack.c.bf16 %v2875, %v2871
        %v3080 = vpack.c.bf16 %v2876, %v2872
        %v3081 = vpack.c.bf16 %v2881, %v2877
        %v3082 = vpack.c.bf16 %v2882, %v2878
        %v3083 = vpack.c.bf16 %v2883, %v2879
        %v3084 = vpack.c.bf16 %v2884, %v2880
        %v3085 = vpack.c.bf16 %v2889, %v2885
        %v3086 = vpack.c.bf16 %v2890, %v2886
        %v3087 = vpack.c.bf16 %v2891, %v2887
        %v3088 = vpack.c.bf16 %v2892, %v2888
        %v3089 = vpack.c.bf16 %v2897, %v2893
        %v3090 = vpack.c.bf16 %v2898, %v2894
        %v3091 = vpack.c.bf16 %v2899, %v2895
        %v3092 = vpack.c.bf16 %v2900, %v2896
        %v3093 = vpack.c.bf16 %v2905, %v2901
        %v3094 = vpack.c.bf16 %v2906, %v2902
        %v3095 = vpack.c.bf16 %v2907, %v2903
        %v3096 = vpack.c.bf16 %v2908, %v2904
        %v3097 = vpack.c.bf16 %v2913, %v2909
        %v3098 = vpack.c.bf16 %v2914, %v2910
        %v3099 = vpack.c.bf16 %v2915, %v2911
        %v3100 = vpack.c.bf16 %v2916, %v2912
        %v3101 = vpack.c.bf16 %v2921, %v2917
        %v3102 = vpack.c.bf16 %v2922, %v2918
        %v3103 = vpack.c.bf16 %v2923, %v2919
        %v3104 = vpack.c.bf16 %v2924, %v2920
        %v3105 = vpack.c.bf16 %v2929, %v2925
        %v3106 = vpack.c.bf16 %v2930, %v2926
        %v3107 = vpack.c.bf16 %v2931, %v2927
        %v3108 = vpack.c.bf16 %v2932, %v2928
        %v3109 = vpack.c.bf16 %v2937, %v2933
        %v3110 = vpack.c.bf16 %v2938, %v2934
        %v3111 = vpack.c.bf16 %v2939, %v2935
        %v3112 = vpack.c.bf16 %v2940, %v2936
        %v3113 = vpack.c.bf16 %v2945, %v2941
        %v3114 = vpack.c.bf16 %v2946, %v2942
        %v3115 = vpack.c.bf16 %v2947, %v2943
        %v3116 = vpack.c.bf16 %v2948, %v2944
        %v3117 = vpack.c.bf16 %v2953, %v2949
        %v3118 = vpack.c.bf16 %v2954, %v2950
        %v3119 = vpack.c.bf16 %v2955, %v2951
        %v3120 = vpack.c.bf16 %v2956, %v2952
        %v3121 = vpack.c.bf16 %v2961, %v2957
        %v3122 = vpack.c.bf16 %v2962, %v2958
        %v3123 = vpack.c.bf16 %v2963, %v2959
        %v3124 = vpack.c.bf16 %v2964, %v2960
        %v3125 = vpack.c.bf16 %v2969, %v2965
        %v3126 = vpack.c.bf16 %v2970, %v2966
        %v3127 = vpack.c.bf16 %v2971, %v2967
        %v3128 = vpack.c.bf16 %v2972, %v2968
        %v3129 = vpack.c.bf16 %v2977, %v2973
        %v3130 = vpack.c.bf16 %v2978, %v2974
        %v3131 = vpack.c.bf16 %v2979, %v2975
        %v3132 = vpack.c.bf16 %v2980, %v2976
        %v3133 = vpack.c.bf16 %v2985, %v2981
        %v3134 = vpack.c.bf16 %v2986, %v2982
        %v3135 = vpack.c.bf16 %v2987, %v2983
        %v3136 = vpack.c.bf16 %v2988, %v2984
        %v3137 = vpack.c.bf16 %v2993, %v2989
        %v3138 = vpack.c.bf16 %v2994, %v2990
        %v3139 = vpack.c.bf16 %v2995, %v2991
        %v3140 = vpack.c.bf16 %v2996, %v2992
        %v3141 = vpack.c.bf16 %v3001, %v2997
        %v3142 = vpack.c.bf16 %v3002, %v2998
        %v3143 = vpack.c.bf16 %v3003, %v2999
        %v3144 = vpack.c.bf16 %v3004, %v3000
        %v3145 = vpack.c.bf16 %v3009, %v3005
        %v3146 = vpack.c.bf16 %v3010, %v3006
        %v3147 = vpack.c.bf16 %v3011, %v3007
        %v3148 = vpack.c.bf16 %v3012, %v3008
        %v3149 = vpack.c.bf16 %v3017, %v3013
        %v3150 = vpack.c.bf16 %v3018, %v3014
        %v3151 = vpack.c.bf16 %v3019, %v3015
        %v3152 = vpack.c.bf16 %v3020, %v3016
        %v3153 = vpack.c.bf16 %v3025, %v3021
        %v3154 = vpack.c.bf16 %v3026, %v3022
        %v3155 = vpack.c.bf16 %v3027, %v3023
        %v3156 = vpack.c.bf16 %v3028, %v3024
        %v3157 = vld [vmem:[%s5] sm:$0xff]
        %v3158 = vld [vmem:[%s5 + $0x8] sm:$0xff]
        %v3159 = vld [vmem:[%s5 + $0x10] sm:$0xff]
        %v3160 = vld [vmem:[%s5 + $0x18] sm:$0xff]
        %v3161 = vld [vmem:[%s5 + $0x20] sm:$0xff]
        %v3162 = vld [vmem:[%s5 + $0x28] sm:$0xff]
        %v3163 = vld [vmem:[%s5 + $0x30] sm:$0xff]
        %v3164 = vld [vmem:[%s5 + $0x38] sm:$0xff]
        %v3165 = vld [vmem:[%s5 + $0x40] sm:$0xff]
        %v3166 = vld [vmem:[%s5 + $0x48] sm:$0xff]
        %v3167 = vld [vmem:[%s5 + $0x50] sm:$0xff]
        %v3168 = vld [vmem:[%s5 + $0x58] sm:$0xff]
        %v3169 = vld [vmem:[%s5 + $0x60] sm:$0xff]
        %v3170 = vld [vmem:[%s5 + $0x68] sm:$0xff]
        %v3171 = vld [vmem:[%s5 + $0x70] sm:$0xff]
        %v3172 = vld [vmem:[%s5 + $0x78] sm:$0xff]
        %v3173 = vld [vmem:[%s5 + $0x80] sm:$0xff]
        %v3174 = vld [vmem:[%s5 + $0x88] sm:$0xff]
        %v3175 = vld [vmem:[%s5 + $0x90] sm:$0xff]
        %v3176 = vld [vmem:[%s5 + $0x98] sm:$0xff]
        %v3177 = vld [vmem:[%s5 + $0xa0] sm:$0xff]
        %v3178 = vld [vmem:[%s5 + $0xa8] sm:$0xff]
        %v3179 = vld [vmem:[%s5 + $0xb0] sm:$0xff]
        %v3180 = vld [vmem:[%s5 + $0xb8] sm:$0xff]
        %v3181 = vld [vmem:[%s5 + $0xc0] sm:$0xff]
        %v3182 = vld [vmem:[%s5 + $0xc8] sm:$0xff]
        %v3183 = vld [vmem:[%s5 + $0xd0] sm:$0xff]
        %v3184 = vld [vmem:[%s5 + $0xd8] sm:$0xff]
        %v3185 = vld [vmem:[%s5 + $0xe0] sm:$0xff]
        %v3186 = vld [vmem:[%s5 + $0xe8] sm:$0xff]
        %v3187 = vld [vmem:[%s5 + $0xf0] sm:$0xff]
        %v3188 = vld [vmem:[%s5 + $0xf8] sm:$0xff]
        %v3189 = vld [vmem:[%s5 + $0x100] sm:$0xff]
        %v3190 = vld [vmem:[%s5 + $0x108] sm:$0xff]
        %v3191 = vld [vmem:[%s5 + $0x110] sm:$0xff]
        %v3192 = vld [vmem:[%s5 + $0x118] sm:$0xff]
        %v3193 = vld [vmem:[%s5 + $0x120] sm:$0xff]
        %v3194 = vld [vmem:[%s5 + $0x128] sm:$0xff]
        %v3195 = vld [vmem:[%s5 + $0x130] sm:$0xff]
        %v3196 = vld [vmem:[%s5 + $0x138] sm:$0xff]
        %v3197 = vld [vmem:[%s5 + $0x140] sm:$0xff]
        %v3198 = vld [vmem:[%s5 + $0x148] sm:$0xff]
        %v3199 = vld [vmem:[%s5 + $0x150] sm:$0xff]
        %v3200 = vld [vmem:[%s5 + $0x158] sm:$0xff]
        %v3201 = vld [vmem:[%s5 + $0x160] sm:$0xff]
        %v3202 = vld [vmem:[%s5 + $0x168] sm:$0xff]
        %v3203 = vld [vmem:[%s5 + $0x170] sm:$0xff]
        %v3204 = vld [vmem:[%s5 + $0x178] sm:$0xff]
        %v3205 = vld [vmem:[%s5 + $0x180] sm:$0xff]
        %v3206 = vld [vmem:[%s5 + $0x188] sm:$0xff]
        %v3207 = vld [vmem:[%s5 + $0x190] sm:$0xff]
        %v3208 = vld [vmem:[%s5 + $0x198] sm:$0xff]
        %v3209 = vld [vmem:[%s5 + $0x1a0] sm:$0xff]
        %v3210 = vld [vmem:[%s5 + $0x1a8] sm:$0xff]
        %v3211 = vld [vmem:[%s5 + $0x1b0] sm:$0xff]
        %v3212 = vld [vmem:[%s5 + $0x1b8] sm:$0xff]
        %v3213 = vld [vmem:[%s5 + $0x1c0] sm:$0xff]
        %v3214 = vld [vmem:[%s5 + $0x1c8] sm:$0xff]
        %v3215 = vld [vmem:[%s5 + $0x1d0] sm:$0xff]
        %v3216 = vld [vmem:[%s5 + $0x1d8] sm:$0xff]
        %v3217 = vld [vmem:[%s5 + $0x1e0] sm:$0xff]
        %v3218 = vld [vmem:[%s5 + $0x1e8] sm:$0xff]
        %v3219 = vld [vmem:[%s5 + $0x1f0] sm:$0xff]
        %v3220 = vld [vmem:[%s5 + $0x1f8] sm:$0xff]
        %v3221 = vld [vmem:[%s6] sm:$0x3]
        %v3223 = vlaneseq
        %v3224 = vshrl.u32 %v3223, 7
        %v3225 = vsub.s32 0, %v3224
        %v3226 = vrot.slane %v3221, %v3225
        %v3227 = vlaneseq
        %v3228 = vshrl.u32 %v3227, 7
        %v3229 = vsub.s32 1, %v3228
        %v3230 = vrot.slane %v3221, %v3229
        %v3297 = vunpack.c.l.b16 %v3157
        %v3298 = vunpack.c.h.b16 %v3157
        %v3299 = vunpack.c.l.b16 %v3158
        %v3300 = vunpack.c.h.b16 %v3158
        %v3301 = vunpack.c.l.b16 %v3159
        %v3302 = vunpack.c.h.b16 %v3159
        %v3303 = vunpack.c.l.b16 %v3160
        %v3304 = vunpack.c.h.b16 %v3160
        %v3305 = vunpack.c.l.b16 %v3161
        %v3306 = vunpack.c.h.b16 %v3161
        %v3307 = vunpack.c.l.b16 %v3162
        %v3308 = vunpack.c.h.b16 %v3162
        %v3309 = vunpack.c.l.b16 %v3163
        %v3310 = vunpack.c.h.b16 %v3163
        %v3311 = vunpack.c.l.b16 %v3164
        %v3312 = vunpack.c.h.b16 %v3164
        %v3313 = vunpack.c.l.b16 %v3165
        %v3314 = vunpack.c.h.b16 %v3165
        %v3315 = vunpack.c.l.b16 %v3166
        %v3316 = vunpack.c.h.b16 %v3166
        %v3317 = vunpack.c.l.b16 %v3167
        %v3318 = vunpack.c.h.b16 %v3167
        %v3319 = vunpack.c.l.b16 %v3168
        %v3320 = vunpack.c.h.b16 %v3168
        %v3321 = vunpack.c.l.b16 %v3169
        %v3322 = vunpack.c.h.b16 %v3169
        %v3323 = vunpack.c.l.b16 %v3170
        %v3324 = vunpack.c.h.b16 %v3170
        %v3325 = vunpack.c.l.b16 %v3171
        %v3326 = vunpack.c.h.b16 %v3171
        %v3327 = vunpack.c.l.b16 %v3172
        %v3328 = vunpack.c.h.b16 %v3172
        %v3329 = vunpack.c.l.b16 %v3173
        %v3330 = vunpack.c.h.b16 %v3173
        %v3331 = vunpack.c.l.b16 %v3174
        %v3332 = vunpack.c.h.b16 %v3174
        %v3333 = vunpack.c.l.b16 %v3175
        %v3334 = vunpack.c.h.b16 %v3175
        %v3335 = vunpack.c.l.b16 %v3176
        %v3336 = vunpack.c.h.b16 %v3176
        %v3337 = vunpack.c.l.b16 %v3177
        %v3338 = vunpack.c.h.b16 %v3177
        %v3339 = vunpack.c.l.b16 %v3178
        %v3340 = vunpack.c.h.b16 %v3178
        %v3341 = vunpack.c.l.b16 %v3179
        %v3342 = vunpack.c.h.b16 %v3179
        %v3343 = vunpack.c.l.b16 %v3180
        %v3344 = vunpack.c.h.b16 %v3180
        %v3345 = vunpack.c.l.b16 %v3181
        %v3346 = vunpack.c.h.b16 %v3181
        %v3347 = vunpack.c.l.b16 %v3182
        %v3348 = vunpack.c.h.b16 %v3182
        %v3349 = vunpack.c.l.b16 %v3183
        %v3350 = vunpack.c.h.b16 %v3183
        %v3351 = vunpack.c.l.b16 %v3184
        %v3352 = vunpack.c.h.b16 %v3184
        %v3353 = vunpack.c.l.b16 %v3185
        %v3354 = vunpack.c.h.b16 %v3185
        %v3355 = vunpack.c.l.b16 %v3186
        %v3356 = vunpack.c.h.b16 %v3186
        %v3357 = vunpack.c.l.b16 %v3187
        %v3358 = vunpack.c.h.b16 %v3187
        %v3359 = vunpack.c.l.b16 %v3188
        %v3360 = vunpack.c.h.b16 %v3188
        %v3361 = vunpack.c.l.b16 %v3189
        %v3362 = vunpack.c.h.b16 %v3189
        %v3363 = vunpack.c.l.b16 %v3190
        %v3364 = vunpack.c.h.b16 %v3190
        %v3365 = vunpack.c.l.b16 %v3191
        %v3366 = vunpack.c.h.b16 %v3191
        %v3367 = vunpack.c.l.b16 %v3192
        %v3368 = vunpack.c.h.b16 %v3192
        %v3369 = vunpack.c.l.b16 %v3193
        %v3370 = vunpack.c.h.b16 %v3193
        %v3371 = vunpack.c.l.b16 %v3194
        %v3372 = vunpack.c.h.b16 %v3194
        %v3373 = vunpack.c.l.b16 %v3195
        %v3374 = vunpack.c.h.b16 %v3195
        %v3375 = vunpack.c.l.b16 %v3196
        %v3376 = vunpack.c.h.b16 %v3196
        %v3377 = vunpack.c.l.b16 %v3197
        %v3378 = vunpack.c.h.b16 %v3197
        %v3379 = vunpack.c.l.b16 %v3198
        %v3380 = vunpack.c.h.b16 %v3198
        %v3381 = vunpack.c.l.b16 %v3199
        %v3382 = vunpack.c.h.b16 %v3199
        %v3383 = vunpack.c.l.b16 %v3200
        %v3384 = vunpack.c.h.b16 %v3200
        %v3385 = vunpack.c.l.b16 %v3201
        %v3386 = vunpack.c.h.b16 %v3201
        %v3387 = vunpack.c.l.b16 %v3202
        %v3388 = vunpack.c.h.b16 %v3202
        %v3389 = vunpack.c.l.b16 %v3203
        %v3390 = vunpack.c.h.b16 %v3203
        %v3391 = vunpack.c.l.b16 %v3204
        %v3392 = vunpack.c.h.b16 %v3204
        %v3393 = vunpack.c.l.b16 %v3205
        %v3394 = vunpack.c.h.b16 %v3205
        %v3395 = vunpack.c.l.b16 %v3206
        %v3396 = vunpack.c.h.b16 %v3206
        %v3397 = vunpack.c.l.b16 %v3207
        %v3398 = vunpack.c.h.b16 %v3207
        %v3399 = vunpack.c.l.b16 %v3208
        %v3400 = vunpack.c.h.b16 %v3208
        %v3401 = vunpack.c.l.b16 %v3209
        %v3402 = vunpack.c.h.b16 %v3209
        %v3403 = vunpack.c.l.b16 %v3210
        %v3404 = vunpack.c.h.b16 %v3210
        %v3405 = vunpack.c.l.b16 %v3211
        %v3406 = vunpack.c.h.b16 %v3211
        %v3407 = vunpack.c.l.b16 %v3212
        %v3408 = vunpack.c.h.b16 %v3212
        %v3409 = vunpack.c.l.b16 %v3213
        %v3410 = vunpack.c.h.b16 %v3213
        %v3411 = vunpack.c.l.b16 %v3214
        %v3412 = vunpack.c.h.b16 %v3214
        %v3413 = vunpack.c.l.b16 %v3215
        %v3414 = vunpack.c.h.b16 %v3215
        %v3415 = vunpack.c.l.b16 %v3216
        %v3416 = vunpack.c.h.b16 %v3216
        %v3417 = vunpack.c.l.b16 %v3217
        %v3418 = vunpack.c.h.b16 %v3217
        %v3419 = vunpack.c.l.b16 %v3218
        %v3420 = vunpack.c.h.b16 %v3218
        %v3421 = vunpack.c.l.b16 %v3219
        %v3422 = vunpack.c.h.b16 %v3219
        %v3423 = vunpack.c.l.b16 %v3220
        %v3424 = vunpack.c.h.b16 %v3220
        %v3425 = vpack.c.b16 %v3299, %v3297
        %v3426 = vpack.c.b16 %v3300, %v3298
        %v3427 = vpack.c.b16 %v3303, %v3301
        %v3428 = vpack.c.b16 %v3304, %v3302
        %v3429 = vpack.c.b16 %v3307, %v3305
        %v3430 = vpack.c.b16 %v3308, %v3306
        %v3431 = vpack.c.b16 %v3311, %v3309
        %v3432 = vpack.c.b16 %v3312, %v3310
        %v3433 = vpack.c.b16 %v3315, %v3313
        %v3434 = vpack.c.b16 %v3316, %v3314
        %v3435 = vpack.c.b16 %v3319, %v3317
        %v3436 = vpack.c.b16 %v3320, %v3318
        %v3437 = vpack.c.b16 %v3323, %v3321
        %v3438 = vpack.c.b16 %v3324, %v3322
        %v3439 = vpack.c.b16 %v3327, %v3325
        %v3440 = vpack.c.b16 %v3328, %v3326
        %v3441 = vpack.c.b16 %v3331, %v3329
        %v3442 = vpack.c.b16 %v3332, %v3330
        %v3443 = vpack.c.b16 %v3335, %v3333
        %v3444 = vpack.c.b16 %v3336, %v3334
        %v3445 = vpack.c.b16 %v3339, %v3337
        %v3446 = vpack.c.b16 %v3340, %v3338
        %v3447 = vpack.c.b16 %v3343, %v3341
        %v3448 = vpack.c.b16 %v3344, %v3342
        %v3449 = vpack.c.b16 %v3347, %v3345
        %v3450 = vpack.c.b16 %v3348, %v3346
        %v3451 = vpack.c.b16 %v3351, %v3349
        %v3452 = vpack.c.b16 %v3352, %v3350
        %v3453 = vpack.c.b16 %v3355, %v3353
        %v3454 = vpack.c.b16 %v3356, %v3354
        %v3455 = vpack.c.b16 %v3359, %v3357
        %v3456 = vpack.c.b16 %v3360, %v3358
        %v3457 = vpack.c.b16 %v3363, %v3361
        %v3458 = vpack.c.b16 %v3364, %v3362
        %v3459 = vpack.c.b16 %v3367, %v3365
        %v3460 = vpack.c.b16 %v3368, %v3366
        %v3461 = vpack.c.b16 %v3371, %v3369
        %v3462 = vpack.c.b16 %v3372, %v3370
        %v3463 = vpack.c.b16 %v3375, %v3373
        %v3464 = vpack.c.b16 %v3376, %v3374
        %v3465 = vpack.c.b16 %v3379, %v3377
        %v3466 = vpack.c.b16 %v3380, %v3378
        %v3467 = vpack.c.b16 %v3383, %v3381
        %v3468 = vpack.c.b16 %v3384, %v3382
        %v3469 = vpack.c.b16 %v3387, %v3385
        %v3470 = vpack.c.b16 %v3388, %v3386
        %v3471 = vpack.c.b16 %v3391, %v3389
        %v3472 = vpack.c.b16 %v3392, %v3390
        %v3473 = vpack.c.b16 %v3395, %v3393
        %v3474 = vpack.c.b16 %v3396, %v3394
        %v3475 = vpack.c.b16 %v3399, %v3397
        %v3476 = vpack.c.b16 %v3400, %v3398
        %v3477 = vpack.c.b16 %v3403, %v3401
        %v3478 = vpack.c.b16 %v3404, %v3402
        %v3479 = vpack.c.b16 %v3407, %v3405
        %v3480 = vpack.c.b16 %v3408, %v3406
        %v3481 = vpack.c.b16 %v3411, %v3409
        %v3482 = vpack.c.b16 %v3412, %v3410
        %v3483 = vpack.c.b16 %v3415, %v3413
        %v3484 = vpack.c.b16 %v3416, %v3414
        %v3485 = vpack.c.b16 %v3419, %v3417
        %v3486 = vpack.c.b16 %v3420, %v3418
        %v3487 = vpack.c.b16 %v3423, %v3421
        %v3488 = vpack.c.b16 %v3424, %v3422
        %3553 = vmatprep.subr.bf16.mxu0 %v3426
        %3554 = vmatpush1.bf16.msra.mxu0 %v3425
        %3555 = vmatprep.subr.bf16.mxu0 %v3428
        %3556 = vmatpush1.bf16.msra.mxu0 %v3427
        %3557 = vmatprep.subr.bf16.mxu0 %v3430
        %3558 = vmatpush1.bf16.msra.mxu0 %v3429
        %3559 = vmatprep.subr.bf16.mxu0 %v3432
        %3560 = vmatpush1.bf16.msra.mxu0 %v3431
        %3561 = vmatprep.subr.bf16.mxu0 %v3434
        %3562 = vmatpush1.bf16.msra.mxu0 %v3433
        %3563 = vmatprep.subr.bf16.mxu0 %v3436
        %3564 = vmatpush1.bf16.msra.mxu0 %v3435
        %3565 = vmatprep.subr.bf16.mxu0 %v3438
        %3566 = vmatpush1.bf16.msra.mxu0 %v3437
        %3567 = vmatprep.subr.bf16.mxu0 %v3440
        %3568 = vmatpush1.bf16.msra.mxu0 %v3439
        %3569 = vmatprep.subr.bf16.mxu0 %v3442
        %3570 = vmatpush1.bf16.msra.mxu0 %v3441
        %3571 = vmatprep.subr.bf16.mxu0 %v3444
        %3572 = vmatpush1.bf16.msra.mxu0 %v3443
        %3573 = vmatprep.subr.bf16.mxu0 %v3446
        %3574 = vmatpush1.bf16.msra.mxu0 %v3445
        %3575 = vmatprep.subr.bf16.mxu0 %v3448
        %3576 = vmatpush1.bf16.msra.mxu0 %v3447
        %3577 = vmatprep.subr.bf16.mxu0 %v3450
        %3578 = vmatpush1.bf16.msra.mxu0 %v3449
        %3579 = vmatprep.subr.bf16.mxu0 %v3452
        %3580 = vmatpush1.bf16.msra.mxu0 %v3451
        %3581 = vmatprep.subr.bf16.mxu0 %v3454
        %3582 = vmatpush1.bf16.msra.mxu0 %v3453
        %3583 = vmatprep.subr.bf16.mxu0 %v3456
        %3584 = vmatpush1.bf16.msra.mxu0 %v3455
        %3585 = vmatprep.mubr.bf16.mxu0 %v3030
        %3586 = vmatmul.mubr.bf16.gmra.mrb[0].mxu0 %v3029
        %v3587 = vpop.f32.mrb[0].mxu0
        %v3588 = vadd.f32 %v3226, %v3587
        %v3589 = vpop.f32.mrb[0].mxu0
        %v3590 = vadd.f32 %v3230, %v3589
        %v3591 = vpop.f32.mrb[0].mxu0
        %v3592 = vadd.f32 %v3226, %v3591
        %v3593 = vpop.f32.mrb[0].mxu0
        %v3594 = vadd.f32 %v3230, %v3593
        %3595 = vmatprep.mubr.bf16.mxu0 %v3034
        %3596 = vmatmul.mubr.bf16.gmra.mrb[0].mxu0 %v3033
        %v3597 = vpop.f32.mrb[0].mxu0
        %v3598 = vadd.f32 %v3226, %v3597
        %v3599 = vpop.f32.mrb[0].mxu0
        %v3600 = vadd.f32 %v3230, %v3599
        %v3601 = vpop.f32.mrb[0].mxu0
        %v3602 = vadd.f32 %v3226, %v3601
        %v3603 = vpop.f32.mrb[0].mxu0
        %v3604 = vadd.f32 %v3230, %v3603
        %3605 = vmatprep.mubr.bf16.mxu0 %v3038
        %3606 = vmatmul.mubr.bf16.gmra.mrb[0].mxu0 %v3037
        %v3607 = vpop.f32.mrb[0].mxu0
        %v3608 = vadd.f32 %v3226, %v3607
        %v3609 = vpop.f32.mrb[0].mxu0
        %v3610 = vadd.f32 %v3230, %v3609
        %v3611 = vpop.f32.mrb[0].mxu0
        %v3612 = vadd.f32 %v3226, %v3611
        %v3613 = vpop.f32.mrb[0].mxu0
        %v3614 = vadd.f32 %v3230, %v3613
        %3615 = vmatprep.mubr.bf16.mxu0 %v3042
        %3616 = vmatmul.mubr.bf16.gmra.mrb[0].mxu0 %v3041
        %v3617 = vpop.f32.mrb[0].mxu0
        %v3618 = vadd.f32 %v3226, %v3617
        %v3619 = vpop.f32.mrb[0].mxu0
        %v3620 = vadd.f32 %v3230, %v3619
        %v3621 = vpop.f32.mrb[0].mxu0
        %v3622 = vadd.f32 %v3226, %v3621
        %v3623 = vpop.f32.mrb[0].mxu0
        %v3624 = vadd.f32 %v3230, %v3623
        %3625 = vmatprep.mubr.bf16.mxu0 %v3046
        %3626 = vmatmul.mubr.bf16.gmra.mrb[0].mxu0 %v3045
        %v3627 = vpop.f32.mrb[0].mxu0
        %v3628 = vadd.f32 %v3226, %v3627
        %v3629 = vpop.f32.mrb[0].mxu0
        %v3630 = vadd.f32 %v3230, %v3629
        %v3631 = vpop.f32.mrb[0].mxu0
        %v3632 = vadd.f32 %v3226, %v3631
        %v3633 = vpop.f32.mrb[0].mxu0
        %v3634 = vadd.f32 %v3230, %v3633
        %3635 = vmatprep.mubr.bf16.mxu0 %v3050
        %3636 = vmatmul.mubr.bf16.gmra.mrb[0].mxu0 %v3049
        %v3637 = vpop.f32.mrb[0].mxu0
        %v3638 = vadd.f32 %v3226, %v3637
        %v3639 = vpop.f32.mrb[0].mxu0
        %v3640 = vadd.f32 %v3230, %v3639
        %v3641 = vpop.f32.mrb[0].mxu0
        %v3642 = vadd.f32 %v3226, %v3641
        %v3643 = vpop.f32.mrb[0].mxu0
        %v3644 = vadd.f32 %v3230, %v3643
        %3645 = vmatprep.mubr.bf16.mxu0 %v3054
        %3646 = vmatmul.mubr.bf16.gmra.mrb[0].mxu0 %v3053
        %v3647 = vpop.f32.mrb[0].mxu0
        %v3648 = vadd.f32 %v3226, %v3647
        %v3649 = vpop.f32.mrb[0].mxu0
        %v3650 = vadd.f32 %v3230, %v3649
        %v3651 = vpop.f32.mrb[0].mxu0
        %v3652 = vadd.f32 %v3226, %v3651
        %v3653 = vpop.f32.mrb[0].mxu0
        %v3654 = vadd.f32 %v3230, %v3653
        %3655 = vmatprep.mubr.bf16.mxu0 %v3058
        %3656 = vmatmul.mubr.bf16.gmra.mrb[0].mxu0 %v3057
        %v3657 = vpop.f32.mrb[0].mxu0
        %v3658 = vadd.f32 %v3226, %v3657
        %v3659 = vpop.f32.mrb[0].mxu0
        %v3660 = vadd.f32 %v3230, %v3659
        %v3661 = vpop.f32.mrb[0].mxu0
        %v3662 = vadd.f32 %v3226, %v3661
        %v3663 = vpop.f32.mrb[0].mxu0
        %v3664 = vadd.f32 %v3230, %v3663
        %3665 = vmatprep.mubr.bf16.mxu0 %v3062
        %3666 = vmatmul.mubr.bf16.gmra.mrb[0].mxu0 %v3061
        %v3667 = vpop.f32.mrb[0].mxu0
        %v3668 = vadd.f32 %v3226, %v3667
        %v3669 = vpop.f32.mrb[0].mxu0
        %v3670 = vadd.f32 %v3230, %v3669
        %v3671 = vpop.f32.mrb[0].mxu0
        %v3672 = vadd.f32 %v3226, %v3671
        %v3673 = vpop.f32.mrb[0].mxu0
        %v3674 = vadd.f32 %v3230, %v3673
        %3675 = vmatprep.mubr.bf16.mxu0 %v3066
        %3676 = vmatmul.mubr.bf16.gmra.mrb[0].mxu0 %v3065
        %v3677 = vpop.f32.mrb[0].mxu0
        %v3678 = vadd.f32 %v3226, %v3677
        %v3679 = vpop.f32.mrb[0].mxu0
        %v3680 = vadd.f32 %v3230, %v3679
        %v3681 = vpop.f32.mrb[0].mxu0
        %v3682 = vadd.f32 %v3226, %v3681
        %v3683 = vpop.f32.mrb[0].mxu0
        %v3684 = vadd.f32 %v3230, %v3683
        %3685 = vmatprep.mubr.bf16.mxu0 %v3070
        %3686 = vmatmul.mubr.bf16.gmra.mrb[0].mxu0 %v3069
        %v3687 = vpop.f32.mrb[0].mxu0
        %v3688 = vadd.f32 %v3226, %v3687
        %v3689 = vpop.f32.mrb[0].mxu0
        %v3690 = vadd.f32 %v3230, %v3689
        %v3691 = vpop.f32.mrb[0].mxu0
        %v3692 = vadd.f32 %v3226, %v3691
        %v3693 = vpop.f32.mrb[0].mxu0
        %v3694 = vadd.f32 %v3230, %v3693
        %3695 = vmatprep.mubr.bf16.mxu0 %v3074
        %3696 = vmatmul.mubr.bf16.gmra.mrb[0].mxu0 %v3073
        %v3697 = vpop.f32.mrb[0].mxu0
        %v3698 = vadd.f32 %v3226, %v3697
        %v3699 = vpop.f32.mrb[0].mxu0
        %v3700 = vadd.f32 %v3230, %v3699
        %v3701 = vpop.f32.mrb[0].mxu0
        %v3702 = vadd.f32 %v3226, %v3701
        %v3703 = vpop.f32.mrb[0].mxu0
        %v3704 = vadd.f32 %v3230, %v3703
        %3705 = vmatprep.mubr.bf16.mxu0 %v3078
        %3706 = vmatmul.mubr.bf16.gmra.mrb[0].mxu0 %v3077
        %v3707 = vpop.f32.mrb[0].mxu0
        %v3708 = vadd.f32 %v3226, %v3707
        %v3709 = vpop.f32.mrb[0].mxu0
        %v3710 = vadd.f32 %v3230, %v3709
        %v3711 = vpop.f32.mrb[0].mxu0
        %v3712 = vadd.f32 %v3226, %v3711
        %v3713 = vpop.f32.mrb[0].mxu0
        %v3714 = vadd.f32 %v3230, %v3713
        %3715 = vmatprep.mubr.bf16.mxu0 %v3082
        %3716 = vmatmul.mubr.bf16.gmra.mrb[0].mxu0 %v3081
        %v3717 = vpop.f32.mrb[0].mxu0
        %v3718 = vadd.f32 %v3226, %v3717
        %v3719 = vpop.f32.mrb[0].mxu0
        %v3720 = vadd.f32 %v3230, %v3719
        %v3721 = vpop.f32.mrb[0].mxu0
        %v3722 = vadd.f32 %v3226, %v3721
        %v3723 = vpop.f32.mrb[0].mxu0
        %v3724 = vadd.f32 %v3230, %v3723
        %3725 = vmatprep.mubr.bf16.mxu0 %v3086
        %3726 = vmatmul.mubr.bf16.gmra.mrb[0].mxu0 %v3085
        %v3727 = vpop.f32.mrb[0].mxu0
        %v3728 = vadd.f32 %v3226, %v3727
        %v3729 = vpop.f32.mrb[0].mxu0
        %v3730 = vadd.f32 %v3230, %v3729
        %v3731 = vpop.f32.mrb[0].mxu0
        %v3732 = vadd.f32 %v3226, %v3731
        %v3733 = vpop.f32.mrb[0].mxu0
        %v3734 = vadd.f32 %v3230, %v3733
        %3735 = vmatprep.mubr.bf16.mxu0 %v3090
        %3736 = vmatmul.mubr.bf16.gmra.mrb[0].mxu0 %v3089
        %v3737 = vpop.f32.mrb[0].mxu0
        %v3738 = vadd.f32 %v3226, %v3737
        %v3739 = vpop.f32.mrb[0].mxu0
        %v3740 = vadd.f32 %v3230, %v3739
        %v3741 = vpop.f32.mrb[0].mxu0
        %v3742 = vadd.f32 %v3226, %v3741
        %v3743 = vpop.f32.mrb[0].mxu0
        %v3744 = vadd.f32 %v3230, %v3743
        %3745 = vmatprep.mubr.bf16.mxu0 %v3094
        %3746 = vmatmul.mubr.bf16.gmra.mrb[0].mxu0 %v3093
        %v3747 = vpop.f32.mrb[0].mxu0
        %v3748 = vadd.f32 %v3226, %v3747
        %v3749 = vpop.f32.mrb[0].mxu0
        %v3750 = vadd.f32 %v3230, %v3749
        %v3751 = vpop.f32.mrb[0].mxu0
        %v3752 = vadd.f32 %v3226, %v3751
        %v3753 = vpop.f32.mrb[0].mxu0
        %v3754 = vadd.f32 %v3230, %v3753
        %3755 = vmatprep.mubr.bf16.mxu0 %v3098
        %3756 = vmatmul.mubr.bf16.gmra.mrb[0].mxu0 %v3097
        %v3757 = vpop.f32.mrb[0].mxu0
        %v3758 = vadd.f32 %v3226, %v3757
        %v3759 = vpop.f32.mrb[0].mxu0
        %v3760 = vadd.f32 %v3230, %v3759
        %v3761 = vpop.f32.mrb[0].mxu0
        %v3762 = vadd.f32 %v3226, %v3761
        %v3763 = vpop.f32.mrb[0].mxu0
        %v3764 = vadd.f32 %v3230, %v3763
        %3765 = vmatprep.mubr.bf16.mxu0 %v3102
        %3766 = vmatmul.mubr.bf16.gmra.mrb[0].mxu0 %v3101
        %v3767 = vpop.f32.mrb[0].mxu0
        %v3768 = vadd.f32 %v3226, %v3767
        %v3769 = vpop.f32.mrb[0].mxu0
        %v3770 = vadd.f32 %v3230, %v3769
        %v3771 = vpop.f32.mrb[0].mxu0
        %v3772 = vadd.f32 %v3226, %v3771
        %v3773 = vpop.f32.mrb[0].mxu0
        %v3774 = vadd.f32 %v3230, %v3773
        %3775 = vmatprep.mubr.bf16.mxu0 %v3106
        %3776 = vmatmul.mubr.bf16.gmra.mrb[0].mxu0 %v3105
        %v3777 = vpop.f32.mrb[0].mxu0
        %v3778 = vadd.f32 %v3226, %v3777
        %v3779 = vpop.f32.mrb[0].mxu0
        %v3780 = vadd.f32 %v3230, %v3779
        %v3781 = vpop.f32.mrb[0].mxu0
        %v3782 = vadd.f32 %v3226, %v3781
        %v3783 = vpop.f32.mrb[0].mxu0
        %v3784 = vadd.f32 %v3230, %v3783
        %3785 = vmatprep.mubr.bf16.mxu0 %v3110
        %3786 = vmatmul.mubr.bf16.gmra.mrb[0].mxu0 %v3109
        %v3787 = vpop.f32.mrb[0].mxu0
        %v3788 = vadd.f32 %v3226, %v3787
        %v3789 = vpop.f32.mrb[0].mxu0
        %v3790 = vadd.f32 %v3230, %v3789
        %v3791 = vpop.f32.mrb[0].mxu0
        %v3792 = vadd.f32 %v3226, %v3791
        %v3793 = vpop.f32.mrb[0].mxu0
        %v3794 = vadd.f32 %v3230, %v3793
        %3795 = vmatprep.mubr.bf16.mxu0 %v3114
        %3796 = vmatmul.mubr.bf16.gmra.mrb[0].mxu0 %v3113
        %v3797 = vpop.f32.mrb[0].mxu0
        %v3798 = vadd.f32 %v3226, %v3797
        %v3799 = vpop.f32.mrb[0].mxu0
        %v3800 = vadd.f32 %v3230, %v3799
        %v3801 = vpop.f32.mrb[0].mxu0
        %v3802 = vadd.f32 %v3226, %v3801
        %v3803 = vpop.f32.mrb[0].mxu0
        %v3804 = vadd.f32 %v3230, %v3803
        %3805 = vmatprep.mubr.bf16.mxu0 %v3118
        %3806 = vmatmul.mubr.bf16.gmra.mrb[0].mxu0 %v3117
        %v3807 = vpop.f32.mrb[0].mxu0
        %v3808 = vadd.f32 %v3226, %v3807
        %v3809 = vpop.f32.mrb[0].mxu0
        %v3810 = vadd.f32 %v3230, %v3809
        %v3811 = vpop.f32.mrb[0].mxu0
        %v3812 = vadd.f32 %v3226, %v3811
        %v3813 = vpop.f32.mrb[0].mxu0
        %v3814 = vadd.f32 %v3230, %v3813
        %3815 = vmatprep.mubr.bf16.mxu0 %v3122
        %3816 = vmatmul.mubr.bf16.gmra.mrb[0].mxu0 %v3121
        %v3817 = vpop.f32.mrb[0].mxu0
        %v3818 = vadd.f32 %v3226, %v3817
        %v3819 = vpop.f32.mrb[0].mxu0
        %v3820 = vadd.f32 %v3230, %v3819
        %v3821 = vpop.f32.mrb[0].mxu0
        %v3822 = vadd.f32 %v3226, %v3821
        %v3823 = vpop.f32.mrb[0].mxu0
        %v3824 = vadd.f32 %v3230, %v3823
        %3825 = vmatprep.mubr.bf16.mxu0 %v3126
        %3826 = vmatmul.mubr.bf16.gmra.mrb[0].mxu0 %v3125
        %v3827 = vpop.f32.mrb[0].mxu0
        %v3828 = vadd.f32 %v3226, %v3827
        %v3829 = vpop.f32.mrb[0].mxu0
        %v3830 = vadd.f32 %v3230, %v3829
        %v3831 = vpop.f32.mrb[0].mxu0
        %v3832 = vadd.f32 %v3226, %v3831
        %v3833 = vpop.f32.mrb[0].mxu0
        %v3834 = vadd.f32 %v3230, %v3833
        %3835 = vmatprep.mubr.bf16.mxu0 %v3130
        %3836 = vmatmul.mubr.bf16.gmra.mrb[0].mxu0 %v3129
        %v3837 = vpop.f32.mrb[0].mxu0
        %v3838 = vadd.f32 %v3226, %v3837
        %v3839 = vpop.f32.mrb[0].mxu0
        %v3840 = vadd.f32 %v3230, %v3839
        %v3841 = vpop.f32.mrb[0].mxu0
        %v3842 = vadd.f32 %v3226, %v3841
        %v3843 = vpop.f32.mrb[0].mxu0
        %v3844 = vadd.f32 %v3230, %v3843
        %3845 = vmatprep.mubr.bf16.mxu0 %v3134
        %3846 = vmatmul.mubr.bf16.gmra.mrb[0].mxu0 %v3133
        %v3847 = vpop.f32.mrb[0].mxu0
        %v3848 = vadd.f32 %v3226, %v3847
        %v3849 = vpop.f32.mrb[0].mxu0
        %v3850 = vadd.f32 %v3230, %v3849
        %v3851 = vpop.f32.mrb[0].mxu0
        %v3852 = vadd.f32 %v3226, %v3851
        %v3853 = vpop.f32.mrb[0].mxu0
        %v3854 = vadd.f32 %v3230, %v3853
        %3855 = vmatprep.mubr.bf16.mxu0 %v3138
        %3856 = vmatmul.mubr.bf16.gmra.mrb[0].mxu0 %v3137
        %v3857 = vpop.f32.mrb[0].mxu0
        %v3858 = vadd.f32 %v3226, %v3857
        %v3859 = vpop.f32.mrb[0].mxu0
        %v3860 = vadd.f32 %v3230, %v3859
        %v3861 = vpop.f32.mrb[0].mxu0
        %v3862 = vadd.f32 %v3226, %v3861
        %v3863 = vpop.f32.mrb[0].mxu0
        %v3864 = vadd.f32 %v3230, %v3863
        %3865 = vmatprep.mubr.bf16.mxu0 %v3142
        %3866 = vmatmul.mubr.bf16.gmra.mrb[0].mxu0 %v3141
        %v3867 = vpop.f32.mrb[0].mxu0
        %v3868 = vadd.f32 %v3226, %v3867
        %v3869 = vpop.f32.mrb[0].mxu0
        %v3870 = vadd.f32 %v3230, %v3869
        %v3871 = vpop.f32.mrb[0].mxu0
        %v3872 = vadd.f32 %v3226, %v3871
        %v3873 = vpop.f32.mrb[0].mxu0
        %v3874 = vadd.f32 %v3230, %v3873
        %3875 = vmatprep.mubr.bf16.mxu0 %v3146
        %3876 = vmatmul.mubr.bf16.gmra.mrb[0].mxu0 %v3145
        %v3877 = vpop.f32.mrb[0].mxu0
        %v3878 = vadd.f32 %v3226, %v3877
        %v3879 = vpop.f32.mrb[0].mxu0
        %v3880 = vadd.f32 %v3230, %v3879
        %v3881 = vpop.f32.mrb[0].mxu0
        %v3882 = vadd.f32 %v3226, %v3881
        %v3883 = vpop.f32.mrb[0].mxu0
        %v3884 = vadd.f32 %v3230, %v3883
        %3885 = vmatprep.mubr.bf16.mxu0 %v3150
        %3886 = vmatmul.mubr.bf16.gmra.mrb[0].mxu0 %v3149
        %v3887 = vpop.f32.mrb[0].mxu0
        %v3888 = vadd.f32 %v3226, %v3887
        %v3889 = vpop.f32.mrb[0].mxu0
        %v3890 = vadd.f32 %v3230, %v3889
        %v3891 = vpop.f32.mrb[0].mxu0
        %v3892 = vadd.f32 %v3226, %v3891
        %v3893 = vpop.f32.mrb[0].mxu0
        %v3894 = vadd.f32 %v3230, %v3893
        %3895 = vmatprep.mubr.bf16.mxu0 %v3154
        %3896 = vmatmul.mubr.bf16.gmra.mrb[0].mxu0 %v3153
        %v3897 = vpop.f32.mrb[0].mxu0
        %v3898 = vadd.f32 %v3226, %v3897
        %v3899 = vpop.f32.mrb[0].mxu0
        %v3900 = vadd.f32 %v3230, %v3899
        %v3901 = vpop.f32.mrb[0].mxu0
        %v3902 = vadd.f32 %v3226, %v3901
        %v3903 = vpop.f32.mrb[0].mxu0
        %v3904 = vadd.f32 %v3230, %v3903
        %3905 = vdwg.mxu0
        %3906 = vmatprep.subr.bf16.mxu0 %v3458
        %3907 = vmatpush1.bf16.msra.mxu0 %v3457
        %3908 = vmatprep.subr.bf16.mxu0 %v3460
        %3909 = vmatpush1.bf16.msra.mxu0 %v3459
        %3910 = vmatprep.subr.bf16.mxu0 %v3462
        %3911 = vmatpush1.bf16.msra.mxu0 %v3461
        %3912 = vmatprep.subr.bf16.mxu0 %v3464
        %3913 = vmatpush1.bf16.msra.mxu0 %v3463
        %3914 = vmatprep.subr.bf16.mxu0 %v3466
        %3915 = vmatpush1.bf16.msra.mxu0 %v3465
        %3916 = vmatprep.subr.bf16.mxu0 %v3468
        %3917 = vmatpush1.bf16.msra.mxu0 %v3467
        %3918 = vmatprep.subr.bf16.mxu0 %v3470
        %3919 = vmatpush1.bf16.msra.mxu0 %v3469
        %3920 = vmatprep.subr.bf16.mxu0 %v3472
        %3921 = vmatpush1.bf16.msra.mxu0 %v3471
        %3922 = vmatprep.subr.bf16.mxu0 %v3474
        %3923 = vmatpush1.bf16.msra.mxu0 %v3473
        %3924 = vmatprep.subr.bf16.mxu0 %v3476
        %3925 = vmatpush1.bf16.msra.mxu0 %v3475
        %3926 = vmatprep.subr.bf16.mxu0 %v3478
        %3927 = vmatpush1.bf16.msra.mxu0 %v3477
        %3928 = vmatprep.subr.bf16.mxu0 %v3480
        %3929 = vmatpush1.bf16.msra.mxu0 %v3479
        %3930 = vmatprep.subr.bf16.mxu0 %v3482
        %3931 = vmatpush1.bf16.msra.mxu0 %v3481
        %3932 = vmatprep.subr.bf16.mxu0 %v3484
        %3933 = vmatpush1.bf16.msra.mxu0 %v3483
        %3934 = vmatprep.subr.bf16.mxu0 %v3486
        %3935 = vmatpush1.bf16.msra.mxu0 %v3485
        %3936 = vmatprep.subr.bf16.mxu0 %v3488
        %3937 = vmatpush1.bf16.msra.mxu0 %v3487
        %3938 = vmatprep.mubr.bf16.mxu0 %v3032
        %3939 = vmatmul.mubr.bf16.gmra.mrb[0].mxu0 %v3031
        %v3940 = vpop.f32.mrb[0].mxu0
        %v3941 = vadd.f32 %v3588, %v3940
        %v3942 = vpop.f32.mrb[0].mxu0
        %v3943 = vadd.f32 %v3590, %v3942
        %v3944 = vpop.f32.mrb[0].mxu0
        %v3945 = vadd.f32 %v3592, %v3944
        %v3946 = vpop.f32.mrb[0].mxu0
        %v3947 = vadd.f32 %v3594, %v3946
        %3948 = vmatprep.mubr.bf16.mxu0 %v3036
        %3949 = vmatmul.mubr.bf16.gmra.mrb[0].mxu0 %v3035
        %v3950 = vpop.f32.mrb[0].mxu0
        %v3951 = vadd.f32 %v3598, %v3950
        %v3952 = vpop.f32.mrb[0].mxu0
        %v3953 = vadd.f32 %v3600, %v3952
        %v3954 = vpop.f32.mrb[0].mxu0
        %v3955 = vadd.f32 %v3602, %v3954
        %v3956 = vpop.f32.mrb[0].mxu0
        %v3957 = vadd.f32 %v3604, %v3956
        %3958 = vmatprep.mubr.bf16.mxu0 %v3040
        %3959 = vmatmul.mubr.bf16.gmra.mrb[0].mxu0 %v3039
        %v3960 = vpop.f32.mrb[0].mxu0
        %v3961 = vadd.f32 %v3608, %v3960
        %v3962 = vpop.f32.mrb[0].mxu0
        %v3963 = vadd.f32 %v3610, %v3962
        %v3964 = vpop.f32.mrb[0].mxu0
        %v3965 = vadd.f32 %v3612, %v3964
        %v3966 = vpop.f32.mrb[0].mxu0
        %v3967 = vadd.f32 %v3614, %v3966
        %3968 = vmatprep.mubr.bf16.mxu0 %v3044
        %3969 = vmatmul.mubr.bf16.gmra.mrb[0].mxu0 %v3043
        %v3970 = vpop.f32.mrb[0].mxu0
        %v3971 = vadd.f32 %v3618, %v3970
        %v3972 = vpop.f32.mrb[0].mxu0
        %v3973 = vadd.f32 %v3620, %v3972
        %v3974 = vpop.f32.mrb[0].mxu0
        %v3975 = vadd.f32 %v3622, %v3974
        %v3976 = vpop.f32.mrb[0].mxu0
        %v3977 = vadd.f32 %v3624, %v3976
        %3978 = vmatprep.mubr.bf16.mxu0 %v3048
        %3979 = vmatmul.mubr.bf16.gmra.mrb[0].mxu0 %v3047
        %v3980 = vpop.f32.mrb[0].mxu0
        %v3981 = vadd.f32 %v3628, %v3980
        %v3982 = vpop.f32.mrb[0].mxu0
        %v3983 = vadd.f32 %v3630, %v3982
        %v3984 = vpop.f32.mrb[0].mxu0
        %v3985 = vadd.f32 %v3632, %v3984
        %v3986 = vpop.f32.mrb[0].mxu0
        %v3987 = vadd.f32 %v3634, %v3986
        %3988 = vmatprep.mubr.bf16.mxu0 %v3052
        %3989 = vmatmul.mubr.bf16.gmra.mrb[0].mxu0 %v3051
        %v3990 = vpop.f32.mrb[0].mxu0
        %v3991 = vadd.f32 %v3638, %v3990
        %v3992 = vpop.f32.mrb[0].mxu0
        %v3993 = vadd.f32 %v3640, %v3992
        %v3994 = vpop.f32.mrb[0].mxu0
        %v3995 = vadd.f32 %v3642, %v3994
        %v3996 = vpop.f32.mrb[0].mxu0
        %v3997 = vadd.f32 %v3644, %v3996
        %3998 = vmatprep.mubr.bf16.mxu0 %v3056
        %3999 = vmatmul.mubr.bf16.gmra.mrb[0].mxu0 %v3055
        %v4000 = vpop.f32.mrb[0].mxu0
        %v4001 = vadd.f32 %v3648, %v4000
        %v4002 = vpop.f32.mrb[0].mxu0
        %v4003 = vadd.f32 %v3650, %v4002
        %v4004 = vpop.f32.mrb[0].mxu0
        %v4005 = vadd.f32 %v3652, %v4004
        %v4006 = vpop.f32.mrb[0].mxu0
        %v4007 = vadd.f32 %v3654, %v4006
        %4008 = vmatprep.mubr.bf16.mxu0 %v3060
        %4009 = vmatmul.mubr.bf16.gmra.mrb[0].mxu0 %v3059
        %v4010 = vpop.f32.mrb[0].mxu0
        %v4011 = vadd.f32 %v3658, %v4010
        %v4012 = vpop.f32.mrb[0].mxu0
        %v4013 = vadd.f32 %v3660, %v4012
        %v4014 = vpop.f32.mrb[0].mxu0
        %v4015 = vadd.f32 %v3662, %v4014
        %v4016 = vpop.f32.mrb[0].mxu0
        %v4017 = vadd.f32 %v3664, %v4016
        %4018 = vmatprep.mubr.bf16.mxu0 %v3064
        %4019 = vmatmul.mubr.bf16.gmra.mrb[0].mxu0 %v3063
        %v4020 = vpop.f32.mrb[0].mxu0
        %v4021 = vadd.f32 %v3668, %v4020
        %v4022 = vpop.f32.mrb[0].mxu0
        %v4023 = vadd.f32 %v3670, %v4022
        %v4024 = vpop.f32.mrb[0].mxu0
        %v4025 = vadd.f32 %v3672, %v4024
        %v4026 = vpop.f32.mrb[0].mxu0
        %v4027 = vadd.f32 %v3674, %v4026
        %4028 = vmatprep.mubr.bf16.mxu0 %v3068
        %4029 = vmatmul.mubr.bf16.gmra.mrb[0].mxu0 %v3067
        %v4030 = vpop.f32.mrb[0].mxu0
        %v4031 = vadd.f32 %v3678, %v4030
        %v4032 = vpop.f32.mrb[0].mxu0
        %v4033 = vadd.f32 %v3680, %v4032
        %v4034 = vpop.f32.mrb[0].mxu0
        %v4035 = vadd.f32 %v3682, %v4034
        %v4036 = vpop.f32.mrb[0].mxu0
        %v4037 = vadd.f32 %v3684, %v4036
        %4038 = vmatprep.mubr.bf16.mxu0 %v3072
        %4039 = vmatmul.mubr.bf16.gmra.mrb[0].mxu0 %v3071
        %v4040 = vpop.f32.mrb[0].mxu0
        %v4041 = vadd.f32 %v3688, %v4040
        %v4042 = vpop.f32.mrb[0].mxu0
        %v4043 = vadd.f32 %v3690, %v4042
        %v4044 = vpop.f32.mrb[0].mxu0
        %v4045 = vadd.f32 %v3692, %v4044
        %v4046 = vpop.f32.mrb[0].mxu0
        %v4047 = vadd.f32 %v3694, %v4046
        %4048 = vmatprep.mubr.bf16.mxu0 %v3076
        %4049 = vmatmul.mubr.bf16.gmra.mrb[0].mxu0 %v3075
        %v4050 = vpop.f32.mrb[0].mxu0
        %v4051 = vadd.f32 %v3698, %v4050
        %v4052 = vpop.f32.mrb[0].mxu0
        %v4053 = vadd.f32 %v3700, %v4052
        %v4054 = vpop.f32.mrb[0].mxu0
        %v4055 = vadd.f32 %v3702, %v4054
        %v4056 = vpop.f32.mrb[0].mxu0
        %v4057 = vadd.f32 %v3704, %v4056
        %4058 = vmatprep.mubr.bf16.mxu0 %v3080
        %4059 = vmatmul.mubr.bf16.gmra.mrb[0].mxu0 %v3079
        %v4060 = vpop.f32.mrb[0].mxu0
        %v4061 = vadd.f32 %v3708, %v4060
        %v4062 = vpop.f32.mrb[0].mxu0
        %v4063 = vadd.f32 %v3710, %v4062
        %v4064 = vpop.f32.mrb[0].mxu0
        %v4065 = vadd.f32 %v3712, %v4064
        %v4066 = vpop.f32.mrb[0].mxu0
        %v4067 = vadd.f32 %v3714, %v4066
        %4068 = vmatprep.mubr.bf16.mxu0 %v3084
        %4069 = vmatmul.mubr.bf16.gmra.mrb[0].mxu0 %v3083
        %v4070 = vpop.f32.mrb[0].mxu0
        %v4071 = vadd.f32 %v3718, %v4070
        %v4072 = vpop.f32.mrb[0].mxu0
        %v4073 = vadd.f32 %v3720, %v4072
        %v4074 = vpop.f32.mrb[0].mxu0
        %v4075 = vadd.f32 %v3722, %v4074
        %v4076 = vpop.f32.mrb[0].mxu0
        %v4077 = vadd.f32 %v3724, %v4076
        %4078 = vmatprep.mubr.bf16.mxu0 %v3088
        %4079 = vmatmul.mubr.bf16.gmra.mrb[0].mxu0 %v3087
        %v4080 = vpop.f32.mrb[0].mxu0
        %v4081 = vadd.f32 %v3728, %v4080
        %v4082 = vpop.f32.mrb[0].mxu0
        %v4083 = vadd.f32 %v3730, %v4082
        %v4084 = vpop.f32.mrb[0].mxu0
        %v4085 = vadd.f32 %v3732, %v4084
        %v4086 = vpop.f32.mrb[0].mxu0
        %v4087 = vadd.f32 %v3734, %v4086
        %4088 = vmatprep.mubr.bf16.mxu0 %v3092
        %4089 = vmatmul.mubr.bf16.gmra.mrb[0].mxu0 %v3091
        %v4090 = vpop.f32.mrb[0].mxu0
        %v4091 = vadd.f32 %v3738, %v4090
        %v4092 = vpop.f32.mrb[0].mxu0
        %v4093 = vadd.f32 %v3740, %v4092
        %v4094 = vpop.f32.mrb[0].mxu0
        %v4095 = vadd.f32 %v3742, %v4094
        %v4096 = vpop.f32.mrb[0].mxu0
        %v4097 = vadd.f32 %v3744, %v4096
        %4098 = vmatprep.mubr.bf16.mxu0 %v3096
        %4099 = vmatmul.mubr.bf16.gmra.mrb[0].mxu0 %v3095
        %v4100 = vpop.f32.mrb[0].mxu0
        %v4101 = vadd.f32 %v3748, %v4100
        %v4102 = vpop.f32.mrb[0].mxu0
        %v4103 = vadd.f32 %v3750, %v4102
        %v4104 = vpop.f32.mrb[0].mxu0
        %v4105 = vadd.f32 %v3752, %v4104
        %v4106 = vpop.f32.mrb[0].mxu0
        %v4107 = vadd.f32 %v3754, %v4106
        %4108 = vmatprep.mubr.bf16.mxu0 %v3100
        %4109 = vmatmul.mubr.bf16.gmra.mrb[0].mxu0 %v3099
        %v4110 = vpop.f32.mrb[0].mxu0
        %v4111 = vadd.f32 %v3758, %v4110
        %v4112 = vpop.f32.mrb[0].mxu0
        %v4113 = vadd.f32 %v3760, %v4112
        %v4114 = vpop.f32.mrb[0].mxu0
        %v4115 = vadd.f32 %v3762, %v4114
        %v4116 = vpop.f32.mrb[0].mxu0
        %v4117 = vadd.f32 %v3764, %v4116
        %4118 = vmatprep.mubr.bf16.mxu0 %v3104
        %4119 = vmatmul.mubr.bf16.gmra.mrb[0].mxu0 %v3103
        %v4120 = vpop.f32.mrb[0].mxu0
        %v4121 = vadd.f32 %v3768, %v4120
        %v4122 = vpop.f32.mrb[0].mxu0
        %v4123 = vadd.f32 %v3770, %v4122
        %v4124 = vpop.f32.mrb[0].mxu0
        %v4125 = vadd.f32 %v3772, %v4124
        %v4126 = vpop.f32.mrb[0].mxu0
        %v4127 = vadd.f32 %v3774, %v4126
        %4128 = vmatprep.mubr.bf16.mxu0 %v3108
        %4129 = vmatmul.mubr.bf16.gmra.mrb[0].mxu0 %v3107
        %v4130 = vpop.f32.mrb[0].mxu0
        %v4131 = vadd.f32 %v3778, %v4130
        %v4132 = vpop.f32.mrb[0].mxu0
        %v4133 = vadd.f32 %v3780, %v4132
        %v4134 = vpop.f32.mrb[0].mxu0
        %v4135 = vadd.f32 %v3782, %v4134
        %v4136 = vpop.f32.mrb[0].mxu0
        %v4137 = vadd.f32 %v3784, %v4136
        %4138 = vmatprep.mubr.bf16.mxu0 %v3112
        %4139 = vmatmul.mubr.bf16.gmra.mrb[0].mxu0 %v3111
        %v4140 = vpop.f32.mrb[0].mxu0
        %v4141 = vadd.f32 %v3788, %v4140
        %v4142 = vpop.f32.mrb[0].mxu0
        %v4143 = vadd.f32 %v3790, %v4142
        %v4144 = vpop.f32.mrb[0].mxu0
        %v4145 = vadd.f32 %v3792, %v4144
        %v4146 = vpop.f32.mrb[0].mxu0
        %v4147 = vadd.f32 %v3794, %v4146
        %4148 = vmatprep.mubr.bf16.mxu0 %v3116
        %4149 = vmatmul.mubr.bf16.gmra.mrb[0].mxu0 %v3115
        %v4150 = vpop.f32.mrb[0].mxu0
        %v4151 = vadd.f32 %v3798, %v4150
        %v4152 = vpop.f32.mrb[0].mxu0
        %v4153 = vadd.f32 %v3800, %v4152
        %v4154 = vpop.f32.mrb[0].mxu0
        %v4155 = vadd.f32 %v3802, %v4154
        %v4156 = vpop.f32.mrb[0].mxu0
        %v4157 = vadd.f32 %v3804, %v4156
        %4158 = vmatprep.mubr.bf16.mxu0 %v3120
        %4159 = vmatmul.mubr.bf16.gmra.mrb[0].mxu0 %v3119
        %v4160 = vpop.f32.mrb[0].mxu0
        %v4161 = vadd.f32 %v3808, %v4160
        %v4162 = vpop.f32.mrb[0].mxu0
        %v4163 = vadd.f32 %v3810, %v4162
        %v4164 = vpop.f32.mrb[0].mxu0
        %v4165 = vadd.f32 %v3812, %v4164
        %v4166 = vpop.f32.mrb[0].mxu0
        %v4167 = vadd.f32 %v3814, %v4166
        %4168 = vmatprep.mubr.bf16.mxu0 %v3124
        %4169 = vmatmul.mubr.bf16.gmra.mrb[0].mxu0 %v3123
        %v4170 = vpop.f32.mrb[0].mxu0
        %v4171 = vadd.f32 %v3818, %v4170
        %v4172 = vpop.f32.mrb[0].mxu0
        %v4173 = vadd.f32 %v3820, %v4172
        %v4174 = vpop.f32.mrb[0].mxu0
        %v4175 = vadd.f32 %v3822, %v4174
        %v4176 = vpop.f32.mrb[0].mxu0
        %v4177 = vadd.f32 %v3824, %v4176
        %4178 = vmatprep.mubr.bf16.mxu0 %v3128
        %4179 = vmatmul.mubr.bf16.gmra.mrb[0].mxu0 %v3127
        %v4180 = vpop.f32.mrb[0].mxu0
        %v4181 = vadd.f32 %v3828, %v4180
        %v4182 = vpop.f32.mrb[0].mxu0
        %v4183 = vadd.f32 %v3830, %v4182
        %v4184 = vpop.f32.mrb[0].mxu0
        %v4185 = vadd.f32 %v3832, %v4184
        %v4186 = vpop.f32.mrb[0].mxu0
        %v4187 = vadd.f32 %v3834, %v4186
        %4188 = vmatprep.mubr.bf16.mxu0 %v3132
        %4189 = vmatmul.mubr.bf16.gmra.mrb[0].mxu0 %v3131
        %v4190 = vpop.f32.mrb[0].mxu0
        %v4191 = vadd.f32 %v3838, %v4190
        %v4192 = vpop.f32.mrb[0].mxu0
        %v4193 = vadd.f32 %v3840, %v4192
        %v4194 = vpop.f32.mrb[0].mxu0
        %v4195 = vadd.f32 %v3842, %v4194
        %v4196 = vpop.f32.mrb[0].mxu0
        %v4197 = vadd.f32 %v3844, %v4196
        %4198 = vmatprep.mubr.bf16.mxu0 %v3136
        %4199 = vmatmul.mubr.bf16.gmra.mrb[0].mxu0 %v3135
        %v4200 = vpop.f32.mrb[0].mxu0
        %v4201 = vadd.f32 %v3848, %v4200
        %v4202 = vpop.f32.mrb[0].mxu0
        %v4203 = vadd.f32 %v3850, %v4202
        %v4204 = vpop.f32.mrb[0].mxu0
        %v4205 = vadd.f32 %v3852, %v4204
        %v4206 = vpop.f32.mrb[0].mxu0
        %v4207 = vadd.f32 %v3854, %v4206
        %4208 = vmatprep.mubr.bf16.mxu0 %v3140
        %4209 = vmatmul.mubr.bf16.gmra.mrb[0].mxu0 %v3139
        %v4210 = vpop.f32.mrb[0].mxu0
        %v4211 = vadd.f32 %v3858, %v4210
        %v4212 = vpop.f32.mrb[0].mxu0
        %v4213 = vadd.f32 %v3860, %v4212
        %v4214 = vpop.f32.mrb[0].mxu0
        %v4215 = vadd.f32 %v3862, %v4214
        %v4216 = vpop.f32.mrb[0].mxu0
        %v4217 = vadd.f32 %v3864, %v4216
        %4218 = vmatprep.mubr.bf16.mxu0 %v3144
        %4219 = vmatmul.mubr.bf16.gmra.mrb[0].mxu0 %v3143
        %v4220 = vpop.f32.mrb[0].mxu0
        %v4221 = vadd.f32 %v3868, %v4220
        %v4222 = vpop.f32.mrb[0].mxu0
        %v4223 = vadd.f32 %v3870, %v4222
        %v4224 = vpop.f32.mrb[0].mxu0
        %v4225 = vadd.f32 %v3872, %v4224
        %v4226 = vpop.f32.mrb[0].mxu0
        %v4227 = vadd.f32 %v3874, %v4226
        %4228 = vmatprep.mubr.bf16.mxu0 %v3148
        %4229 = vmatmul.mubr.bf16.gmra.mrb[0].mxu0 %v3147
        %v4230 = vpop.f32.mrb[0].mxu0
        %v4231 = vadd.f32 %v3878, %v4230
        %v4232 = vpop.f32.mrb[0].mxu0
        %v4233 = vadd.f32 %v3880, %v4232
        %v4234 = vpop.f32.mrb[0].mxu0
        %v4235 = vadd.f32 %v3882, %v4234
        %v4236 = vpop.f32.mrb[0].mxu0
        %v4237 = vadd.f32 %v3884, %v4236
        %4238 = vmatprep.mubr.bf16.mxu0 %v3152
        %4239 = vmatmul.mubr.bf16.gmra.mrb[0].mxu0 %v3151
        %v4240 = vpop.f32.mrb[0].mxu0
        %v4241 = vadd.f32 %v3888, %v4240
        %v4242 = vpop.f32.mrb[0].mxu0
        %v4243 = vadd.f32 %v3890, %v4242
        %v4244 = vpop.f32.mrb[0].mxu0
        %v4245 = vadd.f32 %v3892, %v4244
        %v4246 = vpop.f32.mrb[0].mxu0
        %v4247 = vadd.f32 %v3894, %v4246
        %4248 = vmatprep.mubr.bf16.mxu0 %v3156
        %4249 = vmatmul.mubr.bf16.gmra.mrb[0].mxu0 %v3155
        %v4250 = vpop.f32.mrb[0].mxu0
        %v4251 = vadd.f32 %v3898, %v4250
        %v4252 = vpop.f32.mrb[0].mxu0
        %v4253 = vadd.f32 %v3900, %v4252
        %v4254 = vpop.f32.mrb[0].mxu0
        %v4255 = vadd.f32 %v3902, %v4254
        %v4256 = vpop.f32.mrb[0].mxu0
        %v4257 = vadd.f32 %v3904, %v4256
        %4258 = vdwg.mxu0
        %4259 = vst [vmem:[%s272] sm:$0xff] %v3941
        %4260 = vst [vmem:[%s272 + $0x8] sm:$0xff] %v3943
        %4261 = vst [vmem:[%s272 + $0x10] sm:$0xff] %v3945
        %4262 = vst [vmem:[%s272 + $0x18] sm:$0xff] %v3947
        %4263 = vst [vmem:[%s272 + $0x20] sm:$0xff] %v3951
        %4264 = vst [vmem:[%s272 + $0x28] sm:$0xff] %v3953
        %4265 = vst [vmem:[%s272 + $0x30] sm:$0xff] %v3955
        %4266 = vst [vmem:[%s272 + $0x38] sm:$0xff] %v3957
        %4267 = vst [vmem:[%s272 + $0x40] sm:$0xff] %v3961
        %4268 = vst [vmem:[%s272 + $0x48] sm:$0xff] %v3963
        %4269 = vst [vmem:[%s272 + $0x50] sm:$0xff] %v3965
        %4270 = vst [vmem:[%s272 + $0x58] sm:$0xff] %v3967
        %4271 = vst [vmem:[%s272 + $0x60] sm:$0xff] %v3971
        %4272 = vst [vmem:[%s272 + $0x68] sm:$0xff] %v3973
        %4273 = vst [vmem:[%s272 + $0x70] sm:$0xff] %v3975
        %4274 = vst [vmem:[%s272 + $0x78] sm:$0xff] %v3977
        %4275 = vst [vmem:[%s272 + $0x80] sm:$0xff] %v3981
        %4276 = vst [vmem:[%s272 + $0x88] sm:$0xff] %v3983
        %4277 = vst [vmem:[%s272 + $0x90] sm:$0xff] %v3985
        %4278 = vst [vmem:[%s272 + $0x98] sm:$0xff] %v3987
        %4279 = vst [vmem:[%s272 + $0xa0] sm:$0xff] %v3991
        %4280 = vst [vmem:[%s272 + $0xa8] sm:$0xff] %v3993
        %4281 = vst [vmem:[%s272 + $0xb0] sm:$0xff] %v3995
        %4282 = vst [vmem:[%s272 + $0xb8] sm:$0xff] %v3997
        %4283 = vst [vmem:[%s272 + $0xc0] sm:$0xff] %v4001
        %4284 = vst [vmem:[%s272 + $0xc8] sm:$0xff] %v4003
        %4285 = vst [vmem:[%s272 + $0xd0] sm:$0xff] %v4005
        %4286 = vst [vmem:[%s272 + $0xd8] sm:$0xff] %v4007
        %4287 = vst [vmem:[%s272 + $0xe0] sm:$0xff] %v4011
        %4288 = vst [vmem:[%s272 + $0xe8] sm:$0xff] %v4013
        %4289 = vst [vmem:[%s272 + $0xf0] sm:$0xff] %v4015
        %4290 = vst [vmem:[%s272 + $0xf8] sm:$0xff] %v4017
        %4291 = vst [vmem:[%s272 + $0x100] sm:$0xff] %v4021
        %4292 = vst [vmem:[%s272 + $0x108] sm:$0xff] %v4023
        %4293 = vst [vmem:[%s272 + $0x110] sm:$0xff] %v4025
        %4294 = vst [vmem:[%s272 + $0x118] sm:$0xff] %v4027
        %4295 = vst [vmem:[%s272 + $0x120] sm:$0xff] %v4031
        %4296 = vst [vmem:[%s272 + $0x128] sm:$0xff] %v4033
        %4297 = vst [vmem:[%s272 + $0x130] sm:$0xff] %v4035
        %4298 = vst [vmem:[%s272 + $0x138] sm:$0xff] %v4037
        %4299 = vst [vmem:[%s272 + $0x140] sm:$0xff] %v4041
        %4300 = vst [vmem:[%s272 + $0x148] sm:$0xff] %v4043
        %4301 = vst [vmem:[%s272 + $0x150] sm:$0xff] %v4045
        %4302 = vst [vmem:[%s272 + $0x158] sm:$0xff] %v4047
        %4303 = vst [vmem:[%s272 + $0x160] sm:$0xff] %v4051
        %4304 = vst [vmem:[%s272 + $0x168] sm:$0xff] %v4053
        %4305 = vst [vmem:[%s272 + $0x170] sm:$0xff] %v4055
        %4306 = vst [vmem:[%s272 + $0x178] sm:$0xff] %v4057
        %4307 = vst [vmem:[%s272 + $0x180] sm:$0xff] %v4061
        %4308 = vst [vmem:[%s272 + $0x188] sm:$0xff] %v4063
        %4309 = vst [vmem:[%s272 + $0x190] sm:$0xff] %v4065
        %4310 = vst [vmem:[%s272 + $0x198] sm:$0xff] %v4067
        %4311 = vst [vmem:[%s272 + $0x1a0] sm:$0xff] %v4071
        %4312 = vst [vmem:[%s272 + $0x1a8] sm:$0xff] %v4073
        %4313 = vst [vmem:[%s272 + $0x1b0] sm:$0xff] %v4075
        %4314 = vst [vmem:[%s272 + $0x1b8] sm:$0xff] %v4077
        %4315 = vst [vmem:[%s272 + $0x1c0] sm:$0xff] %v4081
        %4316 = vst [vmem:[%s272 + $0x1c8] sm:$0xff] %v4083
        %4317 = vst [vmem:[%s272 + $0x1d0] sm:$0xff] %v4085
        %4318 = vst [vmem:[%s272 + $0x1d8] sm:$0xff] %v4087
        %4319 = vst [vmem:[%s272 + $0x1e0] sm:$0xff] %v4091
        %4320 = vst [vmem:[%s272 + $0x1e8] sm:$0xff] %v4093
        %4321 = vst [vmem:[%s272 + $0x1f0] sm:$0xff] %v4095
        %4322 = vst [vmem:[%s272 + $0x1f8] sm:$0xff] %v4097
        %4323 = vst [vmem:[%s272 + $0x200] sm:$0xff] %v4101
        %4324 = vst [vmem:[%s272 + $0x208] sm:$0xff] %v4103
        %4325 = vst [vmem:[%s272 + $0x210] sm:$0xff] %v4105
        %4326 = vst [vmem:[%s272 + $0x218] sm:$0xff] %v4107
        %4327 = vst [vmem:[%s272 + $0x220] sm:$0xff] %v4111
        %4328 = vst [vmem:[%s272 + $0x228] sm:$0xff] %v4113
        %4329 = vst [vmem:[%s272 + $0x230] sm:$0xff] %v4115
        %4330 = vst [vmem:[%s272 + $0x238] sm:$0xff] %v4117
        %4331 = vst [vmem:[%s272 + $0x240] sm:$0xff] %v4121
        %4332 = vst [vmem:[%s272 + $0x248] sm:$0xff] %v4123
        %4333 = vst [vmem:[%s272 + $0x250] sm:$0xff] %v4125
        %4334 = vst [vmem:[%s272 + $0x258] sm:$0xff] %v4127
        %4335 = vst [vmem:[%s272 + $0x260] sm:$0xff] %v4131
        %4336 = vst [vmem:[%s272 + $0x268] sm:$0xff] %v4133
        %4337 = vst [vmem:[%s272 + $0x270] sm:$0xff] %v4135
        %4338 = vst [vmem:[%s272 + $0x278] sm:$0xff] %v4137
        %4339 = vst [vmem:[%s272 + $0x280] sm:$0xff] %v4141
        %4340 = vst [vmem:[%s272 + $0x288] sm:$0xff] %v4143
        %4341 = vst [vmem:[%s272 + $0x290] sm:$0xff] %v4145
        %4342 = vst [vmem:[%s272 + $0x298] sm:$0xff] %v4147
        %4343 = vst [vmem:[%s272 + $0x2a0] sm:$0xff] %v4151
        %4344 = vst [vmem:[%s272 + $0x2a8] sm:$0xff] %v4153
        %4345 = vst [vmem:[%s272 + $0x2b0] sm:$0xff] %v4155
        %4346 = vst [vmem:[%s272 + $0x2b8] sm:$0xff] %v4157
        %4347 = vst [vmem:[%s272 + $0x2c0] sm:$0xff] %v4161
        %4348 = vst [vmem:[%s272 + $0x2c8] sm:$0xff] %v4163
        %4349 = vst [vmem:[%s272 + $0x2d0] sm:$0xff] %v4165
        %4350 = vst [vmem:[%s272 + $0x2d8] sm:$0xff] %v4167
        %4351 = vst [vmem:[%s272 + $0x2e0] sm:$0xff] %v4171
        %4352 = vst [vmem:[%s272 + $0x2e8] sm:$0xff] %v4173
        %4353 = vst [vmem:[%s272 + $0x2f0] sm:$0xff] %v4175
        %4354 = vst [vmem:[%s272 + $0x2f8] sm:$0xff] %v4177
        %4355 = vst [vmem:[%s272 + $0x300] sm:$0xff] %v4181
        %4356 = vst [vmem:[%s272 + $0x308] sm:$0xff] %v4183
        %4357 = vst [vmem:[%s272 + $0x310] sm:$0xff] %v4185
        %4358 = vst [vmem:[%s272 + $0x318] sm:$0xff] %v4187
        %4359 = vst [vmem:[%s272 + $0x320] sm:$0xff] %v4191
        %4360 = vst [vmem:[%s272 + $0x328] sm:$0xff] %v4193
        %4361 = vst [vmem:[%s272 + $0x330] sm:$0xff] %v4195
        %4362 = vst [vmem:[%s272 + $0x338] sm:$0xff] %v4197
        %4363 = vst [vmem:[%s272 + $0x340] sm:$0xff] %v4201
        %4364 = vst [vmem:[%s272 + $0x348] sm:$0xff] %v4203
        %4365 = vst [vmem:[%s272 + $0x350] sm:$0xff] %v4205
        %4366 = vst [vmem:[%s272 + $0x358] sm:$0xff] %v4207
        %4367 = vst [vmem:[%s272 + $0x360] sm:$0xff] %v4211
        %4368 = vst [vmem:[%s272 + $0x368] sm:$0xff] %v4213
        %4369 = vst [vmem:[%s272 + $0x370] sm:$0xff] %v4215
        %4370 = vst [vmem:[%s272 + $0x378] sm:$0xff] %v4217
        %4371 = vst [vmem:[%s272 + $0x380] sm:$0xff] %v4221
        %4372 = vst [vmem:[%s272 + $0x388] sm:$0xff] %v4223
        %4373 = vst [vmem:[%s272 + $0x390] sm:$0xff] %v4225
        %4374 = vst [vmem:[%s272 + $0x398] sm:$0xff] %v4227
        %4375 = vst [vmem:[%s272 + $0x3a0] sm:$0xff] %v4231
        %4376 = vst [vmem:[%s272 + $0x3a8] sm:$0xff] %v4233
        %4377 = vst [vmem:[%s272 + $0x3b0] sm:$0xff] %v4235
        %4378 = vst [vmem:[%s272 + $0x3b8] sm:$0xff] %v4237
        %4379 = vst [vmem:[%s272 + $0x3c0] sm:$0xff] %v4241
        %4380 = vst [vmem:[%s272 + $0x3c8] sm:$0xff] %v4243
        %4381 = vst [vmem:[%s272 + $0x3d0] sm:$0xff] %v4245
        %4382 = vst [vmem:[%s272 + $0x3d8] sm:$0xff] %v4247
        %4383 = vst [vmem:[%s272 + $0x3e0] sm:$0xff] %v4251
        %4384 = vst [vmem:[%s272 + $0x3e8] sm:$0xff] %v4253
        %4385 = vst [vmem:[%s272 + $0x3f0] sm:$0xff] %v4255
        %4386 = vst [vmem:[%s272 + $0x3f8] sm:$0xff] %v4257
        %s4387 = sand.u32 %s181, 1
        %s4388 = scalar_lea.sflag [#allocation3], %s4387
        %s4389 = sand.u32 %s181, 1
        %s4390 = smul.addr %s4389, 1024
        %s4391 = scalar_lea.vmem [#allocation2], %s4390
        // Predicated region
        $region49: #{tpu_custom_call.1} parent=47 // pred_check
          %p4392 = pneg %p191
        $region50: #{tpu_custom_call.1} parent=47 // pred_check_branch
          %4394 = sbr.rel (%p4392) target = $region52
        $region51: #{tpu_custom_call.1} parent=47 // pred_region
          %s4395 = smul.u32 64, %s21
          %s4397 = ssub.s32 16384, 16384
          %4398 = vsyncadd %s4388, %s4397
          %s4399 = smul.addr %s4395, 2
          %s4400 = smul.addr %s4399, 128
          %s4401 = scalar_lea.hbm %s7, %s4400
          %s4402 = sshll.u32 %s4391, 4
          %s4403 = int_to_ptr.vmem [resolvable:$true] %s4402
          %4408 = dma.vmem_to_hbm [thread:$0]  %s4403, 16384, %s4401, %s4388, 256, 256, 16
        $region52: #{tpu_custom_call.1} parent=47 // pred_fallthru
          _
      $region48: #{tpu_custom_call.1} parent=5 // pred_fallthru
        _
      %p4409 = scmp.le.s32.totalorder 2, %s16
      // Predicated region
      $region53: #{tpu_custom_call.1} parent=5 // pred_check
        %p4410 = pneg %p4409
      $region54: #{tpu_custom_call.1} parent=5 // pred_check_branch
        %4412 = sbr.rel (%p4410) target = $region56
      $region55: #{tpu_custom_call.1} parent=5 // pred_region
        %s4413 = ssub.s32 %s16, 2
        // Predicated region
        $region57: #{tpu_custom_call.1} parent=55 // pred_check
          %p4414 = pneg %p197
        $region58: #{tpu_custom_call.1} parent=55 // pred_check_branch
          %4416 = sbr.rel (%p4414) target = $region60
        $region59: #{tpu_custom_call.1} parent=55 // pred_region
          %s4417 = sand.u32 %s182, 1
          %s4418 = scalar_lea.sflag [#allocation3], %s4417
          %s4419 = sand.u32 %s182, 1
          %s4420 = smul.addr %s4419, 1024
          %s4421 = scalar_lea.vmem [#allocation2], %s4420
          %4422 = dma.done %s4418, 16384
        $region60: #{tpu_custom_call.1} parent=55 // pred_fallthru
          _
      $region56: #{tpu_custom_call.1} parent=5 // pred_fallthru
        _
    $region6: #{tpu_custom_call.1} parent=1 // loop_footer
      %s20 = sadd.s32 1, %s16
    $region7: #{tpu_custom_call.1} parent=1 // loop_footer_branch
      %15 = sbr.rel target = $region3
    $region8: #{tpu_custom_call.1} parent=1 // loop_exit
      _
    %4423 = vsyncpa [#allocation3], 1
    %s4424 = scalar_lea.sflag [#allocation3], 1
    %4425 = vsyncpa %s4424, 1

</llo_original>
